<compile_context>
chip_gen: v6e
topology: v6e:2x2x1
jax: 0.10.0
libtpu: 0.0.40
codegen_flags: <defaults>
</compile_context>

<pallas_src>
import jax
import jax.numpy as jnp
from jax.experimental import pallas as pl
from jax.experimental.pallas import tpu as pltpu

PCA_DIM = 453
CLASSES = 76
HIDDEN = (128, 256, 256, 128)
DROP_P = 0.5          # F.dropout default
PCA_PAD = 512         # 453 padded up to a multiple of 128 lanes
OUT_PAD = 128         # 76 padded up to 128 lanes (unmasked vst)
TILE_B = 128          # batch rows per grid step; sweep 256-1024 on v6e/v7x


def _keep_mask(shape, seed, layer_id, row0):
    """Bernoulli(0.5) keep-mask from a stateless int32 hash.

    Uses only i32 mul/add/xor/shift ops (wrapping multiplies, arithmetic
    shifts), so it lowers on Mosaic and under CPU interpret mode alike.
    """
    r = jax.lax.broadcasted_iota(jnp.int32, shape, 0) + row0   # global row idx
    c = jax.lax.broadcasted_iota(jnp.int32, shape, 1)          # feature idx
    v = (r * 0x01000193 + c * 0x61C88647
         + seed * 0x27D4EB2F + layer_id * 0x09E3779B)
    # avalanche mixing
    v = v ^ (v >> 15)
    v = v * 0x7FEB352D
    v = v ^ (v >> 13)
    v = v * 0x6A09E667
    v = v ^ (v >> 16)
    return ((v >> 8) & 1) == 0     # keep with probability 0.5


def mlp_kernel(seed_ref,            # (1,) int32 in SMEM
               x_ref,               # (TILE_B, PCA_PAD) bf16
               w1_ref, b1_ref, w2_ref, b2_ref, w3_ref, b3_ref,
               w4_ref, b4_ref, w5_ref, b5_ref,
               o_ref):              # (TILE_B, OUT_PAD) f32
    seed = seed_ref[0]
    row0 = pl.program_id(0) * x_ref.shape[0]   # global row offset of this tile

    def layer(h, w_ref, b_ref, layer_id, apply_dropout_relu):
        acc = jnp.dot(h.astype(jnp.bfloat16), w_ref[...],
                      preferred_element_type=jnp.float32) + b_ref[...]
        if not apply_dropout_relu:
            return acc
        keep = _keep_mask(acc.shape, seed, layer_id, row0)
        # Note: the 1/(1-p)=2 rescale is folded into the next layer's weights.
        return jnp.where(keep, jnp.maximum(acc, 0.0), 0.0)

    h = layer(x_ref[...], w1_ref, b1_ref, 1, True)
    h = layer(h,          w2_ref, b2_ref, 2, True)
    h = layer(h,          w3_ref, b3_ref, 3, True)
    h = layer(h,          w4_ref, b4_ref, 4, True)
    out = layer(h,        w5_ref, b5_ref, 5, False)
    o_ref[...] = out


def _prepare_params(params):
    """Pad / cast / pre-scale params for the kernel.

    Input: 5 tuples (W[in, out] f32, b[1, out] f32).
    Output flat list [w1, b1, ..., w5, b5] with:
      * W1 rows zero-padded 453 -> 512,
      * W5 / b5 cols zero-padded 76 -> 128,
      * W2..W5 pre-multiplied by 1/(1-p)=2 (dropout rescale folded in),
      * weights cast to bf16 (MXU input dtype), biases kept f32.
    """
    scale = 1.0 / (1.0 - DROP_P)
    n = len(params)
    flat = []
    for i, (w, b) in enumerate(params):
        w = jnp.asarray(w, jnp.float32)
        b = jnp.asarray(b, jnp.float32).reshape(1, -1)
        if i > 0:
            w = w * scale
        if i == 0:
            w = jnp.pad(w, ((0, PCA_PAD - w.shape[0]), (0, 0)))
        if i == n - 1:
            w = jnp.pad(w, ((0, 0), (0, OUT_PAD - w.shape[1])))
            b = jnp.pad(b, ((0, 0), (0, OUT_PAD - b.shape[1])))
        flat.extend([w.astype(jnp.bfloat16), b])
    return flat


def net_forward(x, params, seed, tile_b=TILE_B):
    """x: [B, PCA_DIM] f32; params: list of (W[in,out], b[1,out]); seed: int."""
    B, D = x.shape
    assert D == PCA_DIM, (B, D)

    b_pad = ((B + tile_b - 1) // tile_b) * tile_b
    xp = jnp.zeros((b_pad, PCA_PAD), jnp.bfloat16)
    xp = xp.at[:B, :D].set(x.astype(jnp.bfloat16))

    flat = _prepare_params(params)
    seed_arr = jnp.array([seed], dtype=jnp.int32)

    grid = (b_pad // tile_b,)
    in_specs = [
        pl.BlockSpec(memory_space=pltpu.MemorySpace.SMEM),       # seed scalar
        pl.BlockSpec((tile_b, PCA_PAD), lambda i: (i, 0)),       # x tile
    ]
    for t in flat:                                               # VMEM-resident
        in_specs.append(pl.BlockSpec(t.shape, lambda i: (0, 0)))

    flops = 2 * b_pad * (PCA_PAD * 128 + 128 * 256 + 256 * 256
                         + 256 * 128 + 128 * OUT_PAD)
    bytes_accessed = (xp.size * xp.dtype.itemsize
                      + b_pad * OUT_PAD * 4
                      + sum(int(t.size) * t.dtype.itemsize for t in flat))

    out = pl.pallas_call(
        mlp_kernel,
        out_shape=jax.ShapeDtypeStruct((b_pad, OUT_PAD), jnp.float32),
        grid=grid,
        in_specs=in_specs,
        out_specs=pl.BlockSpec((tile_b, OUT_PAD), lambda i: (i, 0)),
        compiler_params=pltpu.CompilerParams(
            dimension_semantics=("parallel",)),
        cost_estimate=pl.CostEstimate(flops=flops, transcendentals=0,
                                      bytes_accessed=bytes_accessed),
    )(seed_arr, xp, *flat)

    return out[:B, :CLASSES]


def norm_col_init(key, shape, std=1.0):
    """Replicates norm_col_init: randn normalized per output row (dim-1 sum)."""
    x = jax.random.normal(key, shape, dtype=jnp.float32)  # [out, in] (PyTorch)
    x = x * (std / jnp.sqrt(jnp.sum(x * x, axis=1, keepdims=True)))
    return x


def init_params(key):
    dims = (PCA_DIM,) + HIDDEN + (CLASSES,)
    params = []
    for i in range(len(dims) - 1):
        key, sub = jax.random.split(key)
        w_pt = norm_col_init(sub, (dims[i + 1], dims[i]), std=1.0)  # [out, in]
        w = jnp.transpose(w_pt)                                     # [in, out]
        b = jnp.zeros((1, dims[i + 1]), dtype=jnp.float32)
        params.append((w, b))
    return params


if __name__ == "__main__":
    key = jax.random.PRNGKey(0)
    key, xkey, pkey = jax.random.split(key, 3)

    B = 200   # pads to 256 -> 2 batch tiles of TILE_B=128
    x = jax.random.normal(xkey, (B, PCA_DIM), dtype=jnp.float32)
    params = init_params(pkey)

    out = net_forward(x, params, seed=1234)
    out = jax.block_until_ready(out)

    assert out.shape == (B, CLASSES), out.shape
    assert bool(jnp.all(jnp.isfinite(out)))
    print("KERNEL_OK")
</pallas_src>

<mosaic_0001>
module attributes {stable_mosaic.version = 11 : i64} {
  func.func @mlp_kernel(%arg0: i32, %arg1: memref<1xi32, #tpu.memory_space<smem>>, %arg2: memref<128x512xbf16, #tpu.memory_space<vmem>>, %arg3: memref<512x128xbf16, #tpu.memory_space<vmem>>, %arg4: memref<1x128xf32, #tpu.memory_space<vmem>>, %arg5: memref<128x256xbf16, #tpu.memory_space<vmem>>, %arg6: memref<1x256xf32, #tpu.memory_space<vmem>>, %arg7: memref<256x256xbf16, #tpu.memory_space<vmem>>, %arg8: memref<1x256xf32, #tpu.memory_space<vmem>>, %arg9: memref<256x128xbf16, #tpu.memory_space<vmem>>, %arg10: memref<1x128xf32, #tpu.memory_space<vmem>>, %arg11: memref<128x128xbf16, #tpu.memory_space<vmem>>, %arg12: memref<1x128xf32, #tpu.memory_space<vmem>>, %arg13: memref<128x128xf32, #tpu.memory_space<vmem>>) attributes {dimension_semantics = [#tpu.dimension_semantics<parallel>], iteration_bounds = array<i64: 2>, scalar_prefetch = 0 : i64, scratch_operands = 0 : i64, tpu.core_type = #tpu.core_type<tc>, window_params = [{transform_indices = @transform_0, window_bounds = array<i64: 1>}, {transform_indices = @transform_1, window_bounds = array<i64: 128, 512>}, {pipeline_mode = #tpu.pipeline_mode<synchronous>, transform_indices = @transform_2, window_bounds = array<i64: 512, 128>}, {pipeline_mode = #tpu.pipeline_mode<synchronous>, transform_indices = @transform_3, window_bounds = array<i64: 1, 128>}, {pipeline_mode = #tpu.pipeline_mode<synchronous>, transform_indices = @transform_4, window_bounds = array<i64: 128, 256>}, {pipeline_mode = #tpu.pipeline_mode<synchronous>, transform_indices = @transform_5, window_bounds = array<i64: 1, 256>}, {pipeline_mode = #tpu.pipeline_mode<synchronous>, transform_indices = @transform_6, window_bounds = array<i64: 256, 256>}, {pipeline_mode = #tpu.pipeline_mode<synchronous>, transform_indices = @transform_7, window_bounds = array<i64: 1, 256>}, {pipeline_mode = #tpu.pipeline_mode<synchronous>, transform_indices = @transform_8, window_bounds = array<i64: 256, 128>}, {pipeline_mode = #tpu.pipeline_mode<synchronous>, transform_indices = @transform_9, window_bounds = array<i64: 1, 128>}, {pipeline_mode = #tpu.pipeline_mode<synchronous>, transform_indices = @transform_10, window_bounds = array<i64: 128, 128>}, {pipeline_mode = #tpu.pipeline_mode<synchronous>, transform_indices = @transform_11, window_bounds = array<i64: 1, 128>}, {transform_indices = @transform_12, window_bounds = array<i64: 128, 128>}]} {
    %c0 = arith.constant 0 : index
    %0 = memref.load %arg1[%c0] : memref<1xi32, #tpu.memory_space<smem>>
    %c128_i32 = arith.constant 128 : i32
    %1 = arith.muli %arg0, %c128_i32 : i32
    %c0_0 = arith.constant 0 : index
    %c0_1 = arith.constant 0 : index
    %2 = vector.load %arg2[%c0_0, %c0_1] : memref<128x512xbf16, #tpu.memory_space<vmem>>, vector<128x512xbf16>
    %c0_2 = arith.constant 0 : index
    %c0_3 = arith.constant 0 : index
    %3 = vector.load %arg3[%c0_2, %c0_3] : memref<512x128xbf16, #tpu.memory_space<vmem>>, vector<512x128xbf16>
    %cst = arith.constant dense<0.000000e+00> : vector<128x128xf32>
    %4 = tpu.matmul %2, %3, %cst {dimension_numbers = #tpu.dot_dimension_numbers<[1], [0], [0], [1], [0, 0, 1, 1], [], []>} : vector<128x512xbf16>, vector<512x128xbf16>, vector<128x128xf32> -> vector<128x128xf32>
    %c0_4 = arith.constant 0 : index
    %c0_5 = arith.constant 0 : index
    %5 = vector.load %arg4[%c0_4, %c0_5] : memref<1x128xf32, #tpu.memory_space<vmem>>, vector<1x128xf32>
    %6 = vector.broadcast %5 : vector<1x128xf32> to vector<128x128xf32>
    %7 = arith.addf %4, %6 : vector<128x128xf32>
    %8 = tpu.iota {dimensions = array<i32: 0>} : vector<128x128xi32>
    %9 = vector.broadcast %1 : i32 to vector<128x128xi32>
    %10 = arith.addi %8, %9 : vector<128x128xi32>
    %11 = tpu.iota {dimensions = array<i32: 1>} : vector<128x128xi32>
    %c16777619_i32 = arith.constant 16777619 : i32
    %12 = vector.broadcast %c16777619_i32 : i32 to vector<128x128xi32>
    %13 = arith.muli %10, %12 : vector<128x128xi32>
    %c1640531527_i32 = arith.constant 1640531527 : i32
    %14 = vector.broadcast %c1640531527_i32 : i32 to vector<128x128xi32>
    %15 = arith.muli %11, %14 : vector<128x128xi32>
    %16 = arith.addi %13, %15 : vector<128x128xi32>
    %c668265263_i32 = arith.constant 668265263 : i32
    %17 = arith.muli %0, %c668265263_i32 : i32
    %18 = vector.broadcast %17 : i32 to vector<128x128xi32>
    %19 = arith.addi %16, %18 : vector<128x128xi32>
    %c165902235_i32 = arith.constant 165902235 : i32
    %20 = vector.broadcast %c165902235_i32 : i32 to vector<128x128xi32>
    %21 = arith.addi %19, %20 : vector<128x128xi32>
    %c15_i32 = arith.constant 15 : i32
    %22 = vector.broadcast %c15_i32 : i32 to vector<128x128xi32>
    %23 = arith.shrsi %21, %22 : vector<128x128xi32>
    %24 = arith.xori %21, %23 : vector<128x128xi32>
    %c2146121005_i32 = arith.constant 2146121005 : i32
    %25 = vector.broadcast %c2146121005_i32 : i32 to vector<128x128xi32>
    %26 = arith.muli %24, %25 : vector<128x128xi32>
    %c13_i32 = arith.constant 13 : i32
    %27 = vector.broadcast %c13_i32 : i32 to vector<128x128xi32>
    %28 = arith.shrsi %26, %27 : vector<128x128xi32>
    %29 = arith.xori %26, %28 : vector<128x128xi32>
    %c1779033703_i32 = arith.constant 1779033703 : i32
    %30 = vector.broadcast %c1779033703_i32 : i32 to vector<128x128xi32>
    %31 = arith.muli %29, %30 : vector<128x128xi32>
    %c16_i32 = arith.constant 16 : i32
    %32 = vector.broadcast %c16_i32 : i32 to vector<128x128xi32>
    %33 = arith.shrsi %31, %32 : vector<128x128xi32>
    %34 = arith.xori %31, %33 : vector<128x128xi32>
    %c8_i32 = arith.constant 8 : i32
    %35 = vector.broadcast %c8_i32 : i32 to vector<128x128xi32>
    %36 = arith.shrsi %34, %35 : vector<128x128xi32>
    %c1_i32 = arith.constant 1 : i32
    %37 = vector.broadcast %c1_i32 : i32 to vector<128x128xi32>
    %38 = arith.andi %36, %37 : vector<128x128xi32>
    %c0_i32 = arith.constant 0 : i32
    %39 = vector.broadcast %c0_i32 : i32 to vector<128x128xi32>
    %40 = arith.cmpi eq, %38, %39 : vector<128x128xi32>
    %cst_6 = arith.constant 0.000000e+00 : f32
    %41 = vector.broadcast %cst_6 : f32 to vector<128x128xf32>
    %42 = arith.maximumf %7, %41 : vector<128x128xf32>
    %cst_7 = arith.constant 0.000000e+00 : f32
    %43 = vector.broadcast %cst_7 : f32 to vector<128x128xf32>
    %44 = arith.select %40, %42, %43 : vector<128x128xi1>, vector<128x128xf32>
    %45 = arith.truncf %44 : vector<128x128xf32> to vector<128x128xbf16>
    %c0_8 = arith.constant 0 : index
    %c0_9 = arith.constant 0 : index
    %46 = vector.load %arg5[%c0_8, %c0_9] : memref<128x256xbf16, #tpu.memory_space<vmem>>, vector<128x256xbf16>
    %cst_10 = arith.constant dense<0.000000e+00> : vector<128x256xf32>
    %47 = tpu.matmul %45, %46, %cst_10 {dimension_numbers = #tpu.dot_dimension_numbers<[1], [0], [0], [1], [0, 0, 1, 1], [], []>} : vector<128x128xbf16>, vector<128x256xbf16>, vector<128x256xf32> -> vector<128x256xf32>
    %c0_11 = arith.constant 0 : index
    %c0_12 = arith.constant 0 : index
    %48 = vector.load %arg6[%c0_11, %c0_12] : memref<1x256xf32, #tpu.memory_space<vmem>>, vector<1x256xf32>
    %49 = vector.broadcast %48 : vector<1x256xf32> to vector<128x256xf32>
    %50 = arith.addf %47, %49 : vector<128x256xf32>
    %51 = tpu.iota {dimensions = array<i32: 0>} : vector<128x256xi32>
    %52 = vector.broadcast %1 : i32 to vector<128x256xi32>
    %53 = arith.addi %51, %52 : vector<128x256xi32>
    %54 = tpu.iota {dimensions = array<i32: 1>} : vector<128x256xi32>
    %c16777619_i32_13 = arith.constant 16777619 : i32
    %55 = vector.broadcast %c16777619_i32_13 : i32 to vector<128x256xi32>
    %56 = arith.muli %53, %55 : vector<128x256xi32>
    %c1640531527_i32_14 = arith.constant 1640531527 : i32
    %57 = vector.broadcast %c1640531527_i32_14 : i32 to vector<128x256xi32>
    %58 = arith.muli %54, %57 : vector<128x256xi32>
    %59 = arith.addi %56, %58 : vector<128x256xi32>
    %c668265263_i32_15 = arith.constant 668265263 : i32
    %60 = arith.muli %0, %c668265263_i32_15 : i32
    %61 = vector.broadcast %60 : i32 to vector<128x256xi32>
    %62 = arith.addi %59, %61 : vector<128x256xi32>
    %c331804470_i32 = arith.constant 331804470 : i32
    %63 = vector.broadcast %c331804470_i32 : i32 to vector<128x256xi32>
    %64 = arith.addi %62, %63 : vector<128x256xi32>
    %c15_i32_16 = arith.constant 15 : i32
    %65 = vector.broadcast %c15_i32_16 : i32 to vector<128x256xi32>
    %66 = arith.shrsi %64, %65 : vector<128x256xi32>
    %67 = arith.xori %64, %66 : vector<128x256xi32>
    %c2146121005_i32_17 = arith.constant 2146121005 : i32
    %68 = vector.broadcast %c2146121005_i32_17 : i32 to vector<128x256xi32>
    %69 = arith.muli %67, %68 : vector<128x256xi32>
    %c13_i32_18 = arith.constant 13 : i32
    %70 = vector.broadcast %c13_i32_18 : i32 to vector<128x256xi32>
    %71 = arith.shrsi %69, %70 : vector<128x256xi32>
    %72 = arith.xori %69, %71 : vector<128x256xi32>
    %c1779033703_i32_19 = arith.constant 1779033703 : i32
    %73 = vector.broadcast %c1779033703_i32_19 : i32 to vector<128x256xi32>
    %74 = arith.muli %72, %73 : vector<128x256xi32>
    %c16_i32_20 = arith.constant 16 : i32
    %75 = vector.broadcast %c16_i32_20 : i32 to vector<128x256xi32>
    %76 = arith.shrsi %74, %75 : vector<128x256xi32>
    %77 = arith.xori %74, %76 : vector<128x256xi32>
    %c8_i32_21 = arith.constant 8 : i32
    %78 = vector.broadcast %c8_i32_21 : i32 to vector<128x256xi32>
    %79 = arith.shrsi %77, %78 : vector<128x256xi32>
    %c1_i32_22 = arith.constant 1 : i32
    %80 = vector.broadcast %c1_i32_22 : i32 to vector<128x256xi32>
    %81 = arith.andi %79, %80 : vector<128x256xi32>
    %c0_i32_23 = arith.constant 0 : i32
    %82 = vector.broadcast %c0_i32_23 : i32 to vector<128x256xi32>
    %83 = arith.cmpi eq, %81, %82 : vector<128x256xi32>
    %cst_24 = arith.constant 0.000000e+00 : f32
    %84 = vector.broadcast %cst_24 : f32 to vector<128x256xf32>
    %85 = arith.maximumf %50, %84 : vector<128x256xf32>
    %cst_25 = arith.constant 0.000000e+00 : f32
    %86 = vector.broadcast %cst_25 : f32 to vector<128x256xf32>
    %87 = arith.select %83, %85, %86 : vector<128x256xi1>, vector<128x256xf32>
    %88 = arith.truncf %87 : vector<128x256xf32> to vector<128x256xbf16>
    %c0_26 = arith.constant 0 : index
    %c0_27 = arith.constant 0 : index
    %89 = vector.load %arg7[%c0_26, %c0_27] : memref<256x256xbf16, #tpu.memory_space<vmem>>, vector<256x256xbf16>
    %cst_28 = arith.constant dense<0.000000e+00> : vector<128x256xf32>
    %90 = tpu.matmul %88, %89, %cst_28 {dimension_numbers = #tpu.dot_dimension_numbers<[1], [0], [0], [1], [0, 0, 1, 1], [], []>} : vector<128x256xbf16>, vector<256x256xbf16>, vector<128x256xf32> -> vector<128x256xf32>
    %c0_29 = arith.constant 0 : index
    %c0_30 = arith.constant 0 : index
    %91 = vector.load %arg8[%c0_29, %c0_30] : memref<1x256xf32, #tpu.memory_space<vmem>>, vector<1x256xf32>
    %92 = vector.broadcast %91 : vector<1x256xf32> to vector<128x256xf32>
    %93 = arith.addf %90, %92 : vector<128x256xf32>
    %94 = tpu.iota {dimensions = array<i32: 0>} : vector<128x256xi32>
    %95 = vector.broadcast %1 : i32 to vector<128x256xi32>
    %96 = arith.addi %94, %95 : vector<128x256xi32>
    %97 = tpu.iota {dimensions = array<i32: 1>} : vector<128x256xi32>
    %c16777619_i32_31 = arith.constant 16777619 : i32
    %98 = vector.broadcast %c16777619_i32_31 : i32 to vector<128x256xi32>
    %99 = arith.muli %96, %98 : vector<128x256xi32>
    %c1640531527_i32_32 = arith.constant 1640531527 : i32
    %100 = vector.broadcast %c1640531527_i32_32 : i32 to vector<128x256xi32>
    %101 = arith.muli %97, %100 : vector<128x256xi32>
    %102 = arith.addi %99, %101 : vector<128x256xi32>
    %c668265263_i32_33 = arith.constant 668265263 : i32
    %103 = arith.muli %0, %c668265263_i32_33 : i32
    %104 = vector.broadcast %103 : i32 to vector<128x256xi32>
    %105 = arith.addi %102, %104 : vector<128x256xi32>
    %c497706705_i32 = arith.constant 497706705 : i32
    %106 = vector.broadcast %c497706705_i32 : i32 to vector<128x256xi32>
    %107 = arith.addi %105, %106 : vector<128x256xi32>
    %c15_i32_34 = arith.constant 15 : i32
    %108 = vector.broadcast %c15_i32_34 : i32 to vector<128x256xi32>
    %109 = arith.shrsi %107, %108 : vector<128x256xi32>
    %110 = arith.xori %107, %109 : vector<128x256xi32>
    %c2146121005_i32_35 = arith.constant 2146121005 : i32
    %111 = vector.broadcast %c2146121005_i32_35 : i32 to vector<128x256xi32>
    %112 = arith.muli %110, %111 : vector<128x256xi32>
    %c13_i32_36 = arith.constant 13 : i32
    %113 = vector.broadcast %c13_i32_36 : i32 to vector<128x256xi32>
    %114 = arith.shrsi %112, %113 : vector<128x256xi32>
    %115 = arith.xori %112, %114 : vector<128x256xi32>
    %c1779033703_i32_37 = arith.constant 1779033703 : i32
    %116 = vector.broadcast %c1779033703_i32_37 : i32 to vector<128x256xi32>
    %117 = arith.muli %115, %116 : vector<128x256xi32>
    %c16_i32_38 = arith.constant 16 : i32
    %118 = vector.broadcast %c16_i32_38 : i32 to vector<128x256xi32>
    %119 = arith.shrsi %117, %118 : vector<128x256xi32>
    %120 = arith.xori %117, %119 : vector<128x256xi32>
    %c8_i32_39 = arith.constant 8 : i32
    %121 = vector.broadcast %c8_i32_39 : i32 to vector<128x256xi32>
    %122 = arith.shrsi %120, %121 : vector<128x256xi32>
    %c1_i32_40 = arith.constant 1 : i32
    %123 = vector.broadcast %c1_i32_40 : i32 to vector<128x256xi32>
    %124 = arith.andi %122, %123 : vector<128x256xi32>
    %c0_i32_41 = arith.constant 0 : i32
    %125 = vector.broadcast %c0_i32_41 : i32 to vector<128x256xi32>
    %126 = arith.cmpi eq, %124, %125 : vector<128x256xi32>
    %cst_42 = arith.constant 0.000000e+00 : f32
    %127 = vector.broadcast %cst_42 : f32 to vector<128x256xf32>
    %128 = arith.maximumf %93, %127 : vector<128x256xf32>
    %cst_43 = arith.constant 0.000000e+00 : f32
    %129 = vector.broadcast %cst_43 : f32 to vector<128x256xf32>
    %130 = arith.select %126, %128, %129 : vector<128x256xi1>, vector<128x256xf32>
    %131 = arith.truncf %130 : vector<128x256xf32> to vector<128x256xbf16>
    %c0_44 = arith.constant 0 : index
    %c0_45 = arith.constant 0 : index
    %132 = vector.load %arg9[%c0_44, %c0_45] : memref<256x128xbf16, #tpu.memory_space<vmem>>, vector<256x128xbf16>
    %cst_46 = arith.constant dense<0.000000e+00> : vector<128x128xf32>
    %133 = tpu.matmul %131, %132, %cst_46 {dimension_numbers = #tpu.dot_dimension_numbers<[1], [0], [0], [1], [0, 0, 1, 1], [], []>} : vector<128x256xbf16>, vector<256x128xbf16>, vector<128x128xf32> -> vector<128x128xf32>
    %c0_47 = arith.constant 0 : index
    %c0_48 = arith.constant 0 : index
    %134 = vector.load %arg10[%c0_47, %c0_48] : memref<1x128xf32, #tpu.memory_space<vmem>>, vector<1x128xf32>
    %135 = vector.broadcast %134 : vector<1x128xf32> to vector<128x128xf32>
    %136 = arith.addf %133, %135 : vector<128x128xf32>
    %137 = tpu.iota {dimensions = array<i32: 0>} : vector<128x128xi32>
    %138 = vector.broadcast %1 : i32 to vector<128x128xi32>
    %139 = arith.addi %137, %138 : vector<128x128xi32>
    %140 = tpu.iota {dimensions = array<i32: 1>} : vector<128x128xi32>
    %c16777619_i32_49 = arith.constant 16777619 : i32
    %141 = vector.broadcast %c16777619_i32_49 : i32 to vector<128x128xi32>
    %142 = arith.muli %139, %141 : vector<128x128xi32>
    %c1640531527_i32_50 = arith.constant 1640531527 : i32
    %143 = vector.broadcast %c1640531527_i32_50 : i32 to vector<128x128xi32>
    %144 = arith.muli %140, %143 : vector<128x128xi32>
    %145 = arith.addi %142, %144 : vector<128x128xi32>
    %c668265263_i32_51 = arith.constant 668265263 : i32
    %146 = arith.muli %0, %c668265263_i32_51 : i32
    %147 = vector.broadcast %146 : i32 to vector<128x128xi32>
    %148 = arith.addi %145, %147 : vector<128x128xi32>
    %c663608940_i32 = arith.constant 663608940 : i32
    %149 = vector.broadcast %c663608940_i32 : i32 to vector<128x128xi32>
    %150 = arith.addi %148, %149 : vector<128x128xi32>
    %c15_i32_52 = arith.constant 15 : i32
    %151 = vector.broadcast %c15_i32_52 : i32 to vector<128x128xi32>
    %152 = arith.shrsi %150, %151 : vector<128x128xi32>
    %153 = arith.xori %150, %152 : vector<128x128xi32>
    %c2146121005_i32_53 = arith.constant 2146121005 : i32
    %154 = vector.broadcast %c2146121005_i32_53 : i32 to vector<128x128xi32>
    %155 = arith.muli %153, %154 : vector<128x128xi32>
    %c13_i32_54 = arith.constant 13 : i32
    %156 = vector.broadcast %c13_i32_54 : i32 to vector<128x128xi32>
    %157 = arith.shrsi %155, %156 : vector<128x128xi32>
    %158 = arith.xori %155, %157 : vector<128x128xi32>
    %c1779033703_i32_55 = arith.constant 1779033703 : i32
    %159 = vector.broadcast %c1779033703_i32_55 : i32 to vector<128x128xi32>
    %160 = arith.muli %158, %159 : vector<128x128xi32>
    %c16_i32_56 = arith.constant 16 : i32
    %161 = vector.broadcast %c16_i32_56 : i32 to vector<128x128xi32>
    %162 = arith.shrsi %160, %161 : vector<128x128xi32>
    %163 = arith.xori %160, %162 : vector<128x128xi32>
    %c8_i32_57 = arith.constant 8 : i32
    %164 = vector.broadcast %c8_i32_57 : i32 to vector<128x128xi32>
    %165 = arith.shrsi %163, %164 : vector<128x128xi32>
    %c1_i32_58 = arith.constant 1 : i32
    %166 = vector.broadcast %c1_i32_58 : i32 to vector<128x128xi32>
    %167 = arith.andi %165, %166 : vector<128x128xi32>
    %c0_i32_59 = arith.constant 0 : i32
    %168 = vector.broadcast %c0_i32_59 : i32 to vector<128x128xi32>
    %169 = arith.cmpi eq, %167, %168 : vector<128x128xi32>
    %cst_60 = arith.constant 0.000000e+00 : f32
    %170 = vector.broadcast %cst_60 : f32 to vector<128x128xf32>
    %171 = arith.maximumf %136, %170 : vector<128x128xf32>
    %cst_61 = arith.constant 0.000000e+00 : f32
    %172 = vector.broadcast %cst_61 : f32 to vector<128x128xf32>
    %173 = arith.select %169, %171, %172 : vector<128x128xi1>, vector<128x128xf32>
    %174 = arith.truncf %173 : vector<128x128xf32> to vector<128x128xbf16>
    %c0_62 = arith.constant 0 : index
    %c0_63 = arith.constant 0 : index
    %175 = vector.load %arg11[%c0_62, %c0_63] : memref<128x128xbf16, #tpu.memory_space<vmem>>, vector<128x128xbf16>
    %cst_64 = arith.constant dense<0.000000e+00> : vector<128x128xf32>
    %176 = tpu.matmul %174, %175, %cst_64 {dimension_numbers = #tpu.dot_dimension_numbers<[1], [0], [0], [1], [0, 0, 1, 1], [], []>} : vector<128x128xbf16>, vector<128x128xbf16>, vector<128x128xf32> -> vector<128x128xf32>
    %c0_65 = arith.constant 0 : index
    %c0_66 = arith.constant 0 : index
    %177 = vector.load %arg12[%c0_65, %c0_66] : memref<1x128xf32, #tpu.memory_space<vmem>>, vector<1x128xf32>
    %178 = vector.broadcast %177 : vector<1x128xf32> to vector<128x128xf32>
    %179 = arith.addf %176, %178 : vector<128x128xf32>
    %c0_67 = arith.constant 0 : index
    %c0_68 = arith.constant 0 : index
    %180 = vector.load %arg13[%c0_67, %c0_68] : memref<128x128xf32, #tpu.memory_space<vmem>>, vector<128x128xf32>
    tpu.vector_store %arg13[%c0_67, %c0_68], %179 {strides = array<i32>} : memref<128x128xf32, #tpu.memory_space<vmem>>, vector<128x128xf32>,
    return
  }
  func.func @transform_0(%arg0: i32) -> i32 {
    %c0_i32 = arith.constant 0 : i32
    %c0_i32_0 = arith.constant 0 : i32
    return %c0_i32 : i32
  }
  func.func @transform_1(%arg0: i32) -> (i32, i32) {
    %c0_i32 = arith.constant 0 : i32
    %c0_i32_0 = arith.constant 0 : i32
    return %arg0, %c0_i32 : i32, i32
  }
  func.func @transform_2(%arg0: i32) -> (i32, i32) {
    %c0_i32 = arith.constant 0 : i32
    %c0_i32_0 = arith.constant 0 : i32
    %c0_i32_1 = arith.constant 0 : i32
    return %c0_i32, %c0_i32_0 : i32, i32
  }
  func.func @transform_3(%arg0: i32) -> (i32, i32) {
    %c0_i32 = arith.constant 0 : i32
    %c0_i32_0 = arith.constant 0 : i32
    %c0_i32_1 = arith.constant 0 : i32
    return %c0_i32, %c0_i32_0 : i32, i32
  }
  func.func @transform_4(%arg0: i32) -> (i32, i32) {
    %c0_i32 = arith.constant 0 : i32
    %c0_i32_0 = arith.constant 0 : i32
    %c0_i32_1 = arith.constant 0 : i32
    return %c0_i32, %c0_i32_0 : i32, i32
  }
  func.func @transform_5(%arg0: i32) -> (i32, i32) {
    %c0_i32 = arith.constant 0 : i32
    %c0_i32_0 = arith.constant 0 : i32
    %c0_i32_1 = arith.constant 0 : i32
    return %c0_i32, %c0_i32_0 : i32, i32
  }
  func.func @transform_6(%arg0: i32) -> (i32, i32) {
    %c0_i32 = arith.constant 0 : i32
    %c0_i32_0 = arith.constant 0 : i32
    %c0_i32_1 = arith.constant 0 : i32
    return %c0_i32, %c0_i32_0 : i32, i32
  }
  func.func @transform_7(%arg0: i32) -> (i32, i32) {
    %c0_i32 = arith.constant 0 : i32
    %c0_i32_0 = arith.constant 0 : i32
    %c0_i32_1 = arith.constant 0 : i32
    return %c0_i32, %c0_i32_0 : i32, i32
  }
  func.func @transform_8(%arg0: i32) -> (i32, i32) {
    %c0_i32 = arith.constant 0 : i32
    %c0_i32_0 = arith.constant 0 : i32
    %c0_i32_1 = arith.constant 0 : i32
    return %c0_i32, %c0_i32_0 : i32, i32
  }
  func.func @transform_9(%arg0: i32) -> (i32, i32) {
    %c0_i32 = arith.constant 0 : i32
    %c0_i32_0 = arith.constant 0 : i32
    %c0_i32_1 = arith.constant 0 : i32
    return %c0_i32, %c0_i32_0 : i32, i32
  }
  func.func @transform_10(%arg0: i32) -> (i32, i32) {
    %c0_i32 = arith.constant 0 : i32
    %c0_i32_0 = arith.constant 0 : i32
    %c0_i32_1 = arith.constant 0 : i32
    return %c0_i32, %c0_i32_0 : i32, i32
  }
  func.func @transform_11(%arg0: i32) -> (i32, i32) {
    %c0_i32 = arith.constant 0 : i32
    %c0_i32_0 = arith.constant 0 : i32
    %c0_i32_1 = arith.constant 0 : i32
    return %c0_i32, %c0_i32_0 : i32, i32
  }
  func.func @transform_12(%arg0: i32) -> (i32, i32) {
    %c0_i32 = arith.constant 0 : i32
    %c0_i32_0 = arith.constant 0 : i32
    return %arg0, %c0_i32 : i32, i32
  }
}

</mosaic_0001>

<llo_original>
// kernel: tpu_custom_call.1
$region0: #{tpu_custom_call.1}
  #allocation0 [shape = 'u32[]', space=smem, size = 0x4, offset = 0x4, fixed_abs, tag = 'smem constant byte address 0x4 - core index']
  #allocation1 [shape = 'u32[144,128]{1,0:T(1,128)}', space=vmem, size = 0x12000, scoped, tag = 'internal scratch']
  #allocation2 [shape = 's32[1]{0:T(128)S(6)}', space=smem, size = 0x200, scoped, tag = 'scoped memory for tpu_custom_call.1']
  %s0 = inlined_call_operand.<no memory space> [shape: s32[1], index: 0, kind: input, shape index: {}]
  %s1 = inlined_call_operand.hbm [shape: bf16[256,512], index: 1, kind: input, shape index: {}]
  %s2 = inlined_call_operand.hbm [shape: bf16[512,128], index: 2, kind: input, shape index: {}]
  %s3 = inlined_call_operand.vmem [shape: f32[1,128], index: 3, kind: input, shape index: {}]
  %s4 = inlined_call_operand.hbm [shape: bf16[128,256], index: 4, kind: input, shape index: {}]
  %s5 = inlined_call_operand.vmem [shape: f32[1,256], index: 5, kind: input, shape index: {}]
  %s6 = inlined_call_operand.hbm [shape: bf16[256,256], index: 6, kind: input, shape index: {}]
  %s7 = inlined_call_operand.vmem [shape: f32[1,256], index: 7, kind: input, shape index: {}]
  %s8 = inlined_call_operand.hbm [shape: bf16[256,128], index: 8, kind: input, shape index: {}]
  %s9 = inlined_call_operand.vmem [shape: f32[1,128], index: 9, kind: input, shape index: {}]
  %s10 = inlined_call_operand.hbm [shape: bf16[128,128], index: 10, kind: input, shape index: {}]
  %s11 = inlined_call_operand.vmem [shape: f32[1,128], index: 11, kind: input, shape index: {}]
  %s12 = inlined_call_operand.hbm [shape: f32[256,128], index: 12, kind: output, shape index: {}]
  %s13 = sld [smem:[#allocation0]]
  $region105: #{tpu_custom_call.1} parent=0
    _
  %s15 = ssub.s32 1, %s13
  %s16 = scalar_select 0, %s15, %s13
  %17 = sst [smem:[#allocation2]] %s0
  $region1: #{tpu_custom_call.1} parent=0
    #allocation3 [shape = 'u8[262144]{0}', space=vmem, size = 0x40000, scoped, tag = 'input window, operand 1']
    #allocation4 [shape = 's32[2]{0}', space=sflag, size = 0x8, scoped, tag = 'scoped memory for tpu_custom_call.1']
    #allocation5 [shape = 's32[2]{0}', space=sflag, size = 0x8, scoped, tag = 'scoped memory for tpu_custom_call.1']
    #allocation6 [shape = 'u8[131072]{0}', space=vmem, size = 0x20000, scoped, tag = 'input window, operand 2, single buffered']
    #allocation7 [shape = 's32[1]{0}', space=sflag, size = 0x4, scoped, tag = 'scoped memory for tpu_custom_call.1']
    #allocation8 [shape = 'u8[65536]{0}', space=vmem, size = 0x10000, scoped, tag = 'input window, operand 4, single buffered']
    #allocation9 [shape = 'u8[131072]{0}', space=vmem, size = 0x20000, scoped, tag = 'input window, operand 6, single buffered']
    #allocation10 [shape = 's32[1]{0}', space=sflag, size = 0x4, scoped, tag = 'scoped memory for tpu_custom_call.1']
    #allocation11 [shape = 'u8[65536]{0}', space=vmem, size = 0x10000, scoped, tag = 'input window, operand 8, single buffered']
    #allocation12 [shape = 'u8[32768]{0}', space=vmem, size = 0x8000, scoped, tag = 'input window, operand 10, single buffered']
    #allocation13 [shape = 's32[1]{0}', space=sflag, size = 0x4, scoped, tag = 'scoped memory for tpu_custom_call.1']
    #allocation14 [shape = 'u8[131072]{0}', space=vmem, size = 0x20000, scoped, tag = 'output window, operand 0']
    %18 = vsyncpa [#allocation4], 0
    %s19 = scalar_lea.sflag [#allocation4], 1
    %20 = vsyncpa %s19, 0
    %21 = vsyncpa [#allocation7], 0
    %22 = vsyncpa [#allocation10], 0
    %23 = vsyncpa [#allocation13], 0
    %24 = vsyncpa [#allocation5], 0
    %s25 = scalar_lea.sflag [#allocation5], 1
    %26 = vsyncpa %s25, 0
    loop: start=0, step=1, limit=4
    $region2: #{tpu_custom_call.1} parent=1 // loop_pre_header
      _
    $region3: #{tpu_custom_call.1} parent=1 // loop_header
      %s28 = sphi 0, %s32
      %p29 = scmp.ge.s32.totalorder %s28, 4
      %s36 = sphi 0, %s36
      %s38 = sphi 0, %s36
      %s39 = sphi 0, %s38
      %s53 = sphi 0, %s39
      %s59 = sphi 0, %s61
      %s62 = sphi 0, %s59
      %s63 = sphi 0, %s62
      %s79 = sphi 0, %s63
      %s83 = sphi 0, %s83
      %s85 = sphi 0, %s83
      %s86 = sphi 0, %s85
      %s100 = sphi 0, %s86
      %s104 = sphi 0, %s104
      %s106 = sphi 0, %s104
      %s107 = sphi 0, %s106
      %s121 = sphi 0, %s107
      %s125 = sphi 0, %s125
      %s127 = sphi 0, %s125
      %s128 = sphi 0, %s127
      %s142 = sphi 0, %s128
      %s146 = sphi 0, %s146
      %s148 = sphi 0, %s146
      %s149 = sphi 0, %s148
      %s163 = sphi 0, %s149
      %s167 = sphi 0, %s167
      %s169 = sphi 0, %s167
      %s170 = sphi 0, %s169
      %s184 = sphi 0, %s170
      %s188 = sphi 0, %s188
      %s190 = sphi 0, %s188
      %s191 = sphi 0, %s190
      %s205 = sphi 0, %s191
      %s209 = sphi 0, %s209
      %s211 = sphi 0, %s209
      %s212 = sphi 0, %s211
      %s226 = sphi 0, %s212
      %s230 = sphi 0, %s230
      %s232 = sphi 0, %s230
      %s233 = sphi 0, %s232
      %s247 = sphi 0, %s233
      %s251 = sphi 0, %s251
      %s253 = sphi 0, %s251
      %s254 = sphi 0, %s253
      %s268 = sphi 0, %s254
      %s272 = sphi 0, %s272
      %s274 = sphi 0, %s272
      %s275 = sphi 0, %s274
      %s289 = sphi 0, %s275
      %s295 = sphi 0, %s297
      %s298 = sphi 0, %s295
      %s299 = sphi 0, %s298
      %s315 = sphi 0, %s299
    $region4: #{tpu_custom_call.1} parent=1 // loop_header_branch
      %31 = sbr.rel (%p29) target = $region8
    $region5: #{tpu_custom_call.1} parent=1 // loop_body
      %s33 = ssub.s32 %s28, 1
      %s34 = ssub.s32 %s28, 2
      %s35 = sadd.s32 %s28, 1
      %s37 = sadd.s32 %s36, 1
      %p40 = scmp.eq.s32.totalorder %s28, 1
      %p41 = scmp.ne.s32.totalorder %s36, %s38
      %p42 = scmp.eq.s32.totalorder %s28, 0
      %p43 = por %p41, %p42
      %p44 = scmp.ne.s32.totalorder %s36, %s38
      %p45 = scmp.eq.s32.totalorder %s33, 1
      %p46 = por %p44, %p45
      %p47 = scmp.ne.s32.totalorder %s38, %s39
      %p48 = scmp.eq.s32.totalorder %s33, 0
      %p49 = por %p47, %p48
      %p50 = scmp.ne.s32.totalorder %s38, %s39
      %p51 = scmp.eq.s32.totalorder %s34, 1
      %p52 = por %p50, %p51
      %p54 = scmp.ne.s32.totalorder %s39, %s53
      %p55 = scmp.eq.s32.totalorder %s34, 0
      %p56 = por %p54, %p55
      %s57 = ssub.s32 %s28, %s35
      %p58 = scmp.eq.s32.totalorder %s57, 0
      %s60 = sadd.s32 %s59, 1
      %s61 = scalar_select %p58, %s59, %s60
      %p64 = pneg %p58
      %p65 = scmp.eq.s32.totalorder %s28, 1
      %p66 = por %p64, %p65
      %p67 = scmp.ne.s32.totalorder %s59, %s62
      %p68 = scmp.eq.s32.totalorder %s28, 0
      %p69 = por %p67, %p68
      %p70 = scmp.ne.s32.totalorder %s59, %s62
      %p71 = scmp.eq.s32.totalorder %s33, 1
      %p72 = por %p70, %p71
      %p73 = scmp.ne.s32.totalorder %s62, %s63
      %p74 = scmp.eq.s32.totalorder %s33, 0
      %p75 = por %p73, %p74
      %p76 = scmp.ne.s32.totalorder %s62, %s63
      %p77 = scmp.eq.s32.totalorder %s34, 1
      %p78 = por %p76, %p77
      %p80 = scmp.ne.s32.totalorder %s63, %s79
      %p81 = scmp.eq.s32.totalorder %s34, 0
      %p82 = por %p80, %p81
      %s84 = sadd.s32 %s83, 1
      %p87 = scmp.eq.s32.totalorder %s28, 1
      %p88 = scmp.ne.s32.totalorder %s83, %s85
      %p89 = scmp.eq.s32.totalorder %s28, 0
      %p90 = por %p88, %p89
      %p91 = scmp.ne.s32.totalorder %s83, %s85
      %p92 = scmp.eq.s32.totalorder %s33, 1
      %p93 = por %p91, %p92
      %p94 = scmp.ne.s32.totalorder %s85, %s86
      %p95 = scmp.eq.s32.totalorder %s33, 0
      %p96 = por %p94, %p95
      %p97 = scmp.ne.s32.totalorder %s85, %s86
      %p98 = scmp.eq.s32.totalorder %s34, 1
      %p99 = por %p97, %p98
      %p101 = scmp.ne.s32.totalorder %s86, %s100
      %p102 = scmp.eq.s32.totalorder %s34, 0
      %p103 = por %p101, %p102
      %s105 = sadd.s32 %s104, 1
      %p108 = scmp.eq.s32.totalorder %s28, 1
      %p109 = scmp.ne.s32.totalorder %s104, %s106
      %p110 = scmp.eq.s32.totalorder %s28, 0
      %p111 = por %p109, %p110
      %p112 = scmp.ne.s32.totalorder %s104, %s106
      %p113 = scmp.eq.s32.totalorder %s33, 1
      %p114 = por %p112, %p113
      %p115 = scmp.ne.s32.totalorder %s106, %s107
      %p116 = scmp.eq.s32.totalorder %s33, 0
      %p117 = por %p115, %p116
      %p118 = scmp.ne.s32.totalorder %s106, %s107
      %p119 = scmp.eq.s32.totalorder %s34, 1
      %p120 = por %p118, %p119
      %p122 = scmp.ne.s32.totalorder %s107, %s121
      %p123 = scmp.eq.s32.totalorder %s34, 0
      %p124 = por %p122, %p123
      %s126 = sadd.s32 %s125, 1
      %p129 = scmp.eq.s32.totalorder %s28, 1
      %p130 = scmp.ne.s32.totalorder %s125, %s127
      %p131 = scmp.eq.s32.totalorder %s28, 0
      %p132 = por %p130, %p131
      %p133 = scmp.ne.s32.totalorder %s125, %s127
      %p134 = scmp.eq.s32.totalorder %s33, 1
      %p135 = por %p133, %p134
      %p136 = scmp.ne.s32.totalorder %s127, %s128
      %p137 = scmp.eq.s32.totalorder %s33, 0
      %p138 = por %p136, %p137
      %p139 = scmp.ne.s32.totalorder %s127, %s128
      %p140 = scmp.eq.s32.totalorder %s34, 1
      %p141 = por %p139, %p140
      %p143 = scmp.ne.s32.totalorder %s128, %s142
      %p144 = scmp.eq.s32.totalorder %s34, 0
      %p145 = por %p143, %p144
      %s147 = sadd.s32 %s146, 1
      %p150 = scmp.eq.s32.totalorder %s28, 1
      %p151 = scmp.ne.s32.totalorder %s146, %s148
      %p152 = scmp.eq.s32.totalorder %s28, 0
      %p153 = por %p151, %p152
      %p154 = scmp.ne.s32.totalorder %s146, %s148
      %p155 = scmp.eq.s32.totalorder %s33, 1
      %p156 = por %p154, %p155
      %p157 = scmp.ne.s32.totalorder %s148, %s149
      %p158 = scmp.eq.s32.totalorder %s33, 0
      %p159 = por %p157, %p158
      %p160 = scmp.ne.s32.totalorder %s148, %s149
      %p161 = scmp.eq.s32.totalorder %s34, 1
      %p162 = por %p160, %p161
      %p164 = scmp.ne.s32.totalorder %s149, %s163
      %p165 = scmp.eq.s32.totalorder %s34, 0
      %p166 = por %p164, %p165
      %s168 = sadd.s32 %s167, 1
      %p171 = scmp.eq.s32.totalorder %s28, 1
      %p172 = scmp.ne.s32.totalorder %s167, %s169
      %p173 = scmp.eq.s32.totalorder %s28, 0
      %p174 = por %p172, %p173
      %p175 = scmp.ne.s32.totalorder %s167, %s169
      %p176 = scmp.eq.s32.totalorder %s33, 1
      %p177 = por %p175, %p176
      %p178 = scmp.ne.s32.totalorder %s169, %s170
      %p179 = scmp.eq.s32.totalorder %s33, 0
      %p180 = por %p178, %p179
      %p181 = scmp.ne.s32.totalorder %s169, %s170
      %p182 = scmp.eq.s32.totalorder %s34, 1
      %p183 = por %p181, %p182
      %p185 = scmp.ne.s32.totalorder %s170, %s184
      %p186 = scmp.eq.s32.totalorder %s34, 0
      %p187 = por %p185, %p186
      %s189 = sadd.s32 %s188, 1
      %p192 = scmp.eq.s32.totalorder %s28, 1
      %p193 = scmp.ne.s32.totalorder %s188, %s190
      %p194 = scmp.eq.s32.totalorder %s28, 0
      %p195 = por %p193, %p194
      %p196 = scmp.ne.s32.totalorder %s188, %s190
      %p197 = scmp.eq.s32.totalorder %s33, 1
      %p198 = por %p196, %p197
      %p199 = scmp.ne.s32.totalorder %s190, %s191
      %p200 = scmp.eq.s32.totalorder %s33, 0
      %p201 = por %p199, %p200
      %p202 = scmp.ne.s32.totalorder %s190, %s191
      %p203 = scmp.eq.s32.totalorder %s34, 1
      %p204 = por %p202, %p203
      %p206 = scmp.ne.s32.totalorder %s191, %s205
      %p207 = scmp.eq.s32.totalorder %s34, 0
      %p208 = por %p206, %p207
      %s210 = sadd.s32 %s209, 1
      %p213 = scmp.eq.s32.totalorder %s28, 1
      %p214 = scmp.ne.s32.totalorder %s209, %s211
      %p215 = scmp.eq.s32.totalorder %s28, 0
      %p216 = por %p214, %p215
      %p217 = scmp.ne.s32.totalorder %s209, %s211
      %p218 = scmp.eq.s32.totalorder %s33, 1
      %p219 = por %p217, %p218
      %p220 = scmp.ne.s32.totalorder %s211, %s212
      %p221 = scmp.eq.s32.totalorder %s33, 0
      %p222 = por %p220, %p221
      %p223 = scmp.ne.s32.totalorder %s211, %s212
      %p224 = scmp.eq.s32.totalorder %s34, 1
      %p225 = por %p223, %p224
      %p227 = scmp.ne.s32.totalorder %s212, %s226
      %p228 = scmp.eq.s32.totalorder %s34, 0
      %p229 = por %p227, %p228
      %s231 = sadd.s32 %s230, 1
      %p234 = scmp.eq.s32.totalorder %s28, 1
      %p235 = scmp.ne.s32.totalorder %s230, %s232
      %p236 = scmp.eq.s32.totalorder %s28, 0
      %p237 = por %p235, %p236
      %p238 = scmp.ne.s32.totalorder %s230, %s232
      %p239 = scmp.eq.s32.totalorder %s33, 1
      %p240 = por %p238, %p239
      %p241 = scmp.ne.s32.totalorder %s232, %s233
      %p242 = scmp.eq.s32.totalorder %s33, 0
      %p243 = por %p241, %p242
      %p244 = scmp.ne.s32.totalorder %s232, %s233
      %p245 = scmp.eq.s32.totalorder %s34, 1
      %p246 = por %p244, %p245
      %p248 = scmp.ne.s32.totalorder %s233, %s247
      %p249 = scmp.eq.s32.totalorder %s34, 0
      %p250 = por %p248, %p249
      %s252 = sadd.s32 %s251, 1
      %p255 = scmp.eq.s32.totalorder %s28, 1
      %p256 = scmp.ne.s32.totalorder %s251, %s253
      %p257 = scmp.eq.s32.totalorder %s28, 0
      %p258 = por %p256, %p257
      %p259 = scmp.ne.s32.totalorder %s251, %s253
      %p260 = scmp.eq.s32.totalorder %s33, 1
      %p261 = por %p259, %p260
      %p262 = scmp.ne.s32.totalorder %s253, %s254
      %p263 = scmp.eq.s32.totalorder %s33, 0
      %p264 = por %p262, %p263
      %p265 = scmp.ne.s32.totalorder %s253, %s254
      %p266 = scmp.eq.s32.totalorder %s34, 1
      %p267 = por %p265, %p266
      %p269 = scmp.ne.s32.totalorder %s254, %s268
      %p270 = scmp.eq.s32.totalorder %s34, 0
      %p271 = por %p269, %p270
      %s273 = sadd.s32 %s272, 1
      %p276 = scmp.eq.s32.totalorder %s28, 1
      %p277 = scmp.ne.s32.totalorder %s272, %s274
      %p278 = scmp.eq.s32.totalorder %s28, 0
      %p279 = por %p277, %p278
      %p280 = scmp.ne.s32.totalorder %s272, %s274
      %p281 = scmp.eq.s32.totalorder %s33, 1
      %p282 = por %p280, %p281
      %p283 = scmp.ne.s32.totalorder %s274, %s275
      %p284 = scmp.eq.s32.totalorder %s33, 0
      %p285 = por %p283, %p284
      %p286 = scmp.ne.s32.totalorder %s274, %s275
      %p287 = scmp.eq.s32.totalorder %s34, 1
      %p288 = por %p286, %p287
      %p290 = scmp.ne.s32.totalorder %s275, %s289
      %p291 = scmp.eq.s32.totalorder %s34, 0
      %p292 = por %p290, %p291
      %s293 = ssub.s32 %s28, %s35
      %p294 = scmp.eq.s32.totalorder %s293, 0
      %s296 = sadd.s32 %s295, 1
      %s297 = scalar_select %p294, %s295, %s296
      %p300 = pneg %p294
      %p301 = scmp.eq.s32.totalorder %s28, 1
      %p302 = por %p300, %p301
      %p303 = scmp.ne.s32.totalorder %s295, %s298
      %p304 = scmp.eq.s32.totalorder %s28, 0
      %p305 = por %p303, %p304
      %p306 = scmp.ne.s32.totalorder %s295, %s298
      %p307 = scmp.eq.s32.totalorder %s33, 1
      %p308 = por %p306, %p307
      %p309 = scmp.ne.s32.totalorder %s298, %s299
      %p310 = scmp.eq.s32.totalorder %s33, 0
      %p311 = por %p309, %p310
      %p312 = scmp.ne.s32.totalorder %s298, %s299
      %p313 = scmp.eq.s32.totalorder %s34, 1
      %p314 = por %p312, %p313
      %p316 = scmp.ne.s32.totalorder %s299, %s315
      %p317 = scmp.eq.s32.totalorder %s34, 0
      %p318 = por %p316, %p317
      %p319 = scmp.le.s32.totalorder 1, %s28
      %p320 = scmp.lt.s32.totalorder %s28, 3
      %p321 = pnand %p319, %p320
      %p322 = pneg %p321
      // Predicated region
      $region9: #{tpu_custom_call.1} parent=5 // pred_check
        _
      $region10: #{tpu_custom_call.1} parent=5 // pred_check_branch
        %324 = sbr.rel (%p321) target = $region12
      $region11: #{tpu_custom_call.1} parent=5 // pred_region
        %s325 = ssub.s32 %s28, 1
        // Predicated region
        $region13: #{tpu_custom_call.1} parent=11 // pred_check
          %p326 = pneg %p49
        $region14: #{tpu_custom_call.1} parent=11 // pred_check_branch
          %328 = sbr.rel (%p326) target = $region16
        $region15: #{tpu_custom_call.1} parent=11 // pred_region
          _
        $region16: #{tpu_custom_call.1} parent=11 // pred_fallthru
          _
        // Predicated region
        $region17: #{tpu_custom_call.1} parent=11 // pred_check
          %p329 = pneg %p96
        $region18: #{tpu_custom_call.1} parent=11 // pred_check_branch
          %331 = sbr.rel (%p329) target = $region20
        $region19: #{tpu_custom_call.1} parent=11 // pred_region
          %s333 = ssub.s32 4096, 4096
          %334 = vsyncadd [#allocation7], %s333
          %s335 = sshll.u32 [#allocation6], 4
          %s336 = int_to_ptr.vmem [resolvable:$true] %s335
          %341 = dma.hbm_to_vmem [thread:$0]  %s2, 4096, %s336, [#allocation7], 64, 64, 4
        $region20: #{tpu_custom_call.1} parent=11 // pred_fallthru
          _
        // Predicated region
        $region21: #{tpu_custom_call.1} parent=11 // pred_check
          %p342 = pneg %p117
        $region22: #{tpu_custom_call.1} parent=11 // pred_check_branch
          %344 = sbr.rel (%p342) target = $region24
        $region23: #{tpu_custom_call.1} parent=11 // pred_region
          _
        $region24: #{tpu_custom_call.1} parent=11 // pred_fallthru
          _
        // Predicated region
        $region25: #{tpu_custom_call.1} parent=11 // pred_check
          %p345 = pneg %p138
        $region26: #{tpu_custom_call.1} parent=11 // pred_check_branch
          %347 = sbr.rel (%p345) target = $region28
        $region27: #{tpu_custom_call.1} parent=11 // pred_region
          %s349 = ssub.s32 2048, 2048
          %350 = vsyncadd [#allocation7], %s349
          %s351 = sshll.u32 [#allocation8], 4
          %s352 = int_to_ptr.vmem [resolvable:$true] %s351
          %357 = dma.hbm_to_vmem [thread:$0]  %s4, 2048, %s352, [#allocation7], 128, 128, 8
        $region28: #{tpu_custom_call.1} parent=11 // pred_fallthru
          _
        // Predicated region
        $region29: #{tpu_custom_call.1} parent=11 // pred_check
          %p358 = pneg %p159
        $region30: #{tpu_custom_call.1} parent=11 // pred_check_branch
          %360 = sbr.rel (%p358) target = $region32
        $region31: #{tpu_custom_call.1} parent=11 // pred_region
          _
        $region32: #{tpu_custom_call.1} parent=11 // pred_fallthru
          _
        // Predicated region
        $region33: #{tpu_custom_call.1} parent=11 // pred_check
          %p361 = pneg %p180
        $region34: #{tpu_custom_call.1} parent=11 // pred_check_branch
          %363 = sbr.rel (%p361) target = $region36
        $region35: #{tpu_custom_call.1} parent=11 // pred_region
          %s365 = ssub.s32 4096, 4096
          %366 = vsyncadd [#allocation10], %s365
          %s367 = sshll.u32 [#allocation9], 4
          %s368 = int_to_ptr.vmem [resolvable:$true] %s367
          %373 = dma.hbm_to_vmem [thread:$0]  %s6, 4096, %s368, [#allocation10], 128, 128, 8
        $region36: #{tpu_custom_call.1} parent=11 // pred_fallthru
          _
        // Predicated region
        $region37: #{tpu_custom_call.1} parent=11 // pred_check
          %p374 = pneg %p201
        $region38: #{tpu_custom_call.1} parent=11 // pred_check_branch
          %376 = sbr.rel (%p374) target = $region40
        $region39: #{tpu_custom_call.1} parent=11 // pred_region
          _
        $region40: #{tpu_custom_call.1} parent=11 // pred_fallthru
          _
        // Predicated region
        $region41: #{tpu_custom_call.1} parent=11 // pred_check
          %p377 = pneg %p222
        $region42: #{tpu_custom_call.1} parent=11 // pred_check_branch
          %379 = sbr.rel (%p377) target = $region44
        $region43: #{tpu_custom_call.1} parent=11 // pred_region
          %s381 = ssub.s32 2048, 2048
          %382 = vsyncadd [#allocation10], %s381
          %s383 = sshll.u32 [#allocation11], 4
          %s384 = int_to_ptr.vmem [resolvable:$true] %s383
          %389 = dma.hbm_to_vmem [thread:$0]  %s8, 2048, %s384, [#allocation10], 64, 64, 4
        $region44: #{tpu_custom_call.1} parent=11 // pred_fallthru
          _
        // Predicated region
        $region45: #{tpu_custom_call.1} parent=11 // pred_check
          %p390 = pneg %p243
        $region46: #{tpu_custom_call.1} parent=11 // pred_check_branch
          %392 = sbr.rel (%p390) target = $region48
        $region47: #{tpu_custom_call.1} parent=11 // pred_region
          _
        $region48: #{tpu_custom_call.1} parent=11 // pred_fallthru
          _
        // Predicated region
        $region49: #{tpu_custom_call.1} parent=11 // pred_check
          %p393 = pneg %p264
        $region50: #{tpu_custom_call.1} parent=11 // pred_check_branch
          %395 = sbr.rel (%p393) target = $region52
        $region51: #{tpu_custom_call.1} parent=11 // pred_region
          %s397 = ssub.s32 1024, 1024
          %398 = vsyncadd [#allocation13], %s397
          %s399 = sshll.u32 [#allocation12], 4
          %s400 = int_to_ptr.vmem [resolvable:$true] %s399
          %405 = dma.hbm_to_vmem [thread:$0]  %s10, 1024, %s400, [#allocation13], 64, 64, 4
        $region52: #{tpu_custom_call.1} parent=11 // pred_fallthru
          _
        // Predicated region
        $region53: #{tpu_custom_call.1} parent=11 // pred_check
          %p406 = pneg %p285
        $region54: #{tpu_custom_call.1} parent=11 // pred_check_branch
          %408 = sbr.rel (%p406) target = $region56
        $region55: #{tpu_custom_call.1} parent=11 // pred_region
          _
        $region56: #{tpu_custom_call.1} parent=11 // pred_fallthru
          _
      $region12: #{tpu_custom_call.1} parent=5 // pred_fallthru
        _
      %p409 = scmp.lt.s32.totalorder %s28, 2
      // Predicated region
      $region57: #{tpu_custom_call.1} parent=5 // pred_check
        %p410 = pneg %p409
      $region58: #{tpu_custom_call.1} parent=5 // pred_check_branch
        %412 = sbr.rel (%p410) target = $region60
      $region59: #{tpu_custom_call.1} parent=5 // pred_region
        // Predicated region
        $region61: #{tpu_custom_call.1} parent=59 // pred_check
          %p413 = pneg %p69
        $region62: #{tpu_custom_call.1} parent=59 // pred_check_branch
          %415 = sbr.rel (%p413) target = $region64
        $region63: #{tpu_custom_call.1} parent=59 // pred_region
          %s416 = sand.u32 %s59, 1
          %s417 = scalar_lea.sflag [#allocation4], %s416
          %s418 = sand.u32 %s59, 1
          %s419 = smul.addr %s418, 256
          %s420 = scalar_lea.vmem [#allocation3], %s419
          %s421 = smul.u32 16, %s28
          %s423 = ssub.s32 4096, 4096
          %424 = vsyncadd %s417, %s423
          %s425 = smul.addr %s421, 4
          %s426 = smul.addr %s425, 64
          %s427 = scalar_lea.hbm %s1, %s426
          %s428 = sshll.u32 %s420, 4
          %s429 = int_to_ptr.vmem [resolvable:$true] %s428
          %434 = dma.hbm_to_vmem [thread:$0]  %s427, 4096, %s429, %s417, 256, 256, 16
        $region64: #{tpu_custom_call.1} parent=59 // pred_fallthru
          _
      $region60: #{tpu_custom_call.1} parent=5 // pred_fallthru
        _
      %p435 = scmp.le.s32.totalorder 1, %s28
      %p436 = scmp.lt.s32.totalorder %s28, 3
      %p437 = pnand %p435, %p436
      %p438 = pneg %p437
      // Predicated region
      $region65: #{tpu_custom_call.1} parent=5 // pred_check
        _
      $region66: #{tpu_custom_call.1} parent=5 // pred_check_branch
        %440 = sbr.rel (%p437) target = $region68
      $region67: #{tpu_custom_call.1} parent=5 // pred_region
        %s441 = ssub.s32 %s28, 1
        %s442 = sand.u32 %s62, 1
        %s443 = scalar_lea.sflag [#allocation4], %s442
        %s444 = sand.u32 %s62, 1
        %s445 = smul.addr %s444, 256
        %s446 = scalar_lea.vmem [#allocation3], %s445
        // Predicated region
        $region69: #{tpu_custom_call.1} parent=67 // pred_check
          %p447 = pneg %p75
        $region70: #{tpu_custom_call.1} parent=67 // pred_check_branch
          %449 = sbr.rel (%p447) target = $region72
        $region71: #{tpu_custom_call.1} parent=67 // pred_region
          %450 = dma.done %s443, 4096
        $region72: #{tpu_custom_call.1} parent=67 // pred_fallthru
          _
        // Predicated region
        $region73: #{tpu_custom_call.1} parent=67 // pred_check
          %p451 = pneg %p96
        $region74: #{tpu_custom_call.1} parent=67 // pred_check_branch
          %453 = sbr.rel (%p451) target = $region76
        $region75: #{tpu_custom_call.1} parent=67 // pred_region
          %454 = dma.done [#allocation7], 4096
        $region76: #{tpu_custom_call.1} parent=67 // pred_fallthru
          _
        // Predicated region
        $region77: #{tpu_custom_call.1} parent=67 // pred_check
          %p455 = pneg %p138
        $region78: #{tpu_custom_call.1} parent=67 // pred_check_branch
          %457 = sbr.rel (%p455) target = $region80
        $region79: #{tpu_custom_call.1} parent=67 // pred_region
          %458 = dma.done [#allocation7], 2048
        $region80: #{tpu_custom_call.1} parent=67 // pred_fallthru
          _
        // Predicated region
        $region81: #{tpu_custom_call.1} parent=67 // pred_check
          %p459 = pneg %p180
        $region82: #{tpu_custom_call.1} parent=67 // pred_check_branch
          %461 = sbr.rel (%p459) target = $region84
        $region83: #{tpu_custom_call.1} parent=67 // pred_region
          %462 = dma.done [#allocation10], 4096
        $region84: #{tpu_custom_call.1} parent=67 // pred_fallthru
          _
        // Predicated region
        $region85: #{tpu_custom_call.1} parent=67 // pred_check
          %p463 = pneg %p222
        $region86: #{tpu_custom_call.1} parent=67 // pred_check_branch
          %465 = sbr.rel (%p463) target = $region88
        $region87: #{tpu_custom_call.1} parent=67 // pred_region
          %466 = dma.done [#allocation10], 2048
        $region88: #{tpu_custom_call.1} parent=67 // pred_fallthru
          _
        // Predicated region
        $region89: #{tpu_custom_call.1} parent=67 // pred_check
          %p467 = pneg %p264
        $region90: #{tpu_custom_call.1} parent=67 // pred_check_branch
          %469 = sbr.rel (%p467) target = $region92
        $region91: #{tpu_custom_call.1} parent=67 // pred_region
          %470 = dma.done [#allocation13], 1024
        $region92: #{tpu_custom_call.1} parent=67 // pred_fallthru
          _
        %p471 = pneg %p49
        %p472 = pneg %p46
        %s473 = sand.u32 %s62, 1
        %s474 = scalar_lea.sflag [#allocation4], %s473
        %s475 = sand.u32 %s62, 1
        %s476 = smul.addr %s475, 256
        %s477 = scalar_lea.vmem [#allocation3], %s476
        %p478 = pneg %p75
        %p479 = pneg %p72
        %p480 = pneg %p96
        %p481 = pneg %p93
        %p482 = pneg %p117
        %p483 = pneg %p114
        %p484 = pneg %p138
        %p485 = pneg %p135
        %p486 = pneg %p159
        %p487 = pneg %p156
        %p488 = pneg %p180
        %p489 = pneg %p177
        %p490 = pneg %p201
        %p491 = pneg %p198
        %p492 = pneg %p222
        %p493 = pneg %p219
        %p494 = pneg %p243
        %p495 = pneg %p240
        %p496 = pneg %p264
        %p497 = pneg %p261
        %p498 = pneg %p285
        %p499 = pneg %p282
        %p500 = pneg %p311
        %p501 = pneg %p308
        %s502 = sand.u32 %s298, 1
        %s503 = scalar_lea.sflag [#allocation5], %s502
        %s504 = sand.u32 %s298, 1
        %s505 = smul.addr %s504, 128
        %s506 = scalar_lea.vmem [#allocation14], %s505
        %s507 = smul.u32 16, %s33
        %s508 = smul.u32 16, %s33
        %s510 = sld [smem:[#allocation2]]
        %s511 = smul.u32 %s33, 128
        %v512 = vld [vmem:[%s446] sm:$0xff]
        %v513 = vld [vmem:[%s446 + $0x8] sm:$0xff]
        %v514 = vld [vmem:[%s446 + $0x10] sm:$0xff]
        %v515 = vld [vmem:[%s446 + $0x18] sm:$0xff]
        %v516 = vld [vmem:[%s446 + $0x20] sm:$0xff]
        %v517 = vld [vmem:[%s446 + $0x28] sm:$0xff]
        %v518 = vld [vmem:[%s446 + $0x30] sm:$0xff]
        %v519 = vld [vmem:[%s446 + $0x38] sm:$0xff]
        %v520 = vld [vmem:[%s446 + $0x40] sm:$0xff]
        %v521 = vld [vmem:[%s446 + $0x48] sm:$0xff]
        %v522 = vld [vmem:[%s446 + $0x50] sm:$0xff]
        %v523 = vld [vmem:[%s446 + $0x58] sm:$0xff]
        %v524 = vld [vmem:[%s446 + $0x60] sm:$0xff]
        %v525 = vld [vmem:[%s446 + $0x68] sm:$0xff]
        %v526 = vld [vmem:[%s446 + $0x70] sm:$0xff]
        %v527 = vld [vmem:[%s446 + $0x78] sm:$0xff]
        %v528 = vld [vmem:[%s446 + $0x80] sm:$0xff]
        %v529 = vld [vmem:[%s446 + $0x88] sm:$0xff]
        %v530 = vld [vmem:[%s446 + $0x90] sm:$0xff]
        %v531 = vld [vmem:[%s446 + $0x98] sm:$0xff]
        %v532 = vld [vmem:[%s446 + $0xa0] sm:$0xff]
        %v533 = vld [vmem:[%s446 + $0xa8] sm:$0xff]
        %v534 = vld [vmem:[%s446 + $0xb0] sm:$0xff]
        %v535 = vld [vmem:[%s446 + $0xb8] sm:$0xff]
        %v536 = vld [vmem:[%s446 + $0xc0] sm:$0xff]
        %v537 = vld [vmem:[%s446 + $0xc8] sm:$0xff]
        %v538 = vld [vmem:[%s446 + $0xd0] sm:$0xff]
        %v539 = vld [vmem:[%s446 + $0xd8] sm:$0xff]
        %v540 = vld [vmem:[%s446 + $0xe0] sm:$0xff]
        %v541 = vld [vmem:[%s446 + $0xe8] sm:$0xff]
        %v542 = vld [vmem:[%s446 + $0xf0] sm:$0xff]
        %v543 = vld [vmem:[%s446 + $0xf8] sm:$0xff]
        %v544 = vld [vmem:[#allocation6] sm:$0xf]
        %v545 = vld [vmem:[#allocation6 + $0x4] sm:$0xf]
        %v546 = vld [vmem:[#allocation6 + $0x8] sm:$0xf]
        %v547 = vld [vmem:[#allocation6 + $0xc] sm:$0xf]
        %v548 = vld [vmem:[#allocation6 + $0x10] sm:$0xf]
        %v549 = vld [vmem:[#allocation6 + $0x14] sm:$0xf]
        %v550 = vld [vmem:[#allocation6 + $0x18] sm:$0xf]
        %v551 = vld [vmem:[#allocation6 + $0x1c] sm:$0xf]
        %v552 = vld [vmem:[#allocation6 + $0x20] sm:$0xf]
        %v553 = vld [vmem:[#allocation6 + $0x24] sm:$0xf]
        %v554 = vld [vmem:[#allocation6 + $0x28] sm:$0xf]
        %v555 = vld [vmem:[#allocation6 + $0x2c] sm:$0xf]
        %v556 = vld [vmem:[#allocation6 + $0x30] sm:$0xf]
        %v557 = vld [vmem:[#allocation6 + $0x34] sm:$0xf]
        %v558 = vld [vmem:[#allocation6 + $0x38] sm:$0xf]
        %v559 = vld [vmem:[#allocation6 + $0x3c] sm:$0xf]
        %v560 = vld [vmem:[#allocation6 + $0x40] sm:$0xf]
        %v561 = vld [vmem:[#allocation6 + $0x44] sm:$0xf]
        %v562 = vld [vmem:[#allocation6 + $0x48] sm:$0xf]
        %v563 = vld [vmem:[#allocation6 + $0x4c] sm:$0xf]
        %v564 = vld [vmem:[#allocation6 + $0x50] sm:$0xf]
        %v565 = vld [vmem:[#allocation6 + $0x54] sm:$0xf]
        %v566 = vld [vmem:[#allocation6 + $0x58] sm:$0xf]
        %v567 = vld [vmem:[#allocation6 + $0x5c] sm:$0xf]
        %v568 = vld [vmem:[#allocation6 + $0x60] sm:$0xf]
        %v569 = vld [vmem:[#allocation6 + $0x64] sm:$0xf]
        %v570 = vld [vmem:[#allocation6 + $0x68] sm:$0xf]
        %v571 = vld [vmem:[#allocation6 + $0x6c] sm:$0xf]
        %v572 = vld [vmem:[#allocation6 + $0x70] sm:$0xf]
        %v573 = vld [vmem:[#allocation6 + $0x74] sm:$0xf]
        %v574 = vld [vmem:[#allocation6 + $0x78] sm:$0xf]
        %v575 = vld [vmem:[#allocation6 + $0x7c] sm:$0xf]
        %v576 = vld [vmem:[#allocation6 + $0x80] sm:$0xf]
        %v577 = vld [vmem:[#allocation6 + $0x84] sm:$0xf]
        %v578 = vld [vmem:[#allocation6 + $0x88] sm:$0xf]
        %v579 = vld [vmem:[#allocation6 + $0x8c] sm:$0xf]
        %v580 = vld [vmem:[#allocation6 + $0x90] sm:$0xf]
        %v581 = vld [vmem:[#allocation6 + $0x94] sm:$0xf]
        %v582 = vld [vmem:[#allocation6 + $0x98] sm:$0xf]
        %v583 = vld [vmem:[#allocation6 + $0x9c] sm:$0xf]
        %v584 = vld [vmem:[#allocation6 + $0xa0] sm:$0xf]
        %v585 = vld [vmem:[#allocation6 + $0xa4] sm:$0xf]
        %v586 = vld [vmem:[#allocation6 + $0xa8] sm:$0xf]
        %v587 = vld [vmem:[#allocation6 + $0xac] sm:$0xf]
        %v588 = vld [vmem:[#allocation6 + $0xb0] sm:$0xf]
        %v589 = vld [vmem:[#allocation6 + $0xb4] sm:$0xf]
        %v590 = vld [vmem:[#allocation6 + $0xb8] sm:$0xf]
        %v591 = vld [vmem:[#allocation6 + $0xbc] sm:$0xf]
        %v592 = vld [vmem:[#allocation6 + $0xc0] sm:$0xf]
        %v593 = vld [vmem:[#allocation6 + $0xc4] sm:$0xf]
        %v594 = vld [vmem:[#allocation6 + $0xc8] sm:$0xf]
        %v595 = vld [vmem:[#allocation6 + $0xcc] sm:$0xf]
        %v596 = vld [vmem:[#allocation6 + $0xd0] sm:$0xf]
        %v597 = vld [vmem:[#allocation6 + $0xd4] sm:$0xf]
        %v598 = vld [vmem:[#allocation6 + $0xd8] sm:$0xf]
        %v599 = vld [vmem:[#allocation6 + $0xdc] sm:$0xf]
        %v600 = vld [vmem:[#allocation6 + $0xe0] sm:$0xf]
        %v601 = vld [vmem:[#allocation6 + $0xe4] sm:$0xf]
        %v602 = vld [vmem:[#allocation6 + $0xe8] sm:$0xf]
        %v603 = vld [vmem:[#allocation6 + $0xec] sm:$0xf]
        %v604 = vld [vmem:[#allocation6 + $0xf0] sm:$0xf]
        %v605 = vld [vmem:[#allocation6 + $0xf4] sm:$0xf]
        %v606 = vld [vmem:[#allocation6 + $0xf8] sm:$0xf]
        %v607 = vld [vmem:[#allocation6 + $0xfc] sm:$0xf]
        %v608 = vld [vmem:[%s3] sm:$0x1]
        %v610 = vlaneseq
        %v611 = vshrl.u32 %v610, 7
        %v612 = vsub.s32 0, %v611
        %v613 = vrot.slane %v608, %v612
        %v647 = vunpack.c.l.b16 %v512
        %v648 = vunpack.c.h.b16 %v512
        %v649 = vunpack.c.l.b16 %v513
        %v650 = vunpack.c.h.b16 %v513
        %v651 = vunpack.c.l.b16 %v514
        %v652 = vunpack.c.h.b16 %v514
        %v653 = vunpack.c.l.b16 %v515
        %v654 = vunpack.c.h.b16 %v515
        %v655 = vunpack.c.l.b16 %v516
        %v656 = vunpack.c.h.b16 %v516
        %v657 = vunpack.c.l.b16 %v517
        %v658 = vunpack.c.h.b16 %v517
        %v659 = vunpack.c.l.b16 %v518
        %v660 = vunpack.c.h.b16 %v518
        %v661 = vunpack.c.l.b16 %v519
        %v662 = vunpack.c.h.b16 %v519
        %v663 = vunpack.c.l.b16 %v520
        %v664 = vunpack.c.h.b16 %v520
        %v665 = vunpack.c.l.b16 %v521
        %v666 = vunpack.c.h.b16 %v521
        %v667 = vunpack.c.l.b16 %v522
        %v668 = vunpack.c.h.b16 %v522
        %v669 = vunpack.c.l.b16 %v523
        %v670 = vunpack.c.h.b16 %v523
        %v671 = vunpack.c.l.b16 %v524
        %v672 = vunpack.c.h.b16 %v524
        %v673 = vunpack.c.l.b16 %v525
        %v674 = vunpack.c.h.b16 %v525
        %v675 = vunpack.c.l.b16 %v526
        %v676 = vunpack.c.h.b16 %v526
        %v677 = vunpack.c.l.b16 %v527
        %v678 = vunpack.c.h.b16 %v527
        %v679 = vunpack.c.l.b16 %v528
        %v680 = vunpack.c.h.b16 %v528
        %v681 = vunpack.c.l.b16 %v529
        %v682 = vunpack.c.h.b16 %v529
        %v683 = vunpack.c.l.b16 %v530
        %v684 = vunpack.c.h.b16 %v530
        %v685 = vunpack.c.l.b16 %v531
        %v686 = vunpack.c.h.b16 %v531
        %v687 = vunpack.c.l.b16 %v532
        %v688 = vunpack.c.h.b16 %v532
        %v689 = vunpack.c.l.b16 %v533
        %v690 = vunpack.c.h.b16 %v533
        %v691 = vunpack.c.l.b16 %v534
        %v692 = vunpack.c.h.b16 %v534
        %v693 = vunpack.c.l.b16 %v535
        %v694 = vunpack.c.h.b16 %v535
        %v695 = vunpack.c.l.b16 %v536
        %v696 = vunpack.c.h.b16 %v536
        %v697 = vunpack.c.l.b16 %v537
        %v698 = vunpack.c.h.b16 %v537
        %v699 = vunpack.c.l.b16 %v538
        %v700 = vunpack.c.h.b16 %v538
        %v701 = vunpack.c.l.b16 %v539
        %v702 = vunpack.c.h.b16 %v539
        %v703 = vunpack.c.l.b16 %v540
        %v704 = vunpack.c.h.b16 %v540
        %v705 = vunpack.c.l.b16 %v541
        %v706 = vunpack.c.h.b16 %v541
        %v707 = vunpack.c.l.b16 %v542
        %v708 = vunpack.c.h.b16 %v542
        %v709 = vunpack.c.l.b16 %v543
        %v710 = vunpack.c.h.b16 %v543
        %v711 = vpack.c.b16 %v651, %v647
        %v712 = vpack.c.b16 %v652, %v648
        %v713 = vpack.c.b16 %v653, %v649
        %v714 = vpack.c.b16 %v654, %v650
        %v715 = vpack.c.b16 %v659, %v655
        %v716 = vpack.c.b16 %v660, %v656
        %v717 = vpack.c.b16 %v661, %v657
        %v718 = vpack.c.b16 %v662, %v658
        %v719 = vpack.c.b16 %v667, %v663
        %v720 = vpack.c.b16 %v668, %v664
        %v721 = vpack.c.b16 %v669, %v665
        %v722 = vpack.c.b16 %v670, %v666
        %v723 = vpack.c.b16 %v675, %v671
        %v724 = vpack.c.b16 %v676, %v672
        %v725 = vpack.c.b16 %v677, %v673
        %v726 = vpack.c.b16 %v678, %v674
        %v727 = vpack.c.b16 %v683, %v679
        %v728 = vpack.c.b16 %v684, %v680
        %v729 = vpack.c.b16 %v685, %v681
        %v730 = vpack.c.b16 %v686, %v682
        %v731 = vpack.c.b16 %v691, %v687
        %v732 = vpack.c.b16 %v692, %v688
        %v733 = vpack.c.b16 %v693, %v689
        %v734 = vpack.c.b16 %v694, %v690
        %v735 = vpack.c.b16 %v699, %v695
        %v736 = vpack.c.b16 %v700, %v696
        %v737 = vpack.c.b16 %v701, %v697
        %v738 = vpack.c.b16 %v702, %v698
        %v739 = vpack.c.b16 %v707, %v703
        %v740 = vpack.c.b16 %v708, %v704
        %v741 = vpack.c.b16 %v709, %v705
        %v742 = vpack.c.b16 %v710, %v706
        %v839 = vunpack.c.l.b16 %v544
        %v840 = vunpack.c.l.b16 %v545
        %v841 = vunpack.c.l.b16 %v546
        %v842 = vunpack.c.l.b16 %v547
        %v843 = vunpack.c.l.b16 %v548
        %v844 = vunpack.c.l.b16 %v549
        %v845 = vunpack.c.l.b16 %v550
        %v846 = vunpack.c.l.b16 %v551
        %v847 = vunpack.c.l.b16 %v552
        %v848 = vunpack.c.l.b16 %v553
        %v849 = vunpack.c.l.b16 %v554
        %v850 = vunpack.c.l.b16 %v555
        %v851 = vunpack.c.l.b16 %v556
        %v852 = vunpack.c.l.b16 %v557
        %v853 = vunpack.c.l.b16 %v558
        %v854 = vunpack.c.l.b16 %v559
        %v855 = vunpack.c.l.b16 %v560
        %v856 = vunpack.c.l.b16 %v561
        %v857 = vunpack.c.l.b16 %v562
        %v858 = vunpack.c.l.b16 %v563
        %v859 = vunpack.c.l.b16 %v564
        %v860 = vunpack.c.l.b16 %v565
        %v861 = vunpack.c.l.b16 %v566
        %v862 = vunpack.c.l.b16 %v567
        %v863 = vunpack.c.l.b16 %v568
        %v864 = vunpack.c.l.b16 %v569
        %v865 = vunpack.c.l.b16 %v570
        %v866 = vunpack.c.l.b16 %v571
        %v867 = vunpack.c.l.b16 %v572
        %v868 = vunpack.c.l.b16 %v573
        %v869 = vunpack.c.l.b16 %v574
        %v870 = vunpack.c.l.b16 %v575
        %v871 = vunpack.c.l.b16 %v576
        %v872 = vunpack.c.l.b16 %v577
        %v873 = vunpack.c.l.b16 %v578
        %v874 = vunpack.c.l.b16 %v579
        %v875 = vunpack.c.l.b16 %v580
        %v876 = vunpack.c.l.b16 %v581
        %v877 = vunpack.c.l.b16 %v582
        %v878 = vunpack.c.l.b16 %v583
        %v879 = vunpack.c.l.b16 %v584
        %v880 = vunpack.c.l.b16 %v585
        %v881 = vunpack.c.l.b16 %v586
        %v882 = vunpack.c.l.b16 %v587
        %v883 = vunpack.c.l.b16 %v588
        %v884 = vunpack.c.l.b16 %v589
        %v885 = vunpack.c.l.b16 %v590
        %v886 = vunpack.c.l.b16 %v591
        %v887 = vunpack.c.l.b16 %v592
        %v888 = vunpack.c.l.b16 %v593
        %v889 = vunpack.c.l.b16 %v594
        %v890 = vunpack.c.l.b16 %v595
        %v891 = vunpack.c.l.b16 %v596
        %v892 = vunpack.c.l.b16 %v597
        %v893 = vunpack.c.l.b16 %v598
        %v894 = vunpack.c.l.b16 %v599
        %v895 = vunpack.c.l.b16 %v600
        %v896 = vunpack.c.l.b16 %v601
        %v897 = vunpack.c.l.b16 %v602
        %v898 = vunpack.c.l.b16 %v603
        %v899 = vunpack.c.l.b16 %v604
        %v900 = vunpack.c.l.b16 %v605
        %v901 = vunpack.c.l.b16 %v606
        %v902 = vunpack.c.l.b16 %v607
        %v903 = vpack.c.b16 %v840, %v839
        %v904 = vpack.c.b16 %v842, %v841
        %v905 = vpack.c.b16 %v844, %v843
        %v906 = vpack.c.b16 %v846, %v845
        %v907 = vpack.c.b16 %v848, %v847
        %v908 = vpack.c.b16 %v850, %v849
        %v909 = vpack.c.b16 %v852, %v851
        %v910 = vpack.c.b16 %v854, %v853
        %v911 = vpack.c.b16 %v856, %v855
        %v912 = vpack.c.b16 %v858, %v857
        %v913 = vpack.c.b16 %v860, %v859
        %v914 = vpack.c.b16 %v862, %v861
        %v915 = vpack.c.b16 %v864, %v863
        %v916 = vpack.c.b16 %v866, %v865
        %v917 = vpack.c.b16 %v868, %v867
        %v918 = vpack.c.b16 %v870, %v869
        %v919 = vpack.c.b16 %v872, %v871
        %v920 = vpack.c.b16 %v874, %v873
        %v921 = vpack.c.b16 %v876, %v875
        %v922 = vpack.c.b16 %v878, %v877
        %v923 = vpack.c.b16 %v880, %v879
        %v924 = vpack.c.b16 %v882, %v881
        %v925 = vpack.c.b16 %v884, %v883
        %v926 = vpack.c.b16 %v886, %v885
        %v927 = vpack.c.b16 %v888, %v887
        %v928 = vpack.c.b16 %v890, %v889
        %v929 = vpack.c.b16 %v892, %v891
        %v930 = vpack.c.b16 %v894, %v893
        %v931 = vpack.c.b16 %v896, %v895
        %v932 = vpack.c.b16 %v898, %v897
        %v933 = vpack.c.b16 %v900, %v899
        %v934 = vpack.c.b16 %v902, %v901
        %967 = vmatprep.subr.bf16.mxu0 0
        %968 = vmatpush1.bf16.msra.mxu0 %v910
        %969 = vmatprep.subr.bf16.mxu0 0
        %970 = vmatpush1.bf16.msra.mxu0 %v909
        %971 = vmatprep.subr.bf16.mxu0 0
        %972 = vmatpush1.bf16.msra.mxu0 %v908
        %973 = vmatprep.subr.bf16.mxu0 0
        %974 = vmatpush1.bf16.msra.mxu0 %v907
        %975 = vmatprep.subr.bf16.mxu0 0
        %976 = vmatpush1.bf16.msra.mxu0 %v906
        %977 = vmatprep.subr.bf16.mxu0 0
        %978 = vmatpush1.bf16.msra.mxu0 %v905
        %979 = vmatprep.subr.bf16.mxu0 0
        %980 = vmatpush1.bf16.msra.mxu0 %v904
        %981 = vmatprep.subr.bf16.mxu0 0
        %982 = vmatpush1.bf16.msra.mxu0 %v903
        %983 = vmatprep.subr.bf16.mxu0 0
        %984 = vmatpush2.bf16.msra.mxu0 %v918
        %985 = vmatprep.subr.bf16.mxu0 0
        %986 = vmatpush2.bf16.msra.mxu0 %v917
        %987 = vmatprep.subr.bf16.mxu0 0
        %988 = vmatpush2.bf16.msra.mxu0 %v916
        %989 = vmatprep.subr.bf16.mxu0 0
        %990 = vmatpush2.bf16.msra.mxu0 %v915
        %991 = vmatprep.subr.bf16.mxu0 0
        %992 = vmatpush2.bf16.msra.mxu0 %v914
        %993 = vmatprep.subr.bf16.mxu0 0
        %994 = vmatpush2.bf16.msra.mxu0 %v913
        %995 = vmatprep.subr.bf16.mxu0 0
        %996 = vmatpush2.bf16.msra.mxu0 %v912
        %997 = vmatprep.subr.bf16.mxu0 0
        %998 = vmatpush2.bf16.msra.mxu0 %v911
        %999 = vmatprep.mubr.bf16.mxu0 %v712
        %1000 = vmatmul.mubr.bf16.gmra.mxu0 %v711
        %v1001 = vpop.f32.mrf.mxu0
        %v1002 = vadd.f32 %v613, %v1001
        %v1003 = vpop.f32.mrf.mxu0
        %v1004 = vpop.f32.mrf.mxu0
        %v1005 = vadd.f32 %v613, %v1004
        %v1006 = vpop.f32.mrf.mxu0
        %1007 = vmatprep.mubr.bf16.mxu0 %v716
        %1008 = vmatmul.mubr.bf16.gmra.mxu0 %v715
        %v1009 = vpop.f32.mrf.mxu0
        %v1010 = vadd.f32 %v613, %v1009
        %v1011 = vpop.f32.mrf.mxu0
        %v1012 = vpop.f32.mrf.mxu0
        %v1013 = vadd.f32 %v613, %v1012
        %v1014 = vpop.f32.mrf.mxu0
        %1015 = vmatprep.mubr.bf16.mxu0 %v720
        %1016 = vmatmul.mubr.bf16.gmra.mxu0 %v719
        %v1017 = vpop.f32.mrf.mxu0
        %v1018 = vadd.f32 %v613, %v1017
        %v1019 = vpop.f32.mrf.mxu0
        %v1020 = vpop.f32.mrf.mxu0
        %v1021 = vadd.f32 %v613, %v1020
        %v1022 = vpop.f32.mrf.mxu0
        %1023 = vmatprep.mubr.bf16.mxu0 %v724
        %1024 = vmatmul.mubr.bf16.gmra.mxu0 %v723
        %v1025 = vpop.f32.mrf.mxu0
        %v1026 = vadd.f32 %v613, %v1025
        %v1027 = vpop.f32.mrf.mxu0
        %v1028 = vpop.f32.mrf.mxu0
        %v1029 = vadd.f32 %v613, %v1028
        %v1030 = vpop.f32.mrf.mxu0
        %1031 = vmatprep.mubr.bf16.mxu0 %v728
        %1032 = vmatmul.mubr.bf16.gmra.mxu0 %v727
        %v1033 = vpop.f32.mrf.mxu0
        %v1034 = vadd.f32 %v613, %v1033
        %v1035 = vpop.f32.mrf.mxu0
        %v1036 = vpop.f32.mrf.mxu0
        %v1037 = vadd.f32 %v613, %v1036
        %v1038 = vpop.f32.mrf.mxu0
        %1039 = vmatprep.mubr.bf16.mxu0 %v732
        %1040 = vmatmul.mubr.bf16.gmra.mxu0 %v731
        %v1041 = vpop.f32.mrf.mxu0
        %v1042 = vadd.f32 %v613, %v1041
        %v1043 = vpop.f32.mrf.mxu0
        %v1044 = vpop.f32.mrf.mxu0
        %v1045 = vadd.f32 %v613, %v1044
        %v1046 = vpop.f32.mrf.mxu0
        %1047 = vmatprep.mubr.bf16.mxu0 %v736
        %1048 = vmatmul.mubr.bf16.gmra.mxu0 %v735
        %v1049 = vpop.f32.mrf.mxu0
        %v1050 = vadd.f32 %v613, %v1049
        %v1051 = vpop.f32.mrf.mxu0
        %v1052 = vpop.f32.mrf.mxu0
        %v1053 = vadd.f32 %v613, %v1052
        %v1054 = vpop.f32.mrf.mxu0
        %1055 = vmatprep.mubr.bf16.mxu0 %v740
        %1056 = vmatmul.mubr.bf16.gmra.mxu0 %v739
        %v1057 = vpop.f32.mrf.mxu0
        %v1058 = vadd.f32 %v613, %v1057
        %v1059 = vpop.f32.mrf.mxu0
        %v1060 = vpop.f32.mrf.mxu0
        %v1061 = vadd.f32 %v613, %v1060
        %v1062 = vpop.f32.mrf.mxu0
        %1063 = vdwg.mxu0
        %1064 = vmatprep.subr.bf16.mxu0 0
        %1065 = vmatpush1.bf16.msra.mxu0 %v926
        %1066 = vmatprep.subr.bf16.mxu0 0
        %1067 = vmatpush1.bf16.msra.mxu0 %v925
        %1068 = vmatprep.subr.bf16.mxu0 0
        %1069 = vmatpush1.bf16.msra.mxu0 %v924
        %1070 = vmatprep.subr.bf16.mxu0 0
        %1071 = vmatpush1.bf16.msra.mxu0 %v923
        %1072 = vmatprep.subr.bf16.mxu0 0
        %1073 = vmatpush1.bf16.msra.mxu0 %v922
        %1074 = vmatprep.subr.bf16.mxu0 0
        %1075 = vmatpush1.bf16.msra.mxu0 %v921
        %1076 = vmatprep.subr.bf16.mxu0 0
        %1077 = vmatpush1.bf16.msra.mxu0 %v920
        %1078 = vmatprep.subr.bf16.mxu0 0
        %1079 = vmatpush1.bf16.msra.mxu0 %v919
        %1080 = vmatprep.subr.bf16.mxu0 0
        %1081 = vmatpush2.bf16.msra.mxu0 %v934
        %1082 = vmatprep.subr.bf16.mxu0 0
        %1083 = vmatpush2.bf16.msra.mxu0 %v933
        %1084 = vmatprep.subr.bf16.mxu0 0
        %1085 = vmatpush2.bf16.msra.mxu0 %v932
        %1086 = vmatprep.subr.bf16.mxu0 0
        %1087 = vmatpush2.bf16.msra.mxu0 %v931
        %1088 = vmatprep.subr.bf16.mxu0 0
        %1089 = vmatpush2.bf16.msra.mxu0 %v930
        %1090 = vmatprep.subr.bf16.mxu0 0
        %1091 = vmatpush2.bf16.msra.mxu0 %v929
        %1092 = vmatprep.subr.bf16.mxu0 0
        %1093 = vmatpush2.bf16.msra.mxu0 %v928
        %1094 = vmatprep.subr.bf16.mxu0 0
        %1095 = vmatpush2.bf16.msra.mxu0 %v927
        %1096 = vmatprep.mubr.bf16.mxu0 %v714
        %1097 = vmatmul.mubr.bf16.gmra.mxu0 %v713
        %v1098 = vpop.f32.mrf.mxu0
        %v1099 = vadd.f32 %v1002, %v1098
        %v1100 = vpop.f32.mrf.mxu0
        %v1101 = vpop.f32.mrf.mxu0
        %v1102 = vadd.f32 %v1005, %v1101
        %v1103 = vpop.f32.mrf.mxu0
        %1104 = vmatprep.mubr.bf16.mxu0 %v718
        %1105 = vmatmul.mubr.bf16.gmra.mxu0 %v717
        %v1106 = vpop.f32.mrf.mxu0
        %v1107 = vadd.f32 %v1010, %v1106
        %v1108 = vpop.f32.mrf.mxu0
        %v1109 = vpop.f32.mrf.mxu0
        %v1110 = vadd.f32 %v1013, %v1109
        %v1111 = vpop.f32.mrf.mxu0
        %1112 = vmatprep.mubr.bf16.mxu0 %v722
        %1113 = vmatmul.mubr.bf16.gmra.mxu0 %v721
        %v1114 = vpop.f32.mrf.mxu0
        %v1115 = vadd.f32 %v1018, %v1114
        %v1116 = vpop.f32.mrf.mxu0
        %v1117 = vpop.f32.mrf.mxu0
        %v1118 = vadd.f32 %v1021, %v1117
        %v1119 = vpop.f32.mrf.mxu0
        %1120 = vmatprep.mubr.bf16.mxu0 %v726
        %1121 = vmatmul.mubr.bf16.gmra.mxu0 %v725
        %v1122 = vpop.f32.mrf.mxu0
        %v1123 = vadd.f32 %v1026, %v1122
        %v1124 = vpop.f32.mrf.mxu0
        %v1125 = vpop.f32.mrf.mxu0
        %v1126 = vadd.f32 %v1029, %v1125
        %v1127 = vpop.f32.mrf.mxu0
        %1128 = vmatprep.mubr.bf16.mxu0 %v730
        %1129 = vmatmul.mubr.bf16.gmra.mxu0 %v729
        %v1130 = vpop.f32.mrf.mxu0
        %v1131 = vadd.f32 %v1034, %v1130
        %v1132 = vpop.f32.mrf.mxu0
        %v1133 = vpop.f32.mrf.mxu0
        %v1134 = vadd.f32 %v1037, %v1133
        %v1135 = vpop.f32.mrf.mxu0
        %1136 = vmatprep.mubr.bf16.mxu0 %v734
        %1137 = vmatmul.mubr.bf16.gmra.mxu0 %v733
        %v1138 = vpop.f32.mrf.mxu0
        %v1139 = vadd.f32 %v1042, %v1138
        %v1140 = vpop.f32.mrf.mxu0
        %v1141 = vpop.f32.mrf.mxu0
        %v1142 = vadd.f32 %v1045, %v1141
        %v1143 = vpop.f32.mrf.mxu0
        %1144 = vmatprep.mubr.bf16.mxu0 %v738
        %1145 = vmatmul.mubr.bf16.gmra.mxu0 %v737
        %v1146 = vpop.f32.mrf.mxu0
        %v1147 = vadd.f32 %v1050, %v1146
        %v1148 = vpop.f32.mrf.mxu0
        %v1149 = vpop.f32.mrf.mxu0
        %v1150 = vadd.f32 %v1053, %v1149
        %v1151 = vpop.f32.mrf.mxu0
        %1152 = vmatprep.mubr.bf16.mxu0 %v742
        %1153 = vmatmul.mubr.bf16.gmra.mxu0 %v741
        %v1154 = vpop.f32.mrf.mxu0
        %v1155 = vadd.f32 %v1058, %v1154
        %v1156 = vpop.f32.mrf.mxu0
        %v1157 = vpop.f32.mrf.mxu0
        %v1158 = vadd.f32 %v1061, %v1157
        %v1159 = vpop.f32.mrf.mxu0
        %1160 = vdwg.mxu0
        %v1161 = vlaneseq
        %v1162 = vshrl.u32 %v1161, 7
        %v1163 = vadd.s32 %v1162, 8
        %v1164 = vadd.s32 %v1162, 16
        %v1165 = vadd.s32 %v1162, 24
        %v1166 = vadd.s32 %v1162, 32
        %v1167 = vadd.s32 %v1162, 40
        %v1168 = vadd.s32 %v1162, 48
        %v1169 = vadd.s32 %v1162, 56
        %v1170 = vadd.s32 %v1162, 64
        %v1171 = vadd.s32 %v1162, 72
        %v1172 = vadd.s32 %v1162, 80
        %v1173 = vadd.s32 %v1162, 88
        %v1174 = vadd.s32 %v1162, 96
        %v1175 = vadd.s32 %v1162, 104
        %v1176 = vadd.s32 %v1162, 112
        %v1177 = vadd.s32 %v1162, 120
        %v1178 = vstv %s511
        %v1179 = vadd.s32 %v1162, %v1178
        %v1180 = vadd.s32 %v1163, %v1178
        %v1181 = vadd.s32 %v1164, %v1178
        %v1182 = vadd.s32 %v1165, %v1178
        %v1183 = vadd.s32 %v1166, %v1178
        %v1184 = vadd.s32 %v1167, %v1178
        %v1185 = vadd.s32 %v1168, %v1178
        %v1186 = vadd.s32 %v1169, %v1178
        %v1187 = vadd.s32 %v1170, %v1178
        %v1188 = vadd.s32 %v1171, %v1178
        %v1189 = vadd.s32 %v1172, %v1178
        %v1190 = vadd.s32 %v1173, %v1178
        %v1191 = vadd.s32 %v1174, %v1178
        %v1192 = vadd.s32 %v1175, %v1178
        %v1193 = vadd.s32 %v1176, %v1178
        %v1194 = vadd.s32 %v1177, %v1178
        %v1195 = vlaneseq
        %v1196 = vand.u32 %v1195, 127
        %v1197 = vmul.u32 %v1179, 16777619
        %v1198 = vmul.u32 %v1180, 16777619
        %v1199 = vmul.u32 %v1181, 16777619
        %v1200 = vmul.u32 %v1182, 16777619
        %v1201 = vmul.u32 %v1183, 16777619
        %v1202 = vmul.u32 %v1184, 16777619
        %v1203 = vmul.u32 %v1185, 16777619
        %v1204 = vmul.u32 %v1186, 16777619
        %v1205 = vmul.u32 %v1187, 16777619
        %v1206 = vmul.u32 %v1188, 16777619
        %v1207 = vmul.u32 %v1189, 16777619
        %v1208 = vmul.u32 %v1190, 16777619
        %v1209 = vmul.u32 %v1191, 16777619
        %v1210 = vmul.u32 %v1192, 16777619
        %v1211 = vmul.u32 %v1193, 16777619
        %v1212 = vmul.u32 %v1194, 16777619
        %v1213 = vmul.u32 %v1196, 1640531527
        %v1214 = vadd.s32 %v1197, %v1213
        %v1215 = vadd.s32 %v1198, %v1213
        %v1216 = vadd.s32 %v1199, %v1213
        %v1217 = vadd.s32 %v1200, %v1213
        %v1218 = vadd.s32 %v1201, %v1213
        %v1219 = vadd.s32 %v1202, %v1213
        %v1220 = vadd.s32 %v1203, %v1213
        %v1221 = vadd.s32 %v1204, %v1213
        %v1222 = vadd.s32 %v1205, %v1213
        %v1223 = vadd.s32 %v1206, %v1213
        %v1224 = vadd.s32 %v1207, %v1213
        %v1225 = vadd.s32 %v1208, %v1213
        %v1226 = vadd.s32 %v1209, %v1213
        %v1227 = vadd.s32 %v1210, %v1213
        %v1228 = vadd.s32 %v1211, %v1213
        %v1229 = vadd.s32 %v1212, %v1213
        %s1230 = smul.u32 %s510, 668265263
        %v1231 = vstv %s1230
        %v1232 = vadd.s32 %v1214, %v1231
        %v1233 = vadd.s32 %v1215, %v1231
        %v1234 = vadd.s32 %v1216, %v1231
        %v1235 = vadd.s32 %v1217, %v1231
        %v1236 = vadd.s32 %v1218, %v1231
        %v1237 = vadd.s32 %v1219, %v1231
        %v1238 = vadd.s32 %v1220, %v1231
        %v1239 = vadd.s32 %v1221, %v1231
        %v1240 = vadd.s32 %v1222, %v1231
        %v1241 = vadd.s32 %v1223, %v1231
        %v1242 = vadd.s32 %v1224, %v1231
        %v1243 = vadd.s32 %v1225, %v1231
        %v1244 = vadd.s32 %v1226, %v1231
        %v1245 = vadd.s32 %v1227, %v1231
        %v1246 = vadd.s32 %v1228, %v1231
        %v1247 = vadd.s32 %v1229, %v1231
        %v1248 = vadd.s32 %v1232, 165902235
        %v1249 = vadd.s32 %v1233, 165902235
        %v1250 = vadd.s32 %v1234, 165902235
        %v1251 = vadd.s32 %v1235, 165902235
        %v1252 = vadd.s32 %v1236, 165902235
        %v1253 = vadd.s32 %v1237, 165902235
        %v1254 = vadd.s32 %v1238, 165902235
        %v1255 = vadd.s32 %v1239, 165902235
        %v1256 = vadd.s32 %v1240, 165902235
        %v1257 = vadd.s32 %v1241, 165902235
        %v1258 = vadd.s32 %v1242, 165902235
        %v1259 = vadd.s32 %v1243, 165902235
        %v1260 = vadd.s32 %v1244, 165902235
        %v1261 = vadd.s32 %v1245, 165902235
        %v1262 = vadd.s32 %v1246, 165902235
        %v1263 = vadd.s32 %v1247, 165902235
        %v1264 = vshra.s32 %v1248, 15
        %v1265 = vshra.s32 %v1249, 15
        %v1266 = vshra.s32 %v1250, 15
        %v1267 = vshra.s32 %v1251, 15
        %v1268 = vshra.s32 %v1252, 15
        %v1269 = vshra.s32 %v1253, 15
        %v1270 = vshra.s32 %v1254, 15
        %v1271 = vshra.s32 %v1255, 15
        %v1272 = vshra.s32 %v1256, 15
        %v1273 = vshra.s32 %v1257, 15
        %v1274 = vshra.s32 %v1258, 15
        %v1275 = vshra.s32 %v1259, 15
        %v1276 = vshra.s32 %v1260, 15
        %v1277 = vshra.s32 %v1261, 15
        %v1278 = vshra.s32 %v1262, 15
        %v1279 = vshra.s32 %v1263, 15
        %v1280 = vxor.u32 %v1248, %v1264
        %v1281 = vxor.u32 %v1249, %v1265
        %v1282 = vxor.u32 %v1250, %v1266
        %v1283 = vxor.u32 %v1251, %v1267
        %v1284 = vxor.u32 %v1252, %v1268
        %v1285 = vxor.u32 %v1253, %v1269
        %v1286 = vxor.u32 %v1254, %v1270
        %v1287 = vxor.u32 %v1255, %v1271
        %v1288 = vxor.u32 %v1256, %v1272
        %v1289 = vxor.u32 %v1257, %v1273
        %v1290 = vxor.u32 %v1258, %v1274
        %v1291 = vxor.u32 %v1259, %v1275
        %v1292 = vxor.u32 %v1260, %v1276
        %v1293 = vxor.u32 %v1261, %v1277
        %v1294 = vxor.u32 %v1262, %v1278
        %v1295 = vxor.u32 %v1263, %v1279
        %v1296 = vmul.u32 %v1280, 2146121005
        %v1297 = vmul.u32 %v1281, 2146121005
        %v1298 = vmul.u32 %v1282, 2146121005
        %v1299 = vmul.u32 %v1283, 2146121005
        %v1300 = vmul.u32 %v1284, 2146121005
        %v1301 = vmul.u32 %v1285, 2146121005
        %v1302 = vmul.u32 %v1286, 2146121005
        %v1303 = vmul.u32 %v1287, 2146121005
        %v1304 = vmul.u32 %v1288, 2146121005
        %v1305 = vmul.u32 %v1289, 2146121005
        %v1306 = vmul.u32 %v1290, 2146121005
        %v1307 = vmul.u32 %v1291, 2146121005
        %v1308 = vmul.u32 %v1292, 2146121005
        %v1309 = vmul.u32 %v1293, 2146121005
        %v1310 = vmul.u32 %v1294, 2146121005
        %v1311 = vmul.u32 %v1295, 2146121005
        %v1312 = vshra.s32 %v1296, 13
        %v1313 = vshra.s32 %v1297, 13
        %v1314 = vshra.s32 %v1298, 13
        %v1315 = vshra.s32 %v1299, 13
        %v1316 = vshra.s32 %v1300, 13
        %v1317 = vshra.s32 %v1301, 13
        %v1318 = vshra.s32 %v1302, 13
        %v1319 = vshra.s32 %v1303, 13
        %v1320 = vshra.s32 %v1304, 13
        %v1321 = vshra.s32 %v1305, 13
        %v1322 = vshra.s32 %v1306, 13
        %v1323 = vshra.s32 %v1307, 13
        %v1324 = vshra.s32 %v1308, 13
        %v1325 = vshra.s32 %v1309, 13
        %v1326 = vshra.s32 %v1310, 13
        %v1327 = vshra.s32 %v1311, 13
        %v1328 = vxor.u32 %v1296, %v1312
        %v1329 = vxor.u32 %v1297, %v1313
        %v1330 = vxor.u32 %v1298, %v1314
        %v1331 = vxor.u32 %v1299, %v1315
        %v1332 = vxor.u32 %v1300, %v1316
        %v1333 = vxor.u32 %v1301, %v1317
        %v1334 = vxor.u32 %v1302, %v1318
        %v1335 = vxor.u32 %v1303, %v1319
        %v1336 = vxor.u32 %v1304, %v1320
        %v1337 = vxor.u32 %v1305, %v1321
        %v1338 = vxor.u32 %v1306, %v1322
        %v1339 = vxor.u32 %v1307, %v1323
        %v1340 = vxor.u32 %v1308, %v1324
        %v1341 = vxor.u32 %v1309, %v1325
        %v1342 = vxor.u32 %v1310, %v1326
        %v1343 = vxor.u32 %v1311, %v1327
        %v1344 = vmul.u32 %v1328, 1779033703
        %v1345 = vmul.u32 %v1329, 1779033703
        %v1346 = vmul.u32 %v1330, 1779033703
        %v1347 = vmul.u32 %v1331, 1779033703
        %v1348 = vmul.u32 %v1332, 1779033703
        %v1349 = vmul.u32 %v1333, 1779033703
        %v1350 = vmul.u32 %v1334, 1779033703
        %v1351 = vmul.u32 %v1335, 1779033703
        %v1352 = vmul.u32 %v1336, 1779033703
        %v1353 = vmul.u32 %v1337, 1779033703
        %v1354 = vmul.u32 %v1338, 1779033703
        %v1355 = vmul.u32 %v1339, 1779033703
        %v1356 = vmul.u32 %v1340, 1779033703
        %v1357 = vmul.u32 %v1341, 1779033703
        %v1358 = vmul.u32 %v1342, 1779033703
        %v1359 = vmul.u32 %v1343, 1779033703
        %v1360 = vshra.s32 %v1344, 16
        %v1361 = vshra.s32 %v1345, 16
        %v1362 = vshra.s32 %v1346, 16
        %v1363 = vshra.s32 %v1347, 16
        %v1364 = vshra.s32 %v1348, 16
        %v1365 = vshra.s32 %v1349, 16
        %v1366 = vshra.s32 %v1350, 16
        %v1367 = vshra.s32 %v1351, 16
        %v1368 = vshra.s32 %v1352, 16
        %v1369 = vshra.s32 %v1353, 16
        %v1370 = vshra.s32 %v1354, 16
        %v1371 = vshra.s32 %v1355, 16
        %v1372 = vshra.s32 %v1356, 16
        %v1373 = vshra.s32 %v1357, 16
        %v1374 = vshra.s32 %v1358, 16
        %v1375 = vshra.s32 %v1359, 16
        %v1376 = vxor.u32 %v1344, %v1360
        %v1377 = vxor.u32 %v1345, %v1361
        %v1378 = vxor.u32 %v1346, %v1362
        %v1379 = vxor.u32 %v1347, %v1363
        %v1380 = vxor.u32 %v1348, %v1364
        %v1381 = vxor.u32 %v1349, %v1365
        %v1382 = vxor.u32 %v1350, %v1366
        %v1383 = vxor.u32 %v1351, %v1367
        %v1384 = vxor.u32 %v1352, %v1368
        %v1385 = vxor.u32 %v1353, %v1369
        %v1386 = vxor.u32 %v1354, %v1370
        %v1387 = vxor.u32 %v1355, %v1371
        %v1388 = vxor.u32 %v1356, %v1372
        %v1389 = vxor.u32 %v1357, %v1373
        %v1390 = vxor.u32 %v1358, %v1374
        %v1391 = vxor.u32 %v1359, %v1375
        %v1392 = vshra.s32 %v1376, 8
        %v1393 = vshra.s32 %v1377, 8
        %v1394 = vshra.s32 %v1378, 8
        %v1395 = vshra.s32 %v1379, 8
        %v1396 = vshra.s32 %v1380, 8
        %v1397 = vshra.s32 %v1381, 8
        %v1398 = vshra.s32 %v1382, 8
        %v1399 = vshra.s32 %v1383, 8
        %v1400 = vshra.s32 %v1384, 8
        %v1401 = vshra.s32 %v1385, 8
        %v1402 = vshra.s32 %v1386, 8
        %v1403 = vshra.s32 %v1387, 8
        %v1404 = vshra.s32 %v1388, 8
        %v1405 = vshra.s32 %v1389, 8
        %v1406 = vshra.s32 %v1390, 8
        %v1407 = vshra.s32 %v1391, 8
        %v1408 = vand.u32 %v1392, 1
        %v1409 = vand.u32 %v1393, 1
        %v1410 = vand.u32 %v1394, 1
        %v1411 = vand.u32 %v1395, 1
        %v1412 = vand.u32 %v1396, 1
        %v1413 = vand.u32 %v1397, 1
        %v1414 = vand.u32 %v1398, 1
        %v1415 = vand.u32 %v1399, 1
        %v1416 = vand.u32 %v1400, 1
        %v1417 = vand.u32 %v1401, 1
        %v1418 = vand.u32 %v1402, 1
        %v1419 = vand.u32 %v1403, 1
        %v1420 = vand.u32 %v1404, 1
        %v1421 = vand.u32 %v1405, 1
        %v1422 = vand.u32 %v1406, 1
        %v1423 = vand.u32 %v1407, 1
        %vm1424 = vcmp.eq.s32.totalorder %v1408, 0
        %vm1425 = vcmp.eq.s32.totalorder %v1409, 0
        %vm1426 = vcmp.eq.s32.totalorder %v1410, 0
        %vm1427 = vcmp.eq.s32.totalorder %v1411, 0
        %vm1428 = vcmp.eq.s32.totalorder %v1412, 0
        %vm1429 = vcmp.eq.s32.totalorder %v1413, 0
        %vm1430 = vcmp.eq.s32.totalorder %v1414, 0
        %vm1431 = vcmp.eq.s32.totalorder %v1415, 0
        %vm1432 = vcmp.eq.s32.totalorder %v1416, 0
        %vm1433 = vcmp.eq.s32.totalorder %v1417, 0
        %vm1434 = vcmp.eq.s32.totalorder %v1418, 0
        %vm1435 = vcmp.eq.s32.totalorder %v1419, 0
        %vm1436 = vcmp.eq.s32.totalorder %v1420, 0
        %vm1437 = vcmp.eq.s32.totalorder %v1421, 0
        %vm1438 = vcmp.eq.s32.totalorder %v1422, 0
        %vm1439 = vcmp.eq.s32.totalorder %v1423, 0
        %v1440 = vmax.f32 %v1099, 0.0
        %v1441 = vmax.f32 %v1102, 0.0
        %v1442 = vmax.f32 %v1107, 0.0
        %v1443 = vmax.f32 %v1110, 0.0
        %v1444 = vmax.f32 %v1115, 0.0
        %v1445 = vmax.f32 %v1118, 0.0
        %v1446 = vmax.f32 %v1123, 0.0
        %v1447 = vmax.f32 %v1126, 0.0
        %v1448 = vmax.f32 %v1131, 0.0
        %v1449 = vmax.f32 %v1134, 0.0
        %v1450 = vmax.f32 %v1139, 0.0
        %v1451 = vmax.f32 %v1142, 0.0
        %v1452 = vmax.f32 %v1147, 0.0
        %v1453 = vmax.f32 %v1150, 0.0
        %v1454 = vmax.f32 %v1155, 0.0
        %v1455 = vmax.f32 %v1158, 0.0
        %v1456 = vsel %vm1424, %v1440, 0.0
        %v1457 = vsel %vm1425, %v1441, 0.0
        %v1458 = vsel %vm1426, %v1442, 0.0
        %v1459 = vsel %vm1427, %v1443, 0.0
        %v1460 = vsel %vm1428, %v1444, 0.0
        %v1461 = vsel %vm1429, %v1445, 0.0
        %v1462 = vsel %vm1430, %v1446, 0.0
        %v1463 = vsel %vm1431, %v1447, 0.0
        %v1464 = vsel %vm1432, %v1448, 0.0
        %v1465 = vsel %vm1433, %v1449, 0.0
        %v1466 = vsel %vm1434, %v1450, 0.0
        %v1467 = vsel %vm1435, %v1451, 0.0
        %v1468 = vsel %vm1436, %v1452, 0.0
        %v1469 = vsel %vm1437, %v1453, 0.0
        %v1470 = vsel %vm1438, %v1454, 0.0
        %v1471 = vsel %vm1439, %v1455, 0.0
        %v1472 = vpack.c.bf16 %v1457, %v1456
        %v1473 = vpack.c.bf16 %v1459, %v1458
        %v1474 = vpack.c.bf16 %v1461, %v1460
        %v1475 = vpack.c.bf16 %v1463, %v1462
        %v1476 = vpack.c.bf16 %v1465, %v1464
        %v1477 = vpack.c.bf16 %v1467, %v1466
        %v1478 = vpack.c.bf16 %v1469, %v1468
        %v1479 = vpack.c.bf16 %v1471, %v1470
        %v1480 = vld [vmem:[#allocation8] sm:$0xff]
        %v1481 = vld [vmem:[#allocation8 + $0x8] sm:$0xff]
        %v1482 = vld [vmem:[#allocation8 + $0x10] sm:$0xff]
        %v1483 = vld [vmem:[#allocation8 + $0x18] sm:$0xff]
        %v1484 = vld [vmem:[#allocation8 + $0x20] sm:$0xff]
        %v1485 = vld [vmem:[#allocation8 + $0x28] sm:$0xff]
        %v1486 = vld [vmem:[#allocation8 + $0x30] sm:$0xff]
        %v1487 = vld [vmem:[#allocation8 + $0x38] sm:$0xff]
        %v1488 = vld [vmem:[#allocation8 + $0x40] sm:$0xff]
        %v1489 = vld [vmem:[#allocation8 + $0x48] sm:$0xff]
        %v1490 = vld [vmem:[#allocation8 + $0x50] sm:$0xff]
        %v1491 = vld [vmem:[#allocation8 + $0x58] sm:$0xff]
        %v1492 = vld [vmem:[#allocation8 + $0x60] sm:$0xff]
        %v1493 = vld [vmem:[#allocation8 + $0x68] sm:$0xff]
        %v1494 = vld [vmem:[#allocation8 + $0x70] sm:$0xff]
        %v1495 = vld [vmem:[#allocation8 + $0x78] sm:$0xff]
        %v1496 = vld [vmem:[%s5] sm:$0x3]
        %v1498 = vlaneseq
        %v1499 = vshrl.u32 %v1498, 7
        %v1500 = vsub.s32 0, %v1499
        %v1501 = vrot.slane %v1496, %v1500
        %v1502 = vlaneseq
        %v1503 = vshrl.u32 %v1502, 7
        %v1504 = vsub.s32 1, %v1503
        %v1505 = vrot.slane %v1496, %v1504
        %v1524 = vunpack.c.l.b16 %v1480
        %v1525 = vunpack.c.h.b16 %v1480
        %v1526 = vunpack.c.l.b16 %v1481
        %v1527 = vunpack.c.h.b16 %v1481
        %v1528 = vunpack.c.l.b16 %v1482
        %v1529 = vunpack.c.h.b16 %v1482
        %v1530 = vunpack.c.l.b16 %v1483
        %v1531 = vunpack.c.h.b16 %v1483
        %v1532 = vunpack.c.l.b16 %v1484
        %v1533 = vunpack.c.h.b16 %v1484
        %v1534 = vunpack.c.l.b16 %v1485
        %v1535 = vunpack.c.h.b16 %v1485
        %v1536 = vunpack.c.l.b16 %v1486
        %v1537 = vunpack.c.h.b16 %v1486
        %v1538 = vunpack.c.l.b16 %v1487
        %v1539 = vunpack.c.h.b16 %v1487
        %v1540 = vunpack.c.l.b16 %v1488
        %v1541 = vunpack.c.h.b16 %v1488
        %v1542 = vunpack.c.l.b16 %v1489
        %v1543 = vunpack.c.h.b16 %v1489
        %v1544 = vunpack.c.l.b16 %v1490
        %v1545 = vunpack.c.h.b16 %v1490
        %v1546 = vunpack.c.l.b16 %v1491
        %v1547 = vunpack.c.h.b16 %v1491
        %v1548 = vunpack.c.l.b16 %v1492
        %v1549 = vunpack.c.h.b16 %v1492
        %v1550 = vunpack.c.l.b16 %v1493
        %v1551 = vunpack.c.h.b16 %v1493
        %v1552 = vunpack.c.l.b16 %v1494
        %v1553 = vunpack.c.h.b16 %v1494
        %v1554 = vunpack.c.l.b16 %v1495
        %v1555 = vunpack.c.h.b16 %v1495
        %v1556 = vpack.c.b16 %v1526, %v1524
        %v1557 = vpack.c.b16 %v1527, %v1525
        %v1558 = vpack.c.b16 %v1530, %v1528
        %v1559 = vpack.c.b16 %v1531, %v1529
        %v1560 = vpack.c.b16 %v1534, %v1532
        %v1561 = vpack.c.b16 %v1535, %v1533
        %v1562 = vpack.c.b16 %v1538, %v1536
        %v1563 = vpack.c.b16 %v1539, %v1537
        %v1564 = vpack.c.b16 %v1542, %v1540
        %v1565 = vpack.c.b16 %v1543, %v1541
        %v1566 = vpack.c.b16 %v1546, %v1544
        %v1567 = vpack.c.b16 %v1547, %v1545
        %v1568 = vpack.c.b16 %v1550, %v1548
        %v1569 = vpack.c.b16 %v1551, %v1549
        %v1570 = vpack.c.b16 %v1554, %v1552
        %v1571 = vpack.c.b16 %v1555, %v1553
        %1588 = vmatprep.subr.bf16.mxu0 %v1571
        %1589 = vmatpush1.bf16.msra.mxu0 %v1570
        %1590 = vmatprep.subr.bf16.mxu0 %v1569
        %1591 = vmatpush1.bf16.msra.mxu0 %v1568
        %1592 = vmatprep.subr.bf16.mxu0 %v1567
        %1593 = vmatpush1.bf16.msra.mxu0 %v1566
        %1594 = vmatprep.subr.bf16.mxu0 %v1565
        %1595 = vmatpush1.bf16.msra.mxu0 %v1564
        %1596 = vmatprep.subr.bf16.mxu0 %v1563
        %1597 = vmatpush1.bf16.msra.mxu0 %v1562
        %1598 = vmatprep.subr.bf16.mxu0 %v1561
        %1599 = vmatpush1.bf16.msra.mxu0 %v1560
        %1600 = vmatprep.subr.bf16.mxu0 %v1559
        %1601 = vmatpush1.bf16.msra.mxu0 %v1558
        %1602 = vmatprep.subr.bf16.mxu0 %v1557
        %1603 = vmatpush1.bf16.msra.mxu0 %v1556
        %1604 = vmatprep.subr.bf16.mxu0 0
        %1605 = vmatpush2.bf16.msra.mxu0 0
        %1606 = vmatprep.subr.bf16.mxu0 0
        %1607 = vmatpush2.bf16.msra.mxu0 0
        %1608 = vmatprep.subr.bf16.mxu0 0
        %1609 = vmatpush2.bf16.msra.mxu0 0
        %1610 = vmatprep.subr.bf16.mxu0 0
        %1611 = vmatpush2.bf16.msra.mxu0 0
        %1612 = vmatprep.subr.bf16.mxu0 0
        %1613 = vmatpush2.bf16.msra.mxu0 0
        %1614 = vmatprep.subr.bf16.mxu0 0
        %1615 = vmatpush2.bf16.msra.mxu0 0
        %1616 = vmatprep.subr.bf16.mxu0 0
        %1617 = vmatpush2.bf16.msra.mxu0 0
        %1618 = vmatprep.subr.bf16.mxu0 0
        %1619 = vmatpush2.bf16.msra.mxu0 0
        %1620 = vmatprep.mubr.bf16.mxu0 0
        %1621 = vmatmul.mubr.bf16.gmra.mxu0 %v1472
        %v1622 = vpop.f32.mrf.mxu0
        %v1623 = vadd.f32 %v1501, %v1622
        %v1624 = vpop.f32.mrf.mxu0
        %v1625 = vadd.f32 %v1505, %v1624
        %v1626 = vpop.f32.mrf.mxu0
        %v1627 = vadd.f32 %v1501, %v1626
        %v1628 = vpop.f32.mrf.mxu0
        %v1629 = vadd.f32 %v1505, %v1628
        %1630 = vmatprep.mubr.bf16.mxu0 0
        %1631 = vmatmul.mubr.bf16.gmra.mxu0 %v1473
        %v1632 = vpop.f32.mrf.mxu0
        %v1633 = vadd.f32 %v1501, %v1632
        %v1634 = vpop.f32.mrf.mxu0
        %v1635 = vadd.f32 %v1505, %v1634
        %v1636 = vpop.f32.mrf.mxu0
        %v1637 = vadd.f32 %v1501, %v1636
        %v1638 = vpop.f32.mrf.mxu0
        %v1639 = vadd.f32 %v1505, %v1638
        %1640 = vmatprep.mubr.bf16.mxu0 0
        %1641 = vmatmul.mubr.bf16.gmra.mxu0 %v1474
        %v1642 = vpop.f32.mrf.mxu0
        %v1643 = vadd.f32 %v1501, %v1642
        %v1644 = vpop.f32.mrf.mxu0
        %v1645 = vadd.f32 %v1505, %v1644
        %v1646 = vpop.f32.mrf.mxu0
        %v1647 = vadd.f32 %v1501, %v1646
        %v1648 = vpop.f32.mrf.mxu0
        %v1649 = vadd.f32 %v1505, %v1648
        %1650 = vmatprep.mubr.bf16.mxu0 0
        %1651 = vmatmul.mubr.bf16.gmra.mxu0 %v1475
        %v1652 = vpop.f32.mrf.mxu0
        %v1653 = vadd.f32 %v1501, %v1652
        %v1654 = vpop.f32.mrf.mxu0
        %v1655 = vadd.f32 %v1505, %v1654
        %v1656 = vpop.f32.mrf.mxu0
        %v1657 = vadd.f32 %v1501, %v1656
        %v1658 = vpop.f32.mrf.mxu0
        %v1659 = vadd.f32 %v1505, %v1658
        %1660 = vmatprep.mubr.bf16.mxu0 0
        %1661 = vmatmul.mubr.bf16.gmra.mxu0 %v1476
        %v1662 = vpop.f32.mrf.mxu0
        %v1663 = vadd.f32 %v1501, %v1662
        %v1664 = vpop.f32.mrf.mxu0
        %v1665 = vadd.f32 %v1505, %v1664
        %v1666 = vpop.f32.mrf.mxu0
        %v1667 = vadd.f32 %v1501, %v1666
        %v1668 = vpop.f32.mrf.mxu0
        %v1669 = vadd.f32 %v1505, %v1668
        %1670 = vmatprep.mubr.bf16.mxu0 0
        %1671 = vmatmul.mubr.bf16.gmra.mxu0 %v1477
        %v1672 = vpop.f32.mrf.mxu0
        %v1673 = vadd.f32 %v1501, %v1672
        %v1674 = vpop.f32.mrf.mxu0
        %v1675 = vadd.f32 %v1505, %v1674
        %v1676 = vpop.f32.mrf.mxu0
        %v1677 = vadd.f32 %v1501, %v1676
        %v1678 = vpop.f32.mrf.mxu0
        %v1679 = vadd.f32 %v1505, %v1678
        %1680 = vmatprep.mubr.bf16.mxu0 0
        %1681 = vmatmul.mubr.bf16.gmra.mxu0 %v1478
        %v1682 = vpop.f32.mrf.mxu0
        %v1683 = vadd.f32 %v1501, %v1682
        %v1684 = vpop.f32.mrf.mxu0
        %v1685 = vadd.f32 %v1505, %v1684
        %v1686 = vpop.f32.mrf.mxu0
        %v1687 = vadd.f32 %v1501, %v1686
        %v1688 = vpop.f32.mrf.mxu0
        %v1689 = vadd.f32 %v1505, %v1688
        %1690 = vmatprep.mubr.bf16.mxu0 0
        %1691 = vmatmul.mubr.bf16.gmra.mxu0 %v1479
        %v1692 = vpop.f32.mrf.mxu0
        %v1693 = vadd.f32 %v1501, %v1692
        %v1694 = vpop.f32.mrf.mxu0
        %v1695 = vadd.f32 %v1505, %v1694
        %v1696 = vpop.f32.mrf.mxu0
        %v1697 = vadd.f32 %v1501, %v1696
        %v1698 = vpop.f32.mrf.mxu0
        %v1699 = vadd.f32 %v1505, %v1698
        %1700 = vdwg.mxu0
        %v1701 = vadd.s32 %v1196, 128
        %v1702 = vmul.u32 %v1701, 1640531527
        %v1703 = vadd.s32 %v1197, %v1702
        %v1704 = vadd.s32 %v1198, %v1702
        %v1705 = vadd.s32 %v1199, %v1702
        %v1706 = vadd.s32 %v1200, %v1702
        %v1707 = vadd.s32 %v1201, %v1702
        %v1708 = vadd.s32 %v1202, %v1702
        %v1709 = vadd.s32 %v1203, %v1702
        %v1710 = vadd.s32 %v1204, %v1702
        %v1711 = vadd.s32 %v1205, %v1702
        %v1712 = vadd.s32 %v1206, %v1702
        %v1713 = vadd.s32 %v1207, %v1702
        %v1714 = vadd.s32 %v1208, %v1702
        %v1715 = vadd.s32 %v1209, %v1702
        %v1716 = vadd.s32 %v1210, %v1702
        %v1717 = vadd.s32 %v1211, %v1702
        %v1718 = vadd.s32 %v1212, %v1702
        %v1719 = vadd.s32 %v1703, %v1231
        %v1720 = vadd.s32 %v1704, %v1231
        %v1721 = vadd.s32 %v1705, %v1231
        %v1722 = vadd.s32 %v1706, %v1231
        %v1723 = vadd.s32 %v1707, %v1231
        %v1724 = vadd.s32 %v1708, %v1231
        %v1725 = vadd.s32 %v1709, %v1231
        %v1726 = vadd.s32 %v1710, %v1231
        %v1727 = vadd.s32 %v1711, %v1231
        %v1728 = vadd.s32 %v1712, %v1231
        %v1729 = vadd.s32 %v1713, %v1231
        %v1730 = vadd.s32 %v1714, %v1231
        %v1731 = vadd.s32 %v1715, %v1231
        %v1732 = vadd.s32 %v1716, %v1231
        %v1733 = vadd.s32 %v1717, %v1231
        %v1734 = vadd.s32 %v1718, %v1231
        %v1735 = vadd.s32 %v1232, 331804470
        %v1736 = vadd.s32 %v1719, 331804470
        %v1737 = vadd.s32 %v1233, 331804470
        %v1738 = vadd.s32 %v1720, 331804470
        %v1739 = vadd.s32 %v1234, 331804470
        %v1740 = vadd.s32 %v1721, 331804470
        %v1741 = vadd.s32 %v1235, 331804470
        %v1742 = vadd.s32 %v1722, 331804470
        %v1743 = vadd.s32 %v1236, 331804470
        %v1744 = vadd.s32 %v1723, 331804470
        %v1745 = vadd.s32 %v1237, 331804470
        %v1746 = vadd.s32 %v1724, 331804470
        %v1747 = vadd.s32 %v1238, 331804470
        %v1748 = vadd.s32 %v1725, 331804470
        %v1749 = vadd.s32 %v1239, 331804470
        %v1750 = vadd.s32 %v1726, 331804470
        %v1751 = vadd.s32 %v1240, 331804470
        %v1752 = vadd.s32 %v1727, 331804470
        %v1753 = vadd.s32 %v1241, 331804470
        %v1754 = vadd.s32 %v1728, 331804470
        %v1755 = vadd.s32 %v1242, 331804470
        %v1756 = vadd.s32 %v1729, 331804470
        %v1757 = vadd.s32 %v1243, 331804470
        %v1758 = vadd.s32 %v1730, 331804470
        %v1759 = vadd.s32 %v1244, 331804470
        %v1760 = vadd.s32 %v1731, 331804470
        %v1761 = vadd.s32 %v1245, 331804470
        %v1762 = vadd.s32 %v1732, 331804470
        %v1763 = vadd.s32 %v1246, 331804470
        %v1764 = vadd.s32 %v1733, 331804470
        %v1765 = vadd.s32 %v1247, 331804470
        %v1766 = vadd.s32 %v1734, 331804470
        %v1767 = vshra.s32 %v1735, 15
        %v1768 = vshra.s32 %v1736, 15
        %v1769 = vshra.s32 %v1737, 15
        %v1770 = vshra.s32 %v1738, 15
        %v1771 = vshra.s32 %v1739, 15
        %v1772 = vshra.s32 %v1740, 15
        %v1773 = vshra.s32 %v1741, 15
        %v1774 = vshra.s32 %v1742, 15
        %v1775 = vshra.s32 %v1743, 15
        %v1776 = vshra.s32 %v1744, 15
        %v1777 = vshra.s32 %v1745, 15
        %v1778 = vshra.s32 %v1746, 15
        %v1779 = vshra.s32 %v1747, 15
        %v1780 = vshra.s32 %v1748, 15
        %v1781 = vshra.s32 %v1749, 15
        %v1782 = vshra.s32 %v1750, 15
        %v1783 = vshra.s32 %v1751, 15
        %v1784 = vshra.s32 %v1752, 15
        %v1785 = vshra.s32 %v1753, 15
        %v1786 = vshra.s32 %v1754, 15
        %v1787 = vshra.s32 %v1755, 15
        %v1788 = vshra.s32 %v1756, 15
        %v1789 = vshra.s32 %v1757, 15
        %v1790 = vshra.s32 %v1758, 15
        %v1791 = vshra.s32 %v1759, 15
        %v1792 = vshra.s32 %v1760, 15
        %v1793 = vshra.s32 %v1761, 15
        %v1794 = vshra.s32 %v1762, 15
        %v1795 = vshra.s32 %v1763, 15
        %v1796 = vshra.s32 %v1764, 15
        %v1797 = vshra.s32 %v1765, 15
        %v1798 = vshra.s32 %v1766, 15
        %v1799 = vxor.u32 %v1735, %v1767
        %v1800 = vxor.u32 %v1736, %v1768
        %v1801 = vxor.u32 %v1737, %v1769
        %v1802 = vxor.u32 %v1738, %v1770
        %v1803 = vxor.u32 %v1739, %v1771
        %v1804 = vxor.u32 %v1740, %v1772
        %v1805 = vxor.u32 %v1741, %v1773
        %v1806 = vxor.u32 %v1742, %v1774
        %v1807 = vxor.u32 %v1743, %v1775
        %v1808 = vxor.u32 %v1744, %v1776
        %v1809 = vxor.u32 %v1745, %v1777
        %v1810 = vxor.u32 %v1746, %v1778
        %v1811 = vxor.u32 %v1747, %v1779
        %v1812 = vxor.u32 %v1748, %v1780
        %v1813 = vxor.u32 %v1749, %v1781
        %v1814 = vxor.u32 %v1750, %v1782
        %v1815 = vxor.u32 %v1751, %v1783
        %v1816 = vxor.u32 %v1752, %v1784
        %v1817 = vxor.u32 %v1753, %v1785
        %v1818 = vxor.u32 %v1754, %v1786
        %v1819 = vxor.u32 %v1755, %v1787
        %v1820 = vxor.u32 %v1756, %v1788
        %v1821 = vxor.u32 %v1757, %v1789
        %v1822 = vxor.u32 %v1758, %v1790
        %v1823 = vxor.u32 %v1759, %v1791
        %v1824 = vxor.u32 %v1760, %v1792
        %v1825 = vxor.u32 %v1761, %v1793
        %v1826 = vxor.u32 %v1762, %v1794
        %v1827 = vxor.u32 %v1763, %v1795
        %v1828 = vxor.u32 %v1764, %v1796
        %v1829 = vxor.u32 %v1765, %v1797
        %v1830 = vxor.u32 %v1766, %v1798
        %v1831 = vmul.u32 %v1799, 2146121005
        %v1832 = vmul.u32 %v1800, 2146121005
        %v1833 = vmul.u32 %v1801, 2146121005
        %v1834 = vmul.u32 %v1802, 2146121005
        %v1835 = vmul.u32 %v1803, 2146121005
        %v1836 = vmul.u32 %v1804, 2146121005
        %v1837 = vmul.u32 %v1805, 2146121005
        %v1838 = vmul.u32 %v1806, 2146121005
        %v1839 = vmul.u32 %v1807, 2146121005
        %v1840 = vmul.u32 %v1808, 2146121005
        %v1841 = vmul.u32 %v1809, 2146121005
        %v1842 = vmul.u32 %v1810, 2146121005
        %v1843 = vmul.u32 %v1811, 2146121005
        %v1844 = vmul.u32 %v1812, 2146121005
        %v1845 = vmul.u32 %v1813, 2146121005
        %v1846 = vmul.u32 %v1814, 2146121005
        %v1847 = vmul.u32 %v1815, 2146121005
        %v1848 = vmul.u32 %v1816, 2146121005
        %v1849 = vmul.u32 %v1817, 2146121005
        %v1850 = vmul.u32 %v1818, 2146121005
        %v1851 = vmul.u32 %v1819, 2146121005
        %v1852 = vmul.u32 %v1820, 2146121005
        %v1853 = vmul.u32 %v1821, 2146121005
        %v1854 = vmul.u32 %v1822, 2146121005
        %v1855 = vmul.u32 %v1823, 2146121005
        %v1856 = vmul.u32 %v1824, 2146121005
        %v1857 = vmul.u32 %v1825, 2146121005
        %v1858 = vmul.u32 %v1826, 2146121005
        %v1859 = vmul.u32 %v1827, 2146121005
        %v1860 = vmul.u32 %v1828, 2146121005
        %v1861 = vmul.u32 %v1829, 2146121005
        %v1862 = vmul.u32 %v1830, 2146121005
        %v1863 = vshra.s32 %v1831, 13
        %v1864 = vshra.s32 %v1832, 13
        %v1865 = vshra.s32 %v1833, 13
        %v1866 = vshra.s32 %v1834, 13
        %v1867 = vshra.s32 %v1835, 13
        %v1868 = vshra.s32 %v1836, 13
        %v1869 = vshra.s32 %v1837, 13
        %v1870 = vshra.s32 %v1838, 13
        %v1871 = vshra.s32 %v1839, 13
        %v1872 = vshra.s32 %v1840, 13
        %v1873 = vshra.s32 %v1841, 13
        %v1874 = vshra.s32 %v1842, 13
        %v1875 = vshra.s32 %v1843, 13
        %v1876 = vshra.s32 %v1844, 13
        %v1877 = vshra.s32 %v1845, 13
        %v1878 = vshra.s32 %v1846, 13
        %v1879 = vshra.s32 %v1847, 13
        %v1880 = vshra.s32 %v1848, 13
        %v1881 = vshra.s32 %v1849, 13
        %v1882 = vshra.s32 %v1850, 13
        %v1883 = vshra.s32 %v1851, 13
        %v1884 = vshra.s32 %v1852, 13
        %v1885 = vshra.s32 %v1853, 13
        %v1886 = vshra.s32 %v1854, 13
        %v1887 = vshra.s32 %v1855, 13
        %v1888 = vshra.s32 %v1856, 13
        %v1889 = vshra.s32 %v1857, 13
        %v1890 = vshra.s32 %v1858, 13
        %v1891 = vshra.s32 %v1859, 13
        %v1892 = vshra.s32 %v1860, 13
        %v1893 = vshra.s32 %v1861, 13
        %v1894 = vshra.s32 %v1862, 13
        %v1895 = vxor.u32 %v1831, %v1863
        %v1896 = vxor.u32 %v1832, %v1864
        %v1897 = vxor.u32 %v1833, %v1865
        %v1898 = vxor.u32 %v1834, %v1866
        %v1899 = vxor.u32 %v1835, %v1867
        %v1900 = vxor.u32 %v1836, %v1868
        %v1901 = vxor.u32 %v1837, %v1869
        %v1902 = vxor.u32 %v1838, %v1870
        %v1903 = vxor.u32 %v1839, %v1871
        %v1904 = vxor.u32 %v1840, %v1872
        %v1905 = vxor.u32 %v1841, %v1873
        %v1906 = vxor.u32 %v1842, %v1874
        %v1907 = vxor.u32 %v1843, %v1875
        %v1908 = vxor.u32 %v1844, %v1876
        %v1909 = vxor.u32 %v1845, %v1877
        %v1910 = vxor.u32 %v1846, %v1878
        %v1911 = vxor.u32 %v1847, %v1879
        %v1912 = vxor.u32 %v1848, %v1880
        %v1913 = vxor.u32 %v1849, %v1881
        %v1914 = vxor.u32 %v1850, %v1882
        %v1915 = vxor.u32 %v1851, %v1883
        %v1916 = vxor.u32 %v1852, %v1884
        %v1917 = vxor.u32 %v1853, %v1885
        %v1918 = vxor.u32 %v1854, %v1886
        %v1919 = vxor.u32 %v1855, %v1887
        %v1920 = vxor.u32 %v1856, %v1888
        %v1921 = vxor.u32 %v1857, %v1889
        %v1922 = vxor.u32 %v1858, %v1890
        %v1923 = vxor.u32 %v1859, %v1891
        %v1924 = vxor.u32 %v1860, %v1892
        %v1925 = vxor.u32 %v1861, %v1893
        %v1926 = vxor.u32 %v1862, %v1894
        %v1927 = vmul.u32 %v1895, 1779033703
        %v1928 = vmul.u32 %v1896, 1779033703
        %v1929 = vmul.u32 %v1897, 1779033703
        %v1930 = vmul.u32 %v1898, 1779033703
        %v1931 = vmul.u32 %v1899, 1779033703
        %v1932 = vmul.u32 %v1900, 1779033703
        %v1933 = vmul.u32 %v1901, 1779033703
        %v1934 = vmul.u32 %v1902, 1779033703
        %v1935 = vmul.u32 %v1903, 1779033703
        %v1936 = vmul.u32 %v1904, 1779033703
        %v1937 = vmul.u32 %v1905, 1779033703
        %v1938 = vmul.u32 %v1906, 1779033703
        %v1939 = vmul.u32 %v1907, 1779033703
        %v1940 = vmul.u32 %v1908, 1779033703
        %v1941 = vmul.u32 %v1909, 1779033703
        %v1942 = vmul.u32 %v1910, 1779033703
        %v1943 = vmul.u32 %v1911, 1779033703
        %v1944 = vmul.u32 %v1912, 1779033703
        %v1945 = vmul.u32 %v1913, 1779033703
        %v1946 = vmul.u32 %v1914, 1779033703
        %v1947 = vmul.u32 %v1915, 1779033703
        %v1948 = vmul.u32 %v1916, 1779033703
        %v1949 = vmul.u32 %v1917, 1779033703
        %v1950 = vmul.u32 %v1918, 1779033703
        %v1951 = vmul.u32 %v1919, 1779033703
        %v1952 = vmul.u32 %v1920, 1779033703
        %v1953 = vmul.u32 %v1921, 1779033703
        %v1954 = vmul.u32 %v1922, 1779033703
        %v1955 = vmul.u32 %v1923, 1779033703
        %v1956 = vmul.u32 %v1924, 1779033703
        %v1957 = vmul.u32 %v1925, 1779033703
        %v1958 = vmul.u32 %v1926, 1779033703
        %v1959 = vshra.s32 %v1927, 16
        %v1960 = vshra.s32 %v1928, 16
        %v1961 = vshra.s32 %v1929, 16
        %v1962 = vshra.s32 %v1930, 16
        %v1963 = vshra.s32 %v1931, 16
        %v1964 = vshra.s32 %v1932, 16
        %v1965 = vshra.s32 %v1933, 16
        %v1966 = vshra.s32 %v1934, 16
        %v1967 = vshra.s32 %v1935, 16
        %v1968 = vshra.s32 %v1936, 16
        %v1969 = vshra.s32 %v1937, 16
        %v1970 = vshra.s32 %v1938, 16
        %v1971 = vshra.s32 %v1939, 16
        %v1972 = vshra.s32 %v1940, 16
        %v1973 = vshra.s32 %v1941, 16
        %v1974 = vshra.s32 %v1942, 16
        %v1975 = vshra.s32 %v1943, 16
        %v1976 = vshra.s32 %v1944, 16
        %v1977 = vshra.s32 %v1945, 16
        %v1978 = vshra.s32 %v1946, 16
        %v1979 = vshra.s32 %v1947, 16
        %v1980 = vshra.s32 %v1948, 16
        %v1981 = vshra.s32 %v1949, 16
        %v1982 = vshra.s32 %v1950, 16
        %v1983 = vshra.s32 %v1951, 16
        %v1984 = vshra.s32 %v1952, 16
        %v1985 = vshra.s32 %v1953, 16
        %v1986 = vshra.s32 %v1954, 16
        %v1987 = vshra.s32 %v1955, 16
        %v1988 = vshra.s32 %v1956, 16
        %v1989 = vshra.s32 %v1957, 16
        %v1990 = vshra.s32 %v1958, 16
        %v1991 = vxor.u32 %v1927, %v1959
        %v1992 = vxor.u32 %v1928, %v1960
        %v1993 = vxor.u32 %v1929, %v1961
        %v1994 = vxor.u32 %v1930, %v1962
        %v1995 = vxor.u32 %v1931, %v1963
        %v1996 = vxor.u32 %v1932, %v1964
        %v1997 = vxor.u32 %v1933, %v1965
        %v1998 = vxor.u32 %v1934, %v1966
        %v1999 = vxor.u32 %v1935, %v1967
        %v2000 = vxor.u32 %v1936, %v1968
        %v2001 = vxor.u32 %v1937, %v1969
        %v2002 = vxor.u32 %v1938, %v1970
        %v2003 = vxor.u32 %v1939, %v1971
        %v2004 = vxor.u32 %v1940, %v1972
        %v2005 = vxor.u32 %v1941, %v1973
        %v2006 = vxor.u32 %v1942, %v1974
        %v2007 = vxor.u32 %v1943, %v1975
        %v2008 = vxor.u32 %v1944, %v1976
        %v2009 = vxor.u32 %v1945, %v1977
        %v2010 = vxor.u32 %v1946, %v1978
        %v2011 = vxor.u32 %v1947, %v1979
        %v2012 = vxor.u32 %v1948, %v1980
        %v2013 = vxor.u32 %v1949, %v1981
        %v2014 = vxor.u32 %v1950, %v1982
        %v2015 = vxor.u32 %v1951, %v1983
        %v2016 = vxor.u32 %v1952, %v1984
        %v2017 = vxor.u32 %v1953, %v1985
        %v2018 = vxor.u32 %v1954, %v1986
        %v2019 = vxor.u32 %v1955, %v1987
        %v2020 = vxor.u32 %v1956, %v1988
        %v2021 = vxor.u32 %v1957, %v1989
        %v2022 = vxor.u32 %v1958, %v1990
        %v2023 = vshra.s32 %v1991, 8
        %v2024 = vshra.s32 %v1992, 8
        %v2025 = vshra.s32 %v1993, 8
        %v2026 = vshra.s32 %v1994, 8
        %v2027 = vshra.s32 %v1995, 8
        %v2028 = vshra.s32 %v1996, 8
        %v2029 = vshra.s32 %v1997, 8
        %v2030 = vshra.s32 %v1998, 8
        %v2031 = vshra.s32 %v1999, 8
        %v2032 = vshra.s32 %v2000, 8
        %v2033 = vshra.s32 %v2001, 8
        %v2034 = vshra.s32 %v2002, 8
        %v2035 = vshra.s32 %v2003, 8
        %v2036 = vshra.s32 %v2004, 8
        %v2037 = vshra.s32 %v2005, 8
        %v2038 = vshra.s32 %v2006, 8
        %v2039 = vshra.s32 %v2007, 8
        %v2040 = vshra.s32 %v2008, 8
        %v2041 = vshra.s32 %v2009, 8
        %v2042 = vshra.s32 %v2010, 8
        %v2043 = vshra.s32 %v2011, 8
        %v2044 = vshra.s32 %v2012, 8
        %v2045 = vshra.s32 %v2013, 8
        %v2046 = vshra.s32 %v2014, 8
        %v2047 = vshra.s32 %v2015, 8
        %v2048 = vshra.s32 %v2016, 8
        %v2049 = vshra.s32 %v2017, 8
        %v2050 = vshra.s32 %v2018, 8
        %v2051 = vshra.s32 %v2019, 8
        %v2052 = vshra.s32 %v2020, 8
        %v2053 = vshra.s32 %v2021, 8
        %v2054 = vshra.s32 %v2022, 8
        %v2055 = vand.u32 %v2023, 1
        %v2056 = vand.u32 %v2024, 1
        %v2057 = vand.u32 %v2025, 1
        %v2058 = vand.u32 %v2026, 1
        %v2059 = vand.u32 %v2027, 1
        %v2060 = vand.u32 %v2028, 1
        %v2061 = vand.u32 %v2029, 1
        %v2062 = vand.u32 %v2030, 1
        %v2063 = vand.u32 %v2031, 1
        %v2064 = vand.u32 %v2032, 1
        %v2065 = vand.u32 %v2033, 1
        %v2066 = vand.u32 %v2034, 1
        %v2067 = vand.u32 %v2035, 1
        %v2068 = vand.u32 %v2036, 1
        %v2069 = vand.u32 %v2037, 1
        %v2070 = vand.u32 %v2038, 1
        %v2071 = vand.u32 %v2039, 1
        %v2072 = vand.u32 %v2040, 1
        %v2073 = vand.u32 %v2041, 1
        %v2074 = vand.u32 %v2042, 1
        %v2075 = vand.u32 %v2043, 1
        %v2076 = vand.u32 %v2044, 1
        %v2077 = vand.u32 %v2045, 1
        %v2078 = vand.u32 %v2046, 1
        %v2079 = vand.u32 %v2047, 1
        %v2080 = vand.u32 %v2048, 1
        %v2081 = vand.u32 %v2049, 1
        %v2082 = vand.u32 %v2050, 1
        %v2083 = vand.u32 %v2051, 1
        %v2084 = vand.u32 %v2052, 1
        %v2085 = vand.u32 %v2053, 1
        %v2086 = vand.u32 %v2054, 1
        %vm2087 = vcmp.eq.s32.totalorder %v2055, 0
        %vm2088 = vcmp.eq.s32.totalorder %v2056, 0
        %vm2089 = vcmp.eq.s32.totalorder %v2057, 0
        %vm2090 = vcmp.eq.s32.totalorder %v2058, 0
        %vm2091 = vcmp.eq.s32.totalorder %v2059, 0
        %vm2092 = vcmp.eq.s32.totalorder %v2060, 0
        %vm2093 = vcmp.eq.s32.totalorder %v2061, 0
        %vm2094 = vcmp.eq.s32.totalorder %v2062, 0
        %vm2095 = vcmp.eq.s32.totalorder %v2063, 0
        %vm2096 = vcmp.eq.s32.totalorder %v2064, 0
        %vm2097 = vcmp.eq.s32.totalorder %v2065, 0
        %vm2098 = vcmp.eq.s32.totalorder %v2066, 0
        %vm2099 = vcmp.eq.s32.totalorder %v2067, 0
        %vm2100 = vcmp.eq.s32.totalorder %v2068, 0
        %vm2101 = vcmp.eq.s32.totalorder %v2069, 0
        %vm2102 = vcmp.eq.s32.totalorder %v2070, 0
        %vm2103 = vcmp.eq.s32.totalorder %v2071, 0
        %vm2104 = vcmp.eq.s32.totalorder %v2072, 0
        %vm2105 = vcmp.eq.s32.totalorder %v2073, 0
        %vm2106 = vcmp.eq.s32.totalorder %v2074, 0
        %vm2107 = vcmp.eq.s32.totalorder %v2075, 0
        %vm2108 = vcmp.eq.s32.totalorder %v2076, 0
        %vm2109 = vcmp.eq.s32.totalorder %v2077, 0
        %vm2110 = vcmp.eq.s32.totalorder %v2078, 0
        %vm2111 = vcmp.eq.s32.totalorder %v2079, 0
        %vm2112 = vcmp.eq.s32.totalorder %v2080, 0
        %vm2113 = vcmp.eq.s32.totalorder %v2081, 0
        %vm2114 = vcmp.eq.s32.totalorder %v2082, 0
        %vm2115 = vcmp.eq.s32.totalorder %v2083, 0
        %vm2116 = vcmp.eq.s32.totalorder %v2084, 0
        %vm2117 = vcmp.eq.s32.totalorder %v2085, 0
        %vm2118 = vcmp.eq.s32.totalorder %v2086, 0
        %v2119 = vmax.f32 %v1623, 0.0
        %v2120 = vmax.f32 %v1625, 0.0
        %v2121 = vmax.f32 %v1627, 0.0
        %v2122 = vmax.f32 %v1629, 0.0
        %v2123 = vmax.f32 %v1633, 0.0
        %v2124 = vmax.f32 %v1635, 0.0
        %v2125 = vmax.f32 %v1637, 0.0
        %v2126 = vmax.f32 %v1639, 0.0
        %v2127 = vmax.f32 %v1643, 0.0
        %v2128 = vmax.f32 %v1645, 0.0
        %v2129 = vmax.f32 %v1647, 0.0
        %v2130 = vmax.f32 %v1649, 0.0
        %v2131 = vmax.f32 %v1653, 0.0
        %v2132 = vmax.f32 %v1655, 0.0
        %v2133 = vmax.f32 %v1657, 0.0
        %v2134 = vmax.f32 %v1659, 0.0
        %v2135 = vmax.f32 %v1663, 0.0
        %v2136 = vmax.f32 %v1665, 0.0
        %v2137 = vmax.f32 %v1667, 0.0
        %v2138 = vmax.f32 %v1669, 0.0
        %v2139 = vmax.f32 %v1673, 0.0
        %v2140 = vmax.f32 %v1675, 0.0
        %v2141 = vmax.f32 %v1677, 0.0
        %v2142 = vmax.f32 %v1679, 0.0
        %v2143 = vmax.f32 %v1683, 0.0
        %v2144 = vmax.f32 %v1685, 0.0
        %v2145 = vmax.f32 %v1687, 0.0
        %v2146 = vmax.f32 %v1689, 0.0
        %v2147 = vmax.f32 %v1693, 0.0
        %v2148 = vmax.f32 %v1695, 0.0
        %v2149 = vmax.f32 %v1697, 0.0
        %v2150 = vmax.f32 %v1699, 0.0
        %v2151 = vsel %vm2087, %v2119, 0.0
        %v2152 = vsel %vm2088, %v2120, 0.0
        %v2153 = vsel %vm2089, %v2121, 0.0
        %v2154 = vsel %vm2090, %v2122, 0.0
        %v2155 = vsel %vm2091, %v2123, 0.0
        %v2156 = vsel %vm2092, %v2124, 0.0
        %v2157 = vsel %vm2093, %v2125, 0.0
        %v2158 = vsel %vm2094, %v2126, 0.0
        %v2159 = vsel %vm2095, %v2127, 0.0
        %v2160 = vsel %vm2096, %v2128, 0.0
        %v2161 = vsel %vm2097, %v2129, 0.0
        %v2162 = vsel %vm2098, %v2130, 0.0
        %v2163 = vsel %vm2099, %v2131, 0.0
        %v2164 = vsel %vm2100, %v2132, 0.0
        %v2165 = vsel %vm2101, %v2133, 0.0
        %v2166 = vsel %vm2102, %v2134, 0.0
        %v2167 = vsel %vm2103, %v2135, 0.0
        %v2168 = vsel %vm2104, %v2136, 0.0
        %v2169 = vsel %vm2105, %v2137, 0.0
        %v2170 = vsel %vm2106, %v2138, 0.0
        %v2171 = vsel %vm2107, %v2139, 0.0
        %v2172 = vsel %vm2108, %v2140, 0.0
        %v2173 = vsel %vm2109, %v2141, 0.0
        %v2174 = vsel %vm2110, %v2142, 0.0
        %v2175 = vsel %vm2111, %v2143, 0.0
        %v2176 = vsel %vm2112, %v2144, 0.0
        %v2177 = vsel %vm2113, %v2145, 0.0
        %v2178 = vsel %vm2114, %v2146, 0.0
        %v2179 = vsel %vm2115, %v2147, 0.0
        %v2180 = vsel %vm2116, %v2148, 0.0
        %v2181 = vsel %vm2117, %v2149, 0.0
        %v2182 = vsel %vm2118, %v2150, 0.0
        %v2183 = vpack.c.bf16 %v2153, %v2151
        %v2184 = vpack.c.bf16 %v2154, %v2152
        %v2185 = vpack.c.bf16 %v2157, %v2155
        %v2186 = vpack.c.bf16 %v2158, %v2156
        %v2187 = vpack.c.bf16 %v2161, %v2159
        %v2188 = vpack.c.bf16 %v2162, %v2160
        %v2189 = vpack.c.bf16 %v2165, %v2163
        %v2190 = vpack.c.bf16 %v2166, %v2164
        %v2191 = vpack.c.bf16 %v2169, %v2167
        %v2192 = vpack.c.bf16 %v2170, %v2168
        %v2193 = vpack.c.bf16 %v2173, %v2171
        %v2194 = vpack.c.bf16 %v2174, %v2172
        %v2195 = vpack.c.bf16 %v2177, %v2175
        %v2196 = vpack.c.bf16 %v2178, %v2176
        %v2197 = vpack.c.bf16 %v2181, %v2179
        %v2198 = vpack.c.bf16 %v2182, %v2180
        %v2199 = vld [vmem:[#allocation9] sm:$0xff]
        %v2200 = vld [vmem:[#allocation9 + $0x8] sm:$0xff]
        %v2201 = vld [vmem:[#allocation9 + $0x10] sm:$0xff]
        %v2202 = vld [vmem:[#allocation9 + $0x18] sm:$0xff]
        %v2203 = vld [vmem:[#allocation9 + $0x20] sm:$0xff]
        %v2204 = vld [vmem:[#allocation9 + $0x28] sm:$0xff]
        %v2205 = vld [vmem:[#allocation9 + $0x30] sm:$0xff]
        %v2206 = vld [vmem:[#allocation9 + $0x38] sm:$0xff]
        %v2207 = vld [vmem:[#allocation9 + $0x40] sm:$0xff]
        %v2208 = vld [vmem:[#allocation9 + $0x48] sm:$0xff]
        %v2209 = vld [vmem:[#allocation9 + $0x50] sm:$0xff]
        %v2210 = vld [vmem:[#allocation9 + $0x58] sm:$0xff]
        %v2211 = vld [vmem:[#allocation9 + $0x60] sm:$0xff]
        %v2212 = vld [vmem:[#allocation9 + $0x68] sm:$0xff]
        %v2213 = vld [vmem:[#allocation9 + $0x70] sm:$0xff]
        %v2214 = vld [vmem:[#allocation9 + $0x78] sm:$0xff]
        %v2215 = vld [vmem:[#allocation9 + $0x80] sm:$0xff]
        %v2216 = vld [vmem:[#allocation9 + $0x88] sm:$0xff]
        %v2217 = vld [vmem:[#allocation9 + $0x90] sm:$0xff]
        %v2218 = vld [vmem:[#allocation9 + $0x98] sm:$0xff]
        %v2219 = vld [vmem:[#allocation9 + $0xa0] sm:$0xff]
        %v2220 = vld [vmem:[#allocation9 + $0xa8] sm:$0xff]
        %v2221 = vld [vmem:[#allocation9 + $0xb0] sm:$0xff]
        %v2222 = vld [vmem:[#allocation9 + $0xb8] sm:$0xff]
        %v2223 = vld [vmem:[#allocation9 + $0xc0] sm:$0xff]
        %v2224 = vld [vmem:[#allocation9 + $0xc8] sm:$0xff]
        %v2225 = vld [vmem:[#allocation9 + $0xd0] sm:$0xff]
        %v2226 = vld [vmem:[#allocation9 + $0xd8] sm:$0xff]
        %v2227 = vld [vmem:[#allocation9 + $0xe0] sm:$0xff]
        %v2228 = vld [vmem:[#allocation9 + $0xe8] sm:$0xff]
        %v2229 = vld [vmem:[#allocation9 + $0xf0] sm:$0xff]
        %v2230 = vld [vmem:[#allocation9 + $0xf8] sm:$0xff]
        %v2231 = vld [vmem:[%s7] sm:$0x3]
        %v2233 = vlaneseq
        %v2234 = vshrl.u32 %v2233, 7
        %v2235 = vsub.s32 0, %v2234
        %v2236 = vrot.slane %v2231, %v2235
        %v2237 = vlaneseq
        %v2238 = vshrl.u32 %v2237, 7
        %v2239 = vsub.s32 1, %v2238
        %v2240 = vrot.slane %v2231, %v2239
        %v2275 = vunpack.c.l.b16 %v2199
        %v2276 = vunpack.c.h.b16 %v2199
        %v2277 = vunpack.c.l.b16 %v2200
        %v2278 = vunpack.c.h.b16 %v2200
        %v2279 = vunpack.c.l.b16 %v2201
        %v2280 = vunpack.c.h.b16 %v2201
        %v2281 = vunpack.c.l.b16 %v2202
        %v2282 = vunpack.c.h.b16 %v2202
        %v2283 = vunpack.c.l.b16 %v2203
        %v2284 = vunpack.c.h.b16 %v2203
        %v2285 = vunpack.c.l.b16 %v2204
        %v2286 = vunpack.c.h.b16 %v2204
        %v2287 = vunpack.c.l.b16 %v2205
        %v2288 = vunpack.c.h.b16 %v2205
        %v2289 = vunpack.c.l.b16 %v2206
        %v2290 = vunpack.c.h.b16 %v2206
        %v2291 = vunpack.c.l.b16 %v2207
        %v2292 = vunpack.c.h.b16 %v2207
        %v2293 = vunpack.c.l.b16 %v2208
        %v2294 = vunpack.c.h.b16 %v2208
        %v2295 = vunpack.c.l.b16 %v2209
        %v2296 = vunpack.c.h.b16 %v2209
        %v2297 = vunpack.c.l.b16 %v2210
        %v2298 = vunpack.c.h.b16 %v2210
        %v2299 = vunpack.c.l.b16 %v2211
        %v2300 = vunpack.c.h.b16 %v2211
        %v2301 = vunpack.c.l.b16 %v2212
        %v2302 = vunpack.c.h.b16 %v2212
        %v2303 = vunpack.c.l.b16 %v2213
        %v2304 = vunpack.c.h.b16 %v2213
        %v2305 = vunpack.c.l.b16 %v2214
        %v2306 = vunpack.c.h.b16 %v2214
        %v2307 = vunpack.c.l.b16 %v2215
        %v2308 = vunpack.c.h.b16 %v2215
        %v2309 = vunpack.c.l.b16 %v2216
        %v2310 = vunpack.c.h.b16 %v2216
        %v2311 = vunpack.c.l.b16 %v2217
        %v2312 = vunpack.c.h.b16 %v2217
        %v2313 = vunpack.c.l.b16 %v2218
        %v2314 = vunpack.c.h.b16 %v2218
        %v2315 = vunpack.c.l.b16 %v2219
        %v2316 = vunpack.c.h.b16 %v2219
        %v2317 = vunpack.c.l.b16 %v2220
        %v2318 = vunpack.c.h.b16 %v2220
        %v2319 = vunpack.c.l.b16 %v2221
        %v2320 = vunpack.c.h.b16 %v2221
        %v2321 = vunpack.c.l.b16 %v2222
        %v2322 = vunpack.c.h.b16 %v2222
        %v2323 = vunpack.c.l.b16 %v2223
        %v2324 = vunpack.c.h.b16 %v2223
        %v2325 = vunpack.c.l.b16 %v2224
        %v2326 = vunpack.c.h.b16 %v2224
        %v2327 = vunpack.c.l.b16 %v2225
        %v2328 = vunpack.c.h.b16 %v2225
        %v2329 = vunpack.c.l.b16 %v2226
        %v2330 = vunpack.c.h.b16 %v2226
        %v2331 = vunpack.c.l.b16 %v2227
        %v2332 = vunpack.c.h.b16 %v2227
        %v2333 = vunpack.c.l.b16 %v2228
        %v2334 = vunpack.c.h.b16 %v2228
        %v2335 = vunpack.c.l.b16 %v2229
        %v2336 = vunpack.c.h.b16 %v2229
        %v2337 = vunpack.c.l.b16 %v2230
        %v2338 = vunpack.c.h.b16 %v2230
        %v2339 = vpack.c.b16 %v2277, %v2275
        %v2340 = vpack.c.b16 %v2278, %v2276
        %v2341 = vpack.c.b16 %v2281, %v2279
        %v2342 = vpack.c.b16 %v2282, %v2280
        %v2343 = vpack.c.b16 %v2285, %v2283
        %v2344 = vpack.c.b16 %v2286, %v2284
        %v2345 = vpack.c.b16 %v2289, %v2287
        %v2346 = vpack.c.b16 %v2290, %v2288
        %v2347 = vpack.c.b16 %v2293, %v2291
        %v2348 = vpack.c.b16 %v2294, %v2292
        %v2349 = vpack.c.b16 %v2297, %v2295
        %v2350 = vpack.c.b16 %v2298, %v2296
        %v2351 = vpack.c.b16 %v2301, %v2299
        %v2352 = vpack.c.b16 %v2302, %v2300
        %v2353 = vpack.c.b16 %v2305, %v2303
        %v2354 = vpack.c.b16 %v2306, %v2304
        %v2355 = vpack.c.b16 %v2309, %v2307
        %v2356 = vpack.c.b16 %v2310, %v2308
        %v2357 = vpack.c.b16 %v2313, %v2311
        %v2358 = vpack.c.b16 %v2314, %v2312
        %v2359 = vpack.c.b16 %v2317, %v2315
        %v2360 = vpack.c.b16 %v2318, %v2316
        %v2361 = vpack.c.b16 %v2321, %v2319
        %v2362 = vpack.c.b16 %v2322, %v2320
        %v2363 = vpack.c.b16 %v2325, %v2323
        %v2364 = vpack.c.b16 %v2326, %v2324
        %v2365 = vpack.c.b16 %v2329, %v2327
        %v2366 = vpack.c.b16 %v2330, %v2328
        %v2367 = vpack.c.b16 %v2333, %v2331
        %v2368 = vpack.c.b16 %v2334, %v2332
        %v2369 = vpack.c.b16 %v2337, %v2335
        %v2370 = vpack.c.b16 %v2338, %v2336
        %2403 = vmatprep.subr.bf16.mxu0 %v2354
        %2404 = vmatpush1.bf16.msra.mxu0 %v2353
        %2405 = vmatprep.subr.bf16.mxu0 %v2352
        %2406 = vmatpush1.bf16.msra.mxu0 %v2351
        %2407 = vmatprep.subr.bf16.mxu0 %v2350
        %2408 = vmatpush1.bf16.msra.mxu0 %v2349
        %2409 = vmatprep.subr.bf16.mxu0 %v2348
        %2410 = vmatpush1.bf16.msra.mxu0 %v2347
        %2411 = vmatprep.subr.bf16.mxu0 %v2346
        %2412 = vmatpush1.bf16.msra.mxu0 %v2345
        %2413 = vmatprep.subr.bf16.mxu0 %v2344
        %2414 = vmatpush1.bf16.msra.mxu0 %v2343
        %2415 = vmatprep.subr.bf16.mxu0 %v2342
        %2416 = vmatpush1.bf16.msra.mxu0 %v2341
        %2417 = vmatprep.subr.bf16.mxu0 %v2340
        %2418 = vmatpush1.bf16.msra.mxu0 %v2339
        %2419 = vmatprep.subr.bf16.mxu0 %v2370
        %2420 = vmatpush2.bf16.msra.mxu0 %v2369
        %2421 = vmatprep.subr.bf16.mxu0 %v2368
        %2422 = vmatpush2.bf16.msra.mxu0 %v2367
        %2423 = vmatprep.subr.bf16.mxu0 %v2366
        %2424 = vmatpush2.bf16.msra.mxu0 %v2365
        %2425 = vmatprep.subr.bf16.mxu0 %v2364
        %2426 = vmatpush2.bf16.msra.mxu0 %v2363
        %2427 = vmatprep.subr.bf16.mxu0 %v2362
        %2428 = vmatpush2.bf16.msra.mxu0 %v2361
        %2429 = vmatprep.subr.bf16.mxu0 %v2360
        %2430 = vmatpush2.bf16.msra.mxu0 %v2359
        %2431 = vmatprep.subr.bf16.mxu0 %v2358
        %2432 = vmatpush2.bf16.msra.mxu0 %v2357
        %2433 = vmatprep.subr.bf16.mxu0 %v2356
        %2434 = vmatpush2.bf16.msra.mxu0 %v2355
        %2435 = vmatprep.mubr.bf16.mxu0 %v2184
        %2436 = vmatmul.mubr.bf16.gmra.mxu0 %v2183
        %v2437 = vpop.f32.mrf.mxu0
        %v2438 = vadd.f32 %v2236, %v2437
        %v2439 = vpop.f32.mrf.mxu0
        %v2440 = vadd.f32 %v2240, %v2439
        %v2441 = vpop.f32.mrf.mxu0
        %v2442 = vadd.f32 %v2236, %v2441
        %v2443 = vpop.f32.mrf.mxu0
        %v2444 = vadd.f32 %v2240, %v2443
        %2445 = vmatprep.mubr.bf16.mxu0 %v2186
        %2446 = vmatmul.mubr.bf16.gmra.mxu0 %v2185
        %v2447 = vpop.f32.mrf.mxu0
        %v2448 = vadd.f32 %v2236, %v2447
        %v2449 = vpop.f32.mrf.mxu0
        %v2450 = vadd.f32 %v2240, %v2449
        %v2451 = vpop.f32.mrf.mxu0
        %v2452 = vadd.f32 %v2236, %v2451
        %v2453 = vpop.f32.mrf.mxu0
        %v2454 = vadd.f32 %v2240, %v2453
        %2455 = vmatprep.mubr.bf16.mxu0 %v2188
        %2456 = vmatmul.mubr.bf16.gmra.mxu0 %v2187
        %v2457 = vpop.f32.mrf.mxu0
        %v2458 = vadd.f32 %v2236, %v2457
        %v2459 = vpop.f32.mrf.mxu0
        %v2460 = vadd.f32 %v2240, %v2459
        %v2461 = vpop.f32.mrf.mxu0
        %v2462 = vadd.f32 %v2236, %v2461
        %v2463 = vpop.f32.mrf.mxu0
        %v2464 = vadd.f32 %v2240, %v2463
        %2465 = vmatprep.mubr.bf16.mxu0 %v2190
        %2466 = vmatmul.mubr.bf16.gmra.mxu0 %v2189
        %v2467 = vpop.f32.mrf.mxu0
        %v2468 = vadd.f32 %v2236, %v2467
        %v2469 = vpop.f32.mrf.mxu0
        %v2470 = vadd.f32 %v2240, %v2469
        %v2471 = vpop.f32.mrf.mxu0
        %v2472 = vadd.f32 %v2236, %v2471
        %v2473 = vpop.f32.mrf.mxu0
        %v2474 = vadd.f32 %v2240, %v2473
        %2475 = vmatprep.mubr.bf16.mxu0 %v2192
        %2476 = vmatmul.mubr.bf16.gmra.mxu0 %v2191
        %v2477 = vpop.f32.mrf.mxu0
        %v2478 = vadd.f32 %v2236, %v2477
        %v2479 = vpop.f32.mrf.mxu0
        %v2480 = vadd.f32 %v2240, %v2479
        %v2481 = vpop.f32.mrf.mxu0
        %v2482 = vadd.f32 %v2236, %v2481
        %v2483 = vpop.f32.mrf.mxu0
        %v2484 = vadd.f32 %v2240, %v2483
        %2485 = vmatprep.mubr.bf16.mxu0 %v2194
        %2486 = vmatmul.mubr.bf16.gmra.mxu0 %v2193
        %v2487 = vpop.f32.mrf.mxu0
        %v2488 = vadd.f32 %v2236, %v2487
        %v2489 = vpop.f32.mrf.mxu0
        %v2490 = vadd.f32 %v2240, %v2489
        %v2491 = vpop.f32.mrf.mxu0
        %v2492 = vadd.f32 %v2236, %v2491
        %v2493 = vpop.f32.mrf.mxu0
        %v2494 = vadd.f32 %v2240, %v2493
        %2495 = vmatprep.mubr.bf16.mxu0 %v2196
        %2496 = vmatmul.mubr.bf16.gmra.mxu0 %v2195
        %v2497 = vpop.f32.mrf.mxu0
        %v2498 = vadd.f32 %v2236, %v2497
        %v2499 = vpop.f32.mrf.mxu0
        %v2500 = vadd.f32 %v2240, %v2499
        %v2501 = vpop.f32.mrf.mxu0
        %v2502 = vadd.f32 %v2236, %v2501
        %v2503 = vpop.f32.mrf.mxu0
        %v2504 = vadd.f32 %v2240, %v2503
        %2505 = vmatprep.mubr.bf16.mxu0 %v2198
        %2506 = vmatmul.mubr.bf16.gmra.mxu0 %v2197
        %v2507 = vpop.f32.mrf.mxu0
        %v2508 = vadd.f32 %v2236, %v2507
        %v2509 = vpop.f32.mrf.mxu0
        %v2510 = vadd.f32 %v2240, %v2509
        %v2511 = vpop.f32.mrf.mxu0
        %v2512 = vadd.f32 %v2236, %v2511
        %v2513 = vpop.f32.mrf.mxu0
        %v2514 = vadd.f32 %v2240, %v2513
        %2515 = vdwg.mxu0
        %v2516 = vadd.s32 %v1232, 497706705
        %v2517 = vadd.s32 %v1719, 497706705
        %v2518 = vadd.s32 %v1233, 497706705
        %v2519 = vadd.s32 %v1720, 497706705
        %v2520 = vadd.s32 %v1234, 497706705
        %v2521 = vadd.s32 %v1721, 497706705
        %v2522 = vadd.s32 %v1235, 497706705
        %v2523 = vadd.s32 %v1722, 497706705
        %v2524 = vadd.s32 %v1236, 497706705
        %v2525 = vadd.s32 %v1723, 497706705
        %v2526 = vadd.s32 %v1237, 497706705
        %v2527 = vadd.s32 %v1724, 497706705
        %v2528 = vadd.s32 %v1238, 497706705
        %v2529 = vadd.s32 %v1725, 497706705
        %v2530 = vadd.s32 %v1239, 497706705
        %v2531 = vadd.s32 %v1726, 497706705
        %v2532 = vadd.s32 %v1240, 497706705
        %v2533 = vadd.s32 %v1727, 497706705
        %v2534 = vadd.s32 %v1241, 497706705
        %v2535 = vadd.s32 %v1728, 497706705
        %v2536 = vadd.s32 %v1242, 497706705
        %v2537 = vadd.s32 %v1729, 497706705
        %v2538 = vadd.s32 %v1243, 497706705
        %v2539 = vadd.s32 %v1730, 497706705
        %v2540 = vadd.s32 %v1244, 497706705
        %v2541 = vadd.s32 %v1731, 497706705
        %v2542 = vadd.s32 %v1245, 497706705
        %v2543 = vadd.s32 %v1732, 497706705
        %v2544 = vadd.s32 %v1246, 497706705
        %v2545 = vadd.s32 %v1733, 497706705
        %v2546 = vadd.s32 %v1247, 497706705
        %v2547 = vadd.s32 %v1734, 497706705
        %v2548 = vshra.s32 %v2516, 15
        %v2549 = vshra.s32 %v2517, 15
        %v2550 = vshra.s32 %v2518, 15
        %v2551 = vshra.s32 %v2519, 15
        %v2552 = vshra.s32 %v2520, 15
        %v2553 = vshra.s32 %v2521, 15
        %v2554 = vshra.s32 %v2522, 15
        %v2555 = vshra.s32 %v2523, 15
        %v2556 = vshra.s32 %v2524, 15
        %v2557 = vshra.s32 %v2525, 15
        %v2558 = vshra.s32 %v2526, 15
        %v2559 = vshra.s32 %v2527, 15
        %v2560 = vshra.s32 %v2528, 15
        %v2561 = vshra.s32 %v2529, 15
        %v2562 = vshra.s32 %v2530, 15
        %v2563 = vshra.s32 %v2531, 15
        %v2564 = vshra.s32 %v2532, 15
        %v2565 = vshra.s32 %v2533, 15
        %v2566 = vshra.s32 %v2534, 15
        %v2567 = vshra.s32 %v2535, 15
        %v2568 = vshra.s32 %v2536, 15
        %v2569 = vshra.s32 %v2537, 15
        %v2570 = vshra.s32 %v2538, 15
        %v2571 = vshra.s32 %v2539, 15
        %v2572 = vshra.s32 %v2540, 15
        %v2573 = vshra.s32 %v2541, 15
        %v2574 = vshra.s32 %v2542, 15
        %v2575 = vshra.s32 %v2543, 15
        %v2576 = vshra.s32 %v2544, 15
        %v2577 = vshra.s32 %v2545, 15
        %v2578 = vshra.s32 %v2546, 15
        %v2579 = vshra.s32 %v2547, 15
        %v2580 = vxor.u32 %v2516, %v2548
        %v2581 = vxor.u32 %v2517, %v2549
        %v2582 = vxor.u32 %v2518, %v2550
        %v2583 = vxor.u32 %v2519, %v2551
        %v2584 = vxor.u32 %v2520, %v2552
        %v2585 = vxor.u32 %v2521, %v2553
        %v2586 = vxor.u32 %v2522, %v2554
        %v2587 = vxor.u32 %v2523, %v2555
        %v2588 = vxor.u32 %v2524, %v2556
        %v2589 = vxor.u32 %v2525, %v2557
        %v2590 = vxor.u32 %v2526, %v2558
        %v2591 = vxor.u32 %v2527, %v2559
        %v2592 = vxor.u32 %v2528, %v2560
        %v2593 = vxor.u32 %v2529, %v2561
        %v2594 = vxor.u32 %v2530, %v2562
        %v2595 = vxor.u32 %v2531, %v2563
        %v2596 = vxor.u32 %v2532, %v2564
        %v2597 = vxor.u32 %v2533, %v2565
        %v2598 = vxor.u32 %v2534, %v2566
        %v2599 = vxor.u32 %v2535, %v2567
        %v2600 = vxor.u32 %v2536, %v2568
        %v2601 = vxor.u32 %v2537, %v2569
        %v2602 = vxor.u32 %v2538, %v2570
        %v2603 = vxor.u32 %v2539, %v2571
        %v2604 = vxor.u32 %v2540, %v2572
        %v2605 = vxor.u32 %v2541, %v2573
        %v2606 = vxor.u32 %v2542, %v2574
        %v2607 = vxor.u32 %v2543, %v2575
        %v2608 = vxor.u32 %v2544, %v2576
        %v2609 = vxor.u32 %v2545, %v2577
        %v2610 = vxor.u32 %v2546, %v2578
        %v2611 = vxor.u32 %v2547, %v2579
        %v2612 = vmul.u32 %v2580, 2146121005
        %v2613 = vmul.u32 %v2581, 2146121005
        %v2614 = vmul.u32 %v2582, 2146121005
        %v2615 = vmul.u32 %v2583, 2146121005
        %v2616 = vmul.u32 %v2584, 2146121005
        %v2617 = vmul.u32 %v2585, 2146121005
        %v2618 = vmul.u32 %v2586, 2146121005
        %v2619 = vmul.u32 %v2587, 2146121005
        %v2620 = vmul.u32 %v2588, 2146121005
        %v2621 = vmul.u32 %v2589, 2146121005
        %v2622 = vmul.u32 %v2590, 2146121005
        %v2623 = vmul.u32 %v2591, 2146121005
        %v2624 = vmul.u32 %v2592, 2146121005
        %v2625 = vmul.u32 %v2593, 2146121005
        %v2626 = vmul.u32 %v2594, 2146121005
        %v2627 = vmul.u32 %v2595, 2146121005
        %v2628 = vmul.u32 %v2596, 2146121005
        %v2629 = vmul.u32 %v2597, 2146121005
        %v2630 = vmul.u32 %v2598, 2146121005
        %v2631 = vmul.u32 %v2599, 2146121005
        %v2632 = vmul.u32 %v2600, 2146121005
        %v2633 = vmul.u32 %v2601, 2146121005
        %v2634 = vmul.u32 %v2602, 2146121005
        %v2635 = vmul.u32 %v2603, 2146121005
        %v2636 = vmul.u32 %v2604, 2146121005
        %v2637 = vmul.u32 %v2605, 2146121005
        %v2638 = vmul.u32 %v2606, 2146121005
        %v2639 = vmul.u32 %v2607, 2146121005
        %v2640 = vmul.u32 %v2608, 2146121005
        %v2641 = vmul.u32 %v2609, 2146121005
        %v2642 = vmul.u32 %v2610, 2146121005
        %v2643 = vmul.u32 %v2611, 2146121005
        %v2644 = vshra.s32 %v2612, 13
        %v2645 = vshra.s32 %v2613, 13
        %v2646 = vshra.s32 %v2614, 13
        %v2647 = vshra.s32 %v2615, 13
        %v2648 = vshra.s32 %v2616, 13
        %v2649 = vshra.s32 %v2617, 13
        %v2650 = vshra.s32 %v2618, 13
        %v2651 = vshra.s32 %v2619, 13
        %v2652 = vshra.s32 %v2620, 13
        %v2653 = vshra.s32 %v2621, 13
        %v2654 = vshra.s32 %v2622, 13
        %v2655 = vshra.s32 %v2623, 13
        %v2656 = vshra.s32 %v2624, 13
        %v2657 = vshra.s32 %v2625, 13
        %v2658 = vshra.s32 %v2626, 13
        %v2659 = vshra.s32 %v2627, 13
        %v2660 = vshra.s32 %v2628, 13
        %v2661 = vshra.s32 %v2629, 13
        %v2662 = vshra.s32 %v2630, 13
        %v2663 = vshra.s32 %v2631, 13
        %v2664 = vshra.s32 %v2632, 13
        %v2665 = vshra.s32 %v2633, 13
        %v2666 = vshra.s32 %v2634, 13
        %v2667 = vshra.s32 %v2635, 13
        %v2668 = vshra.s32 %v2636, 13
        %v2669 = vshra.s32 %v2637, 13
        %v2670 = vshra.s32 %v2638, 13
        %v2671 = vshra.s32 %v2639, 13
        %v2672 = vshra.s32 %v2640, 13
        %v2673 = vshra.s32 %v2641, 13
        %v2674 = vshra.s32 %v2642, 13
        %v2675 = vshra.s32 %v2643, 13
        %v2676 = vxor.u32 %v2612, %v2644
        %v2677 = vxor.u32 %v2613, %v2645
        %v2678 = vxor.u32 %v2614, %v2646
        %v2679 = vxor.u32 %v2615, %v2647
        %v2680 = vxor.u32 %v2616, %v2648
        %v2681 = vxor.u32 %v2617, %v2649
        %v2682 = vxor.u32 %v2618, %v2650
        %v2683 = vxor.u32 %v2619, %v2651
        %v2684 = vxor.u32 %v2620, %v2652
        %v2685 = vxor.u32 %v2621, %v2653
        %v2686 = vxor.u32 %v2622, %v2654
        %v2687 = vxor.u32 %v2623, %v2655
        %v2688 = vxor.u32 %v2624, %v2656
        %v2689 = vxor.u32 %v2625, %v2657
        %v2690 = vxor.u32 %v2626, %v2658
        %v2691 = vxor.u32 %v2627, %v2659
        %v2692 = vxor.u32 %v2628, %v2660
        %v2693 = vxor.u32 %v2629, %v2661
        %v2694 = vxor.u32 %v2630, %v2662
        %v2695 = vxor.u32 %v2631, %v2663
        %v2696 = vxor.u32 %v2632, %v2664
        %v2697 = vxor.u32 %v2633, %v2665
        %v2698 = vxor.u32 %v2634, %v2666
        %v2699 = vxor.u32 %v2635, %v2667
        %v2700 = vxor.u32 %v2636, %v2668
        %v2701 = vxor.u32 %v2637, %v2669
        %v2702 = vxor.u32 %v2638, %v2670
        %v2703 = vxor.u32 %v2639, %v2671
        %v2704 = vxor.u32 %v2640, %v2672
        %v2705 = vxor.u32 %v2641, %v2673
        %v2706 = vxor.u32 %v2642, %v2674
        %v2707 = vxor.u32 %v2643, %v2675
        %v2708 = vmul.u32 %v2676, 1779033703
        %v2709 = vmul.u32 %v2677, 1779033703
        %v2710 = vmul.u32 %v2678, 1779033703
        %v2711 = vmul.u32 %v2679, 1779033703
        %v2712 = vmul.u32 %v2680, 1779033703
        %v2713 = vmul.u32 %v2681, 1779033703
        %v2714 = vmul.u32 %v2682, 1779033703
        %v2715 = vmul.u32 %v2683, 1779033703
        %v2716 = vmul.u32 %v2684, 1779033703
        %v2717 = vmul.u32 %v2685, 1779033703
        %v2718 = vmul.u32 %v2686, 1779033703
        %v2719 = vmul.u32 %v2687, 1779033703
        %v2720 = vmul.u32 %v2688, 1779033703
        %v2721 = vmul.u32 %v2689, 1779033703
        %v2722 = vmul.u32 %v2690, 1779033703
        %v2723 = vmul.u32 %v2691, 1779033703
        %v2724 = vmul.u32 %v2692, 1779033703
        %v2725 = vmul.u32 %v2693, 1779033703
        %v2726 = vmul.u32 %v2694, 1779033703
        %v2727 = vmul.u32 %v2695, 1779033703
        %v2728 = vmul.u32 %v2696, 1779033703
        %v2729 = vmul.u32 %v2697, 1779033703
        %v2730 = vmul.u32 %v2698, 1779033703
        %v2731 = vmul.u32 %v2699, 1779033703
        %v2732 = vmul.u32 %v2700, 1779033703
        %v2733 = vmul.u32 %v2701, 1779033703
        %v2734 = vmul.u32 %v2702, 1779033703
        %v2735 = vmul.u32 %v2703, 1779033703
        %v2736 = vmul.u32 %v2704, 1779033703
        %v2737 = vmul.u32 %v2705, 1779033703
        %v2738 = vmul.u32 %v2706, 1779033703
        %v2739 = vmul.u32 %v2707, 1779033703
        %v2740 = vshra.s32 %v2708, 16
        %v2741 = vshra.s32 %v2709, 16
        %v2742 = vshra.s32 %v2710, 16
        %v2743 = vshra.s32 %v2711, 16
        %v2744 = vshra.s32 %v2712, 16
        %v2745 = vshra.s32 %v2713, 16
        %v2746 = vshra.s32 %v2714, 16
        %v2747 = vshra.s32 %v2715, 16
        %v2748 = vshra.s32 %v2716, 16
        %v2749 = vshra.s32 %v2717, 16
        %v2750 = vshra.s32 %v2718, 16
        %v2751 = vshra.s32 %v2719, 16
        %v2752 = vshra.s32 %v2720, 16
        %v2753 = vshra.s32 %v2721, 16
        %v2754 = vshra.s32 %v2722, 16
        %v2755 = vshra.s32 %v2723, 16
        %v2756 = vshra.s32 %v2724, 16
        %v2757 = vshra.s32 %v2725, 16
        %v2758 = vshra.s32 %v2726, 16
        %v2759 = vshra.s32 %v2727, 16
        %v2760 = vshra.s32 %v2728, 16
        %v2761 = vshra.s32 %v2729, 16
        %v2762 = vshra.s32 %v2730, 16
        %v2763 = vshra.s32 %v2731, 16
        %v2764 = vshra.s32 %v2732, 16
        %v2765 = vshra.s32 %v2733, 16
        %v2766 = vshra.s32 %v2734, 16
        %v2767 = vshra.s32 %v2735, 16
        %v2768 = vshra.s32 %v2736, 16
        %v2769 = vshra.s32 %v2737, 16
        %v2770 = vshra.s32 %v2738, 16
        %v2771 = vshra.s32 %v2739, 16
        %v2772 = vxor.u32 %v2708, %v2740
        %v2773 = vxor.u32 %v2709, %v2741
        %v2774 = vxor.u32 %v2710, %v2742
        %v2775 = vxor.u32 %v2711, %v2743
        %v2776 = vxor.u32 %v2712, %v2744
        %v2777 = vxor.u32 %v2713, %v2745
        %v2778 = vxor.u32 %v2714, %v2746
        %v2779 = vxor.u32 %v2715, %v2747
        %v2780 = vxor.u32 %v2716, %v2748
        %v2781 = vxor.u32 %v2717, %v2749
        %v2782 = vxor.u32 %v2718, %v2750
        %v2783 = vxor.u32 %v2719, %v2751
        %v2784 = vxor.u32 %v2720, %v2752
        %v2785 = vxor.u32 %v2721, %v2753
        %v2786 = vxor.u32 %v2722, %v2754
        %v2787 = vxor.u32 %v2723, %v2755
        %v2788 = vxor.u32 %v2724, %v2756
        %v2789 = vxor.u32 %v2725, %v2757
        %v2790 = vxor.u32 %v2726, %v2758
        %v2791 = vxor.u32 %v2727, %v2759
        %v2792 = vxor.u32 %v2728, %v2760
        %v2793 = vxor.u32 %v2729, %v2761
        %v2794 = vxor.u32 %v2730, %v2762
        %v2795 = vxor.u32 %v2731, %v2763
        %v2796 = vxor.u32 %v2732, %v2764
        %v2797 = vxor.u32 %v2733, %v2765
        %v2798 = vxor.u32 %v2734, %v2766
        %v2799 = vxor.u32 %v2735, %v2767
        %v2800 = vxor.u32 %v2736, %v2768
        %v2801 = vxor.u32 %v2737, %v2769
        %v2802 = vxor.u32 %v2738, %v2770
        %v2803 = vxor.u32 %v2739, %v2771
        %v2804 = vshra.s32 %v2772, 8
        %v2805 = vshra.s32 %v2773, 8
        %v2806 = vshra.s32 %v2774, 8
        %v2807 = vshra.s32 %v2775, 8
        %v2808 = vshra.s32 %v2776, 8
        %v2809 = vshra.s32 %v2777, 8
        %v2810 = vshra.s32 %v2778, 8
        %v2811 = vshra.s32 %v2779, 8
        %v2812 = vshra.s32 %v2780, 8
        %v2813 = vshra.s32 %v2781, 8
        %v2814 = vshra.s32 %v2782, 8
        %v2815 = vshra.s32 %v2783, 8
        %v2816 = vshra.s32 %v2784, 8
        %v2817 = vshra.s32 %v2785, 8
        %v2818 = vshra.s32 %v2786, 8
        %v2819 = vshra.s32 %v2787, 8
        %v2820 = vshra.s32 %v2788, 8
        %v2821 = vshra.s32 %v2789, 8
        %v2822 = vshra.s32 %v2790, 8
        %v2823 = vshra.s32 %v2791, 8
        %v2824 = vshra.s32 %v2792, 8
        %v2825 = vshra.s32 %v2793, 8
        %v2826 = vshra.s32 %v2794, 8
        %v2827 = vshra.s32 %v2795, 8
        %v2828 = vshra.s32 %v2796, 8
        %v2829 = vshra.s32 %v2797, 8
        %v2830 = vshra.s32 %v2798, 8
        %v2831 = vshra.s32 %v2799, 8
        %v2832 = vshra.s32 %v2800, 8
        %v2833 = vshra.s32 %v2801, 8
        %v2834 = vshra.s32 %v2802, 8
        %v2835 = vshra.s32 %v2803, 8
        %v2836 = vand.u32 %v2804, 1
        %v2837 = vand.u32 %v2805, 1
        %v2838 = vand.u32 %v2806, 1
        %v2839 = vand.u32 %v2807, 1
        %v2840 = vand.u32 %v2808, 1
        %v2841 = vand.u32 %v2809, 1
        %v2842 = vand.u32 %v2810, 1
        %v2843 = vand.u32 %v2811, 1
        %v2844 = vand.u32 %v2812, 1
        %v2845 = vand.u32 %v2813, 1
        %v2846 = vand.u32 %v2814, 1
        %v2847 = vand.u32 %v2815, 1
        %v2848 = vand.u32 %v2816, 1
        %v2849 = vand.u32 %v2817, 1
        %v2850 = vand.u32 %v2818, 1
        %v2851 = vand.u32 %v2819, 1
        %v2852 = vand.u32 %v2820, 1
        %v2853 = vand.u32 %v2821, 1
        %v2854 = vand.u32 %v2822, 1
        %v2855 = vand.u32 %v2823, 1
        %v2856 = vand.u32 %v2824, 1
        %v2857 = vand.u32 %v2825, 1
        %v2858 = vand.u32 %v2826, 1
        %v2859 = vand.u32 %v2827, 1
        %v2860 = vand.u32 %v2828, 1
        %v2861 = vand.u32 %v2829, 1
        %v2862 = vand.u32 %v2830, 1
        %v2863 = vand.u32 %v2831, 1
        %v2864 = vand.u32 %v2832, 1
        %v2865 = vand.u32 %v2833, 1
        %v2866 = vand.u32 %v2834, 1
        %v2867 = vand.u32 %v2835, 1
        %vm2868 = vcmp.eq.s32.totalorder %v2836, 0
        %vm2869 = vcmp.eq.s32.totalorder %v2837, 0
        %vm2870 = vcmp.eq.s32.totalorder %v2838, 0
        %vm2871 = vcmp.eq.s32.totalorder %v2839, 0
        %vm2872 = vcmp.eq.s32.totalorder %v2840, 0
        %vm2873 = vcmp.eq.s32.totalorder %v2841, 0
        %vm2874 = vcmp.eq.s32.totalorder %v2842, 0
        %vm2875 = vcmp.eq.s32.totalorder %v2843, 0
        %vm2876 = vcmp.eq.s32.totalorder %v2844, 0
        %vm2877 = vcmp.eq.s32.totalorder %v2845, 0
        %vm2878 = vcmp.eq.s32.totalorder %v2846, 0
        %vm2879 = vcmp.eq.s32.totalorder %v2847, 0
        %vm2880 = vcmp.eq.s32.totalorder %v2848, 0
        %vm2881 = vcmp.eq.s32.totalorder %v2849, 0
        %vm2882 = vcmp.eq.s32.totalorder %v2850, 0
        %vm2883 = vcmp.eq.s32.totalorder %v2851, 0
        %vm2884 = vcmp.eq.s32.totalorder %v2852, 0
        %vm2885 = vcmp.eq.s32.totalorder %v2853, 0
        %vm2886 = vcmp.eq.s32.totalorder %v2854, 0
        %vm2887 = vcmp.eq.s32.totalorder %v2855, 0
        %vm2888 = vcmp.eq.s32.totalorder %v2856, 0
        %vm2889 = vcmp.eq.s32.totalorder %v2857, 0
        %vm2890 = vcmp.eq.s32.totalorder %v2858, 0
        %vm2891 = vcmp.eq.s32.totalorder %v2859, 0
        %vm2892 = vcmp.eq.s32.totalorder %v2860, 0
        %vm2893 = vcmp.eq.s32.totalorder %v2861, 0
        %vm2894 = vcmp.eq.s32.totalorder %v2862, 0
        %vm2895 = vcmp.eq.s32.totalorder %v2863, 0
        %vm2896 = vcmp.eq.s32.totalorder %v2864, 0
        %vm2897 = vcmp.eq.s32.totalorder %v2865, 0
        %vm2898 = vcmp.eq.s32.totalorder %v2866, 0
        %vm2899 = vcmp.eq.s32.totalorder %v2867, 0
        %v2900 = vmax.f32 %v2438, 0.0
        %v2901 = vmax.f32 %v2440, 0.0
        %v2902 = vmax.f32 %v2442, 0.0
        %v2903 = vmax.f32 %v2444, 0.0
        %v2904 = vmax.f32 %v2448, 0.0
        %v2905 = vmax.f32 %v2450, 0.0
        %v2906 = vmax.f32 %v2452, 0.0
        %v2907 = vmax.f32 %v2454, 0.0
        %v2908 = vmax.f32 %v2458, 0.0
        %v2909 = vmax.f32 %v2460, 0.0
        %v2910 = vmax.f32 %v2462, 0.0
        %v2911 = vmax.f32 %v2464, 0.0
        %v2912 = vmax.f32 %v2468, 0.0
        %v2913 = vmax.f32 %v2470, 0.0
        %v2914 = vmax.f32 %v2472, 0.0
        %v2915 = vmax.f32 %v2474, 0.0
        %v2916 = vmax.f32 %v2478, 0.0
        %v2917 = vmax.f32 %v2480, 0.0
        %v2918 = vmax.f32 %v2482, 0.0
        %v2919 = vmax.f32 %v2484, 0.0
        %v2920 = vmax.f32 %v2488, 0.0
        %v2921 = vmax.f32 %v2490, 0.0
        %v2922 = vmax.f32 %v2492, 0.0
        %v2923 = vmax.f32 %v2494, 0.0
        %v2924 = vmax.f32 %v2498, 0.0
        %v2925 = vmax.f32 %v2500, 0.0
        %v2926 = vmax.f32 %v2502, 0.0
        %v2927 = vmax.f32 %v2504, 0.0
        %v2928 = vmax.f32 %v2508, 0.0
        %v2929 = vmax.f32 %v2510, 0.0
        %v2930 = vmax.f32 %v2512, 0.0
        %v2931 = vmax.f32 %v2514, 0.0
        %v2932 = vsel %vm2868, %v2900, 0.0
        %v2933 = vsel %vm2869, %v2901, 0.0
        %v2934 = vsel %vm2870, %v2902, 0.0
        %v2935 = vsel %vm2871, %v2903, 0.0
        %v2936 = vsel %vm2872, %v2904, 0.0
        %v2937 = vsel %vm2873, %v2905, 0.0
        %v2938 = vsel %vm2874, %v2906, 0.0
        %v2939 = vsel %vm2875, %v2907, 0.0
        %v2940 = vsel %vm2876, %v2908, 0.0
        %v2941 = vsel %vm2877, %v2909, 0.0
        %v2942 = vsel %vm2878, %v2910, 0.0
        %v2943 = vsel %vm2879, %v2911, 0.0
        %v2944 = vsel %vm2880, %v2912, 0.0
        %v2945 = vsel %vm2881, %v2913, 0.0
        %v2946 = vsel %vm2882, %v2914, 0.0
        %v2947 = vsel %vm2883, %v2915, 0.0
        %v2948 = vsel %vm2884, %v2916, 0.0
        %v2949 = vsel %vm2885, %v2917, 0.0
        %v2950 = vsel %vm2886, %v2918, 0.0
        %v2951 = vsel %vm2887, %v2919, 0.0
        %v2952 = vsel %vm2888, %v2920, 0.0
        %v2953 = vsel %vm2889, %v2921, 0.0
        %v2954 = vsel %vm2890, %v2922, 0.0
        %v2955 = vsel %vm2891, %v2923, 0.0
        %v2956 = vsel %vm2892, %v2924, 0.0
        %v2957 = vsel %vm2893, %v2925, 0.0
        %v2958 = vsel %vm2894, %v2926, 0.0
        %v2959 = vsel %vm2895, %v2927, 0.0
        %v2960 = vsel %vm2896, %v2928, 0.0
        %v2961 = vsel %vm2897, %v2929, 0.0
        %v2962 = vsel %vm2898, %v2930, 0.0
        %v2963 = vsel %vm2899, %v2931, 0.0
        %v2964 = vpack.c.bf16 %v2934, %v2932
        %v2965 = vpack.c.bf16 %v2935, %v2933
        %v2966 = vpack.c.bf16 %v2938, %v2936
        %v2967 = vpack.c.bf16 %v2939, %v2937
        %v2968 = vpack.c.bf16 %v2942, %v2940
        %v2969 = vpack.c.bf16 %v2943, %v2941
        %v2970 = vpack.c.bf16 %v2946, %v2944
        %v2971 = vpack.c.bf16 %v2947, %v2945
        %v2972 = vpack.c.bf16 %v2950, %v2948
        %v2973 = vpack.c.bf16 %v2951, %v2949
        %v2974 = vpack.c.bf16 %v2954, %v2952
        %v2975 = vpack.c.bf16 %v2955, %v2953
        %v2976 = vpack.c.bf16 %v2958, %v2956
        %v2977 = vpack.c.bf16 %v2959, %v2957
        %v2978 = vpack.c.bf16 %v2962, %v2960
        %v2979 = vpack.c.bf16 %v2963, %v2961
        %v2980 = vld [vmem:[#allocation11] sm:$0xf]
        %v2981 = vld [vmem:[#allocation11 + $0x4] sm:$0xf]
        %v2982 = vld [vmem:[#allocation11 + $0x8] sm:$0xf]
        %v2983 = vld [vmem:[#allocation11 + $0xc] sm:$0xf]
        %v2984 = vld [vmem:[#allocation11 + $0x10] sm:$0xf]
        %v2985 = vld [vmem:[#allocation11 + $0x14] sm:$0xf]
        %v2986 = vld [vmem:[#allocation11 + $0x18] sm:$0xf]
        %v2987 = vld [vmem:[#allocation11 + $0x1c] sm:$0xf]
        %v2988 = vld [vmem:[#allocation11 + $0x20] sm:$0xf]
        %v2989 = vld [vmem:[#allocation11 + $0x24] sm:$0xf]
        %v2990 = vld [vmem:[#allocation11 + $0x28] sm:$0xf]
        %v2991 = vld [vmem:[#allocation11 + $0x2c] sm:$0xf]
        %v2992 = vld [vmem:[#allocation11 + $0x30] sm:$0xf]
        %v2993 = vld [vmem:[#allocation11 + $0x34] sm:$0xf]
        %v2994 = vld [vmem:[#allocation11 + $0x38] sm:$0xf]
        %v2995 = vld [vmem:[#allocation11 + $0x3c] sm:$0xf]
        %v2996 = vld [vmem:[#allocation11 + $0x40] sm:$0xf]
        %v2997 = vld [vmem:[#allocation11 + $0x44] sm:$0xf]
        %v2998 = vld [vmem:[#allocation11 + $0x48] sm:$0xf]
        %v2999 = vld [vmem:[#allocation11 + $0x4c] sm:$0xf]
        %v3000 = vld [vmem:[#allocation11 + $0x50] sm:$0xf]
        %v3001 = vld [vmem:[#allocation11 + $0x54] sm:$0xf]
        %v3002 = vld [vmem:[#allocation11 + $0x58] sm:$0xf]
        %v3003 = vld [vmem:[#allocation11 + $0x5c] sm:$0xf]
        %v3004 = vld [vmem:[#allocation11 + $0x60] sm:$0xf]
        %v3005 = vld [vmem:[#allocation11 + $0x64] sm:$0xf]
        %v3006 = vld [vmem:[#allocation11 + $0x68] sm:$0xf]
        %v3007 = vld [vmem:[#allocation11 + $0x6c] sm:$0xf]
        %v3008 = vld [vmem:[#allocation11 + $0x70] sm:$0xf]
        %v3009 = vld [vmem:[#allocation11 + $0x74] sm:$0xf]
        %v3010 = vld [vmem:[#allocation11 + $0x78] sm:$0xf]
        %v3011 = vld [vmem:[#allocation11 + $0x7c] sm:$0xf]
        %v3012 = vld [vmem:[%s9] sm:$0x1]
        %v3014 = vlaneseq
        %v3015 = vshrl.u32 %v3014, 7
        %v3016 = vsub.s32 0, %v3015
        %v3017 = vrot.slane %v3012, %v3016
        %v3051 = vunpack.c.l.b16 %v2980
        %v3052 = vunpack.c.l.b16 %v2981
        %v3053 = vunpack.c.l.b16 %v2982
        %v3054 = vunpack.c.l.b16 %v2983
        %v3055 = vunpack.c.l.b16 %v2984
        %v3056 = vunpack.c.l.b16 %v2985
        %v3057 = vunpack.c.l.b16 %v2986
        %v3058 = vunpack.c.l.b16 %v2987
        %v3059 = vunpack.c.l.b16 %v2988
        %v3060 = vunpack.c.l.b16 %v2989
        %v3061 = vunpack.c.l.b16 %v2990
        %v3062 = vunpack.c.l.b16 %v2991
        %v3063 = vunpack.c.l.b16 %v2992
        %v3064 = vunpack.c.l.b16 %v2993
        %v3065 = vunpack.c.l.b16 %v2994
        %v3066 = vunpack.c.l.b16 %v2995
        %v3067 = vunpack.c.l.b16 %v2996
        %v3068 = vunpack.c.l.b16 %v2997
        %v3069 = vunpack.c.l.b16 %v2998
        %v3070 = vunpack.c.l.b16 %v2999
        %v3071 = vunpack.c.l.b16 %v3000
        %v3072 = vunpack.c.l.b16 %v3001
        %v3073 = vunpack.c.l.b16 %v3002
        %v3074 = vunpack.c.l.b16 %v3003
        %v3075 = vunpack.c.l.b16 %v3004
        %v3076 = vunpack.c.l.b16 %v3005
        %v3077 = vunpack.c.l.b16 %v3006
        %v3078 = vunpack.c.l.b16 %v3007
        %v3079 = vunpack.c.l.b16 %v3008
        %v3080 = vunpack.c.l.b16 %v3009
        %v3081 = vunpack.c.l.b16 %v3010
        %v3082 = vunpack.c.l.b16 %v3011
        %v3083 = vpack.c.b16 %v3052, %v3051
        %v3084 = vpack.c.b16 %v3054, %v3053
        %v3085 = vpack.c.b16 %v3056, %v3055
        %v3086 = vpack.c.b16 %v3058, %v3057
        %v3087 = vpack.c.b16 %v3060, %v3059
        %v3088 = vpack.c.b16 %v3062, %v3061
        %v3089 = vpack.c.b16 %v3064, %v3063
        %v3090 = vpack.c.b16 %v3066, %v3065
        %v3091 = vpack.c.b16 %v3068, %v3067
        %v3092 = vpack.c.b16 %v3070, %v3069
        %v3093 = vpack.c.b16 %v3072, %v3071
        %v3094 = vpack.c.b16 %v3074, %v3073
        %v3095 = vpack.c.b16 %v3076, %v3075
        %v3096 = vpack.c.b16 %v3078, %v3077
        %v3097 = vpack.c.b16 %v3080, %v3079
        %v3098 = vpack.c.b16 %v3082, %v3081
        %3115 = vmatprep.subr.bf16.mxu0 0
        %3116 = vmatpush1.bf16.msra.mxu0 %v3090
        %3117 = vmatprep.subr.bf16.mxu0 0
        %3118 = vmatpush1.bf16.msra.mxu0 %v3089
        %3119 = vmatprep.subr.bf16.mxu0 0
        %3120 = vmatpush1.bf16.msra.mxu0 %v3088
        %3121 = vmatprep.subr.bf16.mxu0 0
        %3122 = vmatpush1.bf16.msra.mxu0 %v3087
        %3123 = vmatprep.subr.bf16.mxu0 0
        %3124 = vmatpush1.bf16.msra.mxu0 %v3086
        %3125 = vmatprep.subr.bf16.mxu0 0
        %3126 = vmatpush1.bf16.msra.mxu0 %v3085
        %3127 = vmatprep.subr.bf16.mxu0 0
        %3128 = vmatpush1.bf16.msra.mxu0 %v3084
        %3129 = vmatprep.subr.bf16.mxu0 0
        %3130 = vmatpush1.bf16.msra.mxu0 %v3083
        %3131 = vmatprep.subr.bf16.mxu0 0
        %3132 = vmatpush2.bf16.msra.mxu0 %v3098
        %3133 = vmatprep.subr.bf16.mxu0 0
        %3134 = vmatpush2.bf16.msra.mxu0 %v3097
        %3135 = vmatprep.subr.bf16.mxu0 0
        %3136 = vmatpush2.bf16.msra.mxu0 %v3096
        %3137 = vmatprep.subr.bf16.mxu0 0
        %3138 = vmatpush2.bf16.msra.mxu0 %v3095
        %3139 = vmatprep.subr.bf16.mxu0 0
        %3140 = vmatpush2.bf16.msra.mxu0 %v3094
        %3141 = vmatprep.subr.bf16.mxu0 0
        %3142 = vmatpush2.bf16.msra.mxu0 %v3093
        %3143 = vmatprep.subr.bf16.mxu0 0
        %3144 = vmatpush2.bf16.msra.mxu0 %v3092
        %3145 = vmatprep.subr.bf16.mxu0 0
        %3146 = vmatpush2.bf16.msra.mxu0 %v3091
        %3147 = vmatprep.mubr.bf16.mxu0 %v2965
        %3148 = vmatmul.mubr.bf16.gmra.mxu0 %v2964
        %v3149 = vpop.f32.mrf.mxu0
        %v3150 = vadd.f32 %v3017, %v3149
        %v3151 = vpop.f32.mrf.mxu0
        %v3152 = vpop.f32.mrf.mxu0
        %v3153 = vadd.f32 %v3017, %v3152
        %v3154 = vpop.f32.mrf.mxu0
        %3155 = vmatprep.mubr.bf16.mxu0 %v2967
        %3156 = vmatmul.mubr.bf16.gmra.mxu0 %v2966
        %v3157 = vpop.f32.mrf.mxu0
        %v3158 = vadd.f32 %v3017, %v3157
        %v3159 = vpop.f32.mrf.mxu0
        %v3160 = vpop.f32.mrf.mxu0
        %v3161 = vadd.f32 %v3017, %v3160
        %v3162 = vpop.f32.mrf.mxu0
        %3163 = vmatprep.mubr.bf16.mxu0 %v2969
        %3164 = vmatmul.mubr.bf16.gmra.mxu0 %v2968
        %v3165 = vpop.f32.mrf.mxu0
        %v3166 = vadd.f32 %v3017, %v3165
        %v3167 = vpop.f32.mrf.mxu0
        %v3168 = vpop.f32.mrf.mxu0
        %v3169 = vadd.f32 %v3017, %v3168
        %v3170 = vpop.f32.mrf.mxu0
        %3171 = vmatprep.mubr.bf16.mxu0 %v2971
        %3172 = vmatmul.mubr.bf16.gmra.mxu0 %v2970
        %v3173 = vpop.f32.mrf.mxu0
        %v3174 = vadd.f32 %v3017, %v3173
        %v3175 = vpop.f32.mrf.mxu0
        %v3176 = vpop.f32.mrf.mxu0
        %v3177 = vadd.f32 %v3017, %v3176
        %v3178 = vpop.f32.mrf.mxu0
        %3179 = vmatprep.mubr.bf16.mxu0 %v2973
        %3180 = vmatmul.mubr.bf16.gmra.mxu0 %v2972
        %v3181 = vpop.f32.mrf.mxu0
        %v3182 = vadd.f32 %v3017, %v3181
        %v3183 = vpop.f32.mrf.mxu0
        %v3184 = vpop.f32.mrf.mxu0
        %v3185 = vadd.f32 %v3017, %v3184
        %v3186 = vpop.f32.mrf.mxu0
        %3187 = vmatprep.mubr.bf16.mxu0 %v2975
        %3188 = vmatmul.mubr.bf16.gmra.mxu0 %v2974
        %v3189 = vpop.f32.mrf.mxu0
        %v3190 = vadd.f32 %v3017, %v3189
        %v3191 = vpop.f32.mrf.mxu0
        %v3192 = vpop.f32.mrf.mxu0
        %v3193 = vadd.f32 %v3017, %v3192
        %v3194 = vpop.f32.mrf.mxu0
        %3195 = vmatprep.mubr.bf16.mxu0 %v2977
        %3196 = vmatmul.mubr.bf16.gmra.mxu0 %v2976
        %v3197 = vpop.f32.mrf.mxu0
        %v3198 = vadd.f32 %v3017, %v3197
        %v3199 = vpop.f32.mrf.mxu0
        %v3200 = vpop.f32.mrf.mxu0
        %v3201 = vadd.f32 %v3017, %v3200
        %v3202 = vpop.f32.mrf.mxu0
        %3203 = vmatprep.mubr.bf16.mxu0 %v2979
        %3204 = vmatmul.mubr.bf16.gmra.mxu0 %v2978
        %v3205 = vpop.f32.mrf.mxu0
        %v3206 = vadd.f32 %v3017, %v3205
        %v3207 = vpop.f32.mrf.mxu0
        %v3208 = vpop.f32.mrf.mxu0
        %v3209 = vadd.f32 %v3017, %v3208
        %v3210 = vpop.f32.mrf.mxu0
        %3211 = vdwg.mxu0
        %v3212 = vadd.s32 %v1232, 663608940
        %v3213 = vadd.s32 %v1233, 663608940
        %v3214 = vadd.s32 %v1234, 663608940
        %v3215 = vadd.s32 %v1235, 663608940
        %v3216 = vadd.s32 %v1236, 663608940
        %v3217 = vadd.s32 %v1237, 663608940
        %v3218 = vadd.s32 %v1238, 663608940
        %v3219 = vadd.s32 %v1239, 663608940
        %v3220 = vadd.s32 %v1240, 663608940
        %v3221 = vadd.s32 %v1241, 663608940
        %v3222 = vadd.s32 %v1242, 663608940
        %v3223 = vadd.s32 %v1243, 663608940
        %v3224 = vadd.s32 %v1244, 663608940
        %v3225 = vadd.s32 %v1245, 663608940
        %v3226 = vadd.s32 %v1246, 663608940
        %v3227 = vadd.s32 %v1247, 663608940
        %v3228 = vshra.s32 %v3212, 15
        %v3229 = vshra.s32 %v3213, 15
        %v3230 = vshra.s32 %v3214, 15
        %v3231 = vshra.s32 %v3215, 15
        %v3232 = vshra.s32 %v3216, 15
        %v3233 = vshra.s32 %v3217, 15
        %v3234 = vshra.s32 %v3218, 15
        %v3235 = vshra.s32 %v3219, 15
        %v3236 = vshra.s32 %v3220, 15
        %v3237 = vshra.s32 %v3221, 15
        %v3238 = vshra.s32 %v3222, 15
        %v3239 = vshra.s32 %v3223, 15
        %v3240 = vshra.s32 %v3224, 15
        %v3241 = vshra.s32 %v3225, 15
        %v3242 = vshra.s32 %v3226, 15
        %v3243 = vshra.s32 %v3227, 15
        %v3244 = vxor.u32 %v3212, %v3228
        %v3245 = vxor.u32 %v3213, %v3229
        %v3246 = vxor.u32 %v3214, %v3230
        %v3247 = vxor.u32 %v3215, %v3231
        %v3248 = vxor.u32 %v3216, %v3232
        %v3249 = vxor.u32 %v3217, %v3233
        %v3250 = vxor.u32 %v3218, %v3234
        %v3251 = vxor.u32 %v3219, %v3235
        %v3252 = vxor.u32 %v3220, %v3236
        %v3253 = vxor.u32 %v3221, %v3237
        %v3254 = vxor.u32 %v3222, %v3238
        %v3255 = vxor.u32 %v3223, %v3239
        %v3256 = vxor.u32 %v3224, %v3240
        %v3257 = vxor.u32 %v3225, %v3241
        %v3258 = vxor.u32 %v3226, %v3242
        %v3259 = vxor.u32 %v3227, %v3243
        %v3260 = vmul.u32 %v3244, 2146121005
        %v3261 = vmul.u32 %v3245, 2146121005
        %v3262 = vmul.u32 %v3246, 2146121005
        %v3263 = vmul.u32 %v3247, 2146121005
        %v3264 = vmul.u32 %v3248, 2146121005
        %v3265 = vmul.u32 %v3249, 2146121005
        %v3266 = vmul.u32 %v3250, 2146121005
        %v3267 = vmul.u32 %v3251, 2146121005
        %v3268 = vmul.u32 %v3252, 2146121005
        %v3269 = vmul.u32 %v3253, 2146121005
        %v3270 = vmul.u32 %v3254, 2146121005
        %v3271 = vmul.u32 %v3255, 2146121005
        %v3272 = vmul.u32 %v3256, 2146121005
        %v3273 = vmul.u32 %v3257, 2146121005
        %v3274 = vmul.u32 %v3258, 2146121005
        %v3275 = vmul.u32 %v3259, 2146121005
        %v3276 = vshra.s32 %v3260, 13
        %v3277 = vshra.s32 %v3261, 13
        %v3278 = vshra.s32 %v3262, 13
        %v3279 = vshra.s32 %v3263, 13
        %v3280 = vshra.s32 %v3264, 13
        %v3281 = vshra.s32 %v3265, 13
        %v3282 = vshra.s32 %v3266, 13
        %v3283 = vshra.s32 %v3267, 13
        %v3284 = vshra.s32 %v3268, 13
        %v3285 = vshra.s32 %v3269, 13
        %v3286 = vshra.s32 %v3270, 13
        %v3287 = vshra.s32 %v3271, 13
        %v3288 = vshra.s32 %v3272, 13
        %v3289 = vshra.s32 %v3273, 13
        %v3290 = vshra.s32 %v3274, 13
        %v3291 = vshra.s32 %v3275, 13
        %v3292 = vxor.u32 %v3260, %v3276
        %v3293 = vxor.u32 %v3261, %v3277
        %v3294 = vxor.u32 %v3262, %v3278
        %v3295 = vxor.u32 %v3263, %v3279
        %v3296 = vxor.u32 %v3264, %v3280
        %v3297 = vxor.u32 %v3265, %v3281
        %v3298 = vxor.u32 %v3266, %v3282
        %v3299 = vxor.u32 %v3267, %v3283
        %v3300 = vxor.u32 %v3268, %v3284
        %v3301 = vxor.u32 %v3269, %v3285
        %v3302 = vxor.u32 %v3270, %v3286
        %v3303 = vxor.u32 %v3271, %v3287
        %v3304 = vxor.u32 %v3272, %v3288
        %v3305 = vxor.u32 %v3273, %v3289
        %v3306 = vxor.u32 %v3274, %v3290
        %v3307 = vxor.u32 %v3275, %v3291
        %v3308 = vmul.u32 %v3292, 1779033703
        %v3309 = vmul.u32 %v3293, 1779033703
        %v3310 = vmul.u32 %v3294, 1779033703
        %v3311 = vmul.u32 %v3295, 1779033703
        %v3312 = vmul.u32 %v3296, 1779033703
        %v3313 = vmul.u32 %v3297, 1779033703
        %v3314 = vmul.u32 %v3298, 1779033703
        %v3315 = vmul.u32 %v3299, 1779033703
        %v3316 = vmul.u32 %v3300, 1779033703
        %v3317 = vmul.u32 %v3301, 1779033703
        %v3318 = vmul.u32 %v3302, 1779033703
        %v3319 = vmul.u32 %v3303, 1779033703
        %v3320 = vmul.u32 %v3304, 1779033703
        %v3321 = vmul.u32 %v3305, 1779033703
        %v3322 = vmul.u32 %v3306, 1779033703
        %v3323 = vmul.u32 %v3307, 1779033703
        %v3324 = vshra.s32 %v3308, 16
        %v3325 = vshra.s32 %v3309, 16
        %v3326 = vshra.s32 %v3310, 16
        %v3327 = vshra.s32 %v3311, 16
        %v3328 = vshra.s32 %v3312, 16
        %v3329 = vshra.s32 %v3313, 16
        %v3330 = vshra.s32 %v3314, 16
        %v3331 = vshra.s32 %v3315, 16
        %v3332 = vshra.s32 %v3316, 16
        %v3333 = vshra.s32 %v3317, 16
        %v3334 = vshra.s32 %v3318, 16
        %v3335 = vshra.s32 %v3319, 16
        %v3336 = vshra.s32 %v3320, 16
        %v3337 = vshra.s32 %v3321, 16
        %v3338 = vshra.s32 %v3322, 16
        %v3339 = vshra.s32 %v3323, 16
        %v3340 = vxor.u32 %v3308, %v3324
        %v3341 = vxor.u32 %v3309, %v3325
        %v3342 = vxor.u32 %v3310, %v3326
        %v3343 = vxor.u32 %v3311, %v3327
        %v3344 = vxor.u32 %v3312, %v3328
        %v3345 = vxor.u32 %v3313, %v3329
        %v3346 = vxor.u32 %v3314, %v3330
        %v3347 = vxor.u32 %v3315, %v3331
        %v3348 = vxor.u32 %v3316, %v3332
        %v3349 = vxor.u32 %v3317, %v3333
        %v3350 = vxor.u32 %v3318, %v3334
        %v3351 = vxor.u32 %v3319, %v3335
        %v3352 = vxor.u32 %v3320, %v3336
        %v3353 = vxor.u32 %v3321, %v3337
        %v3354 = vxor.u32 %v3322, %v3338
        %v3355 = vxor.u32 %v3323, %v3339
        %v3356 = vshra.s32 %v3340, 8
        %v3357 = vshra.s32 %v3341, 8
        %v3358 = vshra.s32 %v3342, 8
        %v3359 = vshra.s32 %v3343, 8
        %v3360 = vshra.s32 %v3344, 8
        %v3361 = vshra.s32 %v3345, 8
        %v3362 = vshra.s32 %v3346, 8
        %v3363 = vshra.s32 %v3347, 8
        %v3364 = vshra.s32 %v3348, 8
        %v3365 = vshra.s32 %v3349, 8
        %v3366 = vshra.s32 %v3350, 8
        %v3367 = vshra.s32 %v3351, 8
        %v3368 = vshra.s32 %v3352, 8
        %v3369 = vshra.s32 %v3353, 8
        %v3370 = vshra.s32 %v3354, 8
        %v3371 = vshra.s32 %v3355, 8
        %v3372 = vand.u32 %v3356, 1
        %v3373 = vand.u32 %v3357, 1
        %v3374 = vand.u32 %v3358, 1
        %v3375 = vand.u32 %v3359, 1
        %v3376 = vand.u32 %v3360, 1
        %v3377 = vand.u32 %v3361, 1
        %v3378 = vand.u32 %v3362, 1
        %v3379 = vand.u32 %v3363, 1
        %v3380 = vand.u32 %v3364, 1
        %v3381 = vand.u32 %v3365, 1
        %v3382 = vand.u32 %v3366, 1
        %v3383 = vand.u32 %v3367, 1
        %v3384 = vand.u32 %v3368, 1
        %v3385 = vand.u32 %v3369, 1
        %v3386 = vand.u32 %v3370, 1
        %v3387 = vand.u32 %v3371, 1
        %vm3388 = vcmp.eq.s32.totalorder %v3372, 0
        %vm3389 = vcmp.eq.s32.totalorder %v3373, 0
        %vm3390 = vcmp.eq.s32.totalorder %v3374, 0
        %vm3391 = vcmp.eq.s32.totalorder %v3375, 0
        %vm3392 = vcmp.eq.s32.totalorder %v3376, 0
        %vm3393 = vcmp.eq.s32.totalorder %v3377, 0
        %vm3394 = vcmp.eq.s32.totalorder %v3378, 0
        %vm3395 = vcmp.eq.s32.totalorder %v3379, 0
        %vm3396 = vcmp.eq.s32.totalorder %v3380, 0
        %vm3397 = vcmp.eq.s32.totalorder %v3381, 0
        %vm3398 = vcmp.eq.s32.totalorder %v3382, 0
        %vm3399 = vcmp.eq.s32.totalorder %v3383, 0
        %vm3400 = vcmp.eq.s32.totalorder %v3384, 0
        %vm3401 = vcmp.eq.s32.totalorder %v3385, 0
        %vm3402 = vcmp.eq.s32.totalorder %v3386, 0
        %vm3403 = vcmp.eq.s32.totalorder %v3387, 0
        %v3404 = vmax.f32 %v3150, 0.0
        %v3405 = vmax.f32 %v3153, 0.0
        %v3406 = vmax.f32 %v3158, 0.0
        %v3407 = vmax.f32 %v3161, 0.0
        %v3408 = vmax.f32 %v3166, 0.0
        %v3409 = vmax.f32 %v3169, 0.0
        %v3410 = vmax.f32 %v3174, 0.0
        %v3411 = vmax.f32 %v3177, 0.0
        %v3412 = vmax.f32 %v3182, 0.0
        %v3413 = vmax.f32 %v3185, 0.0
        %v3414 = vmax.f32 %v3190, 0.0
        %v3415 = vmax.f32 %v3193, 0.0
        %v3416 = vmax.f32 %v3198, 0.0
        %v3417 = vmax.f32 %v3201, 0.0
        %v3418 = vmax.f32 %v3206, 0.0
        %v3419 = vmax.f32 %v3209, 0.0
        %v3420 = vsel %vm3388, %v3404, 0.0
        %v3421 = vsel %vm3389, %v3405, 0.0
        %v3422 = vsel %vm3390, %v3406, 0.0
        %v3423 = vsel %vm3391, %v3407, 0.0
        %v3424 = vsel %vm3392, %v3408, 0.0
        %v3425 = vsel %vm3393, %v3409, 0.0
        %v3426 = vsel %vm3394, %v3410, 0.0
        %v3427 = vsel %vm3395, %v3411, 0.0
        %v3428 = vsel %vm3396, %v3412, 0.0
        %v3429 = vsel %vm3397, %v3413, 0.0
        %v3430 = vsel %vm3398, %v3414, 0.0
        %v3431 = vsel %vm3399, %v3415, 0.0
        %v3432 = vsel %vm3400, %v3416, 0.0
        %v3433 = vsel %vm3401, %v3417, 0.0
        %v3434 = vsel %vm3402, %v3418, 0.0
        %v3435 = vsel %vm3403, %v3419, 0.0
        %v3436 = vpack.c.bf16 %v3421, %v3420
        %v3437 = vpack.c.bf16 %v3423, %v3422
        %v3438 = vpack.c.bf16 %v3425, %v3424
        %v3439 = vpack.c.bf16 %v3427, %v3426
        %v3440 = vpack.c.bf16 %v3429, %v3428
        %v3441 = vpack.c.bf16 %v3431, %v3430
        %v3442 = vpack.c.bf16 %v3433, %v3432
        %v3443 = vpack.c.bf16 %v3435, %v3434
        %v3444 = vld [vmem:[#allocation12] sm:$0xf]
        %v3445 = vld [vmem:[#allocation12 + $0x4] sm:$0xf]
        %v3446 = vld [vmem:[#allocation12 + $0x8] sm:$0xf]
        %v3447 = vld [vmem:[#allocation12 + $0xc] sm:$0xf]
        %v3448 = vld [vmem:[#allocation12 + $0x10] sm:$0xf]
        %v3449 = vld [vmem:[#allocation12 + $0x14] sm:$0xf]
        %v3450 = vld [vmem:[#allocation12 + $0x18] sm:$0xf]
        %v3451 = vld [vmem:[#allocation12 + $0x1c] sm:$0xf]
        %v3452 = vld [vmem:[#allocation12 + $0x20] sm:$0xf]
        %v3453 = vld [vmem:[#allocation12 + $0x24] sm:$0xf]
        %v3454 = vld [vmem:[#allocation12 + $0x28] sm:$0xf]
        %v3455 = vld [vmem:[#allocation12 + $0x2c] sm:$0xf]
        %v3456 = vld [vmem:[#allocation12 + $0x30] sm:$0xf]
        %v3457 = vld [vmem:[#allocation12 + $0x34] sm:$0xf]
        %v3458 = vld [vmem:[#allocation12 + $0x38] sm:$0xf]
        %v3459 = vld [vmem:[#allocation12 + $0x3c] sm:$0xf]
        %v3460 = vld [vmem:[%s11] sm:$0x1]
        %v3462 = vlaneseq
        %v3463 = vshrl.u32 %v3462, 7
        %v3464 = vsub.s32 0, %v3463
        %v3465 = vrot.slane %v3460, %v3464
        %v3483 = vunpack.c.l.b16 %v3444
        %v3484 = vunpack.c.l.b16 %v3445
        %v3485 = vunpack.c.l.b16 %v3446
        %v3486 = vunpack.c.l.b16 %v3447
        %v3487 = vunpack.c.l.b16 %v3448
        %v3488 = vunpack.c.l.b16 %v3449
        %v3489 = vunpack.c.l.b16 %v3450
        %v3490 = vunpack.c.l.b16 %v3451
        %v3491 = vunpack.c.l.b16 %v3452
        %v3492 = vunpack.c.l.b16 %v3453
        %v3493 = vunpack.c.l.b16 %v3454
        %v3494 = vunpack.c.l.b16 %v3455
        %v3495 = vunpack.c.l.b16 %v3456
        %v3496 = vunpack.c.l.b16 %v3457
        %v3497 = vunpack.c.l.b16 %v3458
        %v3498 = vunpack.c.l.b16 %v3459
        %v3499 = vpack.c.b16 %v3484, %v3483
        %v3500 = vpack.c.b16 %v3486, %v3485
        %v3501 = vpack.c.b16 %v3488, %v3487
        %v3502 = vpack.c.b16 %v3490, %v3489
        %v3503 = vpack.c.b16 %v3492, %v3491
        %v3504 = vpack.c.b16 %v3494, %v3493
        %v3505 = vpack.c.b16 %v3496, %v3495
        %v3506 = vpack.c.b16 %v3498, %v3497
        %3515 = vmatprep.subr.bf16.mxu0 0
        %3516 = vmatpush1.bf16.msra.mxu0 %v3506
        %3517 = vmatprep.subr.bf16.mxu0 0
        %3518 = vmatpush1.bf16.msra.mxu0 %v3505
        %3519 = vmatprep.subr.bf16.mxu0 0
        %3520 = vmatpush1.bf16.msra.mxu0 %v3504
        %3521 = vmatprep.subr.bf16.mxu0 0
        %3522 = vmatpush1.bf16.msra.mxu0 %v3503
        %3523 = vmatprep.subr.bf16.mxu0 0
        %3524 = vmatpush1.bf16.msra.mxu0 %v3502
        %3525 = vmatprep.subr.bf16.mxu0 0
        %3526 = vmatpush1.bf16.msra.mxu0 %v3501
        %3527 = vmatprep.subr.bf16.mxu0 0
        %3528 = vmatpush1.bf16.msra.mxu0 %v3500
        %3529 = vmatprep.subr.bf16.mxu0 0
        %3530 = vmatpush1.bf16.msra.mxu0 %v3499
        %3531 = vmatprep.subr.bf16.mxu0 0
        %3532 = vmatpush2.bf16.msra.mxu0 0
        %3533 = vmatprep.subr.bf16.mxu0 0
        %3534 = vmatpush2.bf16.msra.mxu0 0
        %3535 = vmatprep.subr.bf16.mxu0 0
        %3536 = vmatpush2.bf16.msra.mxu0 0
        %3537 = vmatprep.subr.bf16.mxu0 0
        %3538 = vmatpush2.bf16.msra.mxu0 0
        %3539 = vmatprep.subr.bf16.mxu0 0
        %3540 = vmatpush2.bf16.msra.mxu0 0
        %3541 = vmatprep.subr.bf16.mxu0 0
        %3542 = vmatpush2.bf16.msra.mxu0 0
        %3543 = vmatprep.subr.bf16.mxu0 0
        %3544 = vmatpush2.bf16.msra.mxu0 0
        %3545 = vmatprep.subr.bf16.mxu0 0
        %3546 = vmatpush2.bf16.msra.mxu0 0
        %3547 = vmatprep.mubr.bf16.mxu0 0
        %3548 = vmatmul.mubr.bf16.gmra.mxu0 %v3436
        %v3549 = vpop.f32.mrf.mxu0
        %v3550 = vadd.f32 %v3465, %v3549
        %v3551 = vpop.f32.mrf.mxu0
        %v3552 = vpop.f32.mrf.mxu0
        %v3553 = vadd.f32 %v3465, %v3552
        %v3554 = vpop.f32.mrf.mxu0
        %3555 = vmatprep.mubr.bf16.mxu0 0
        %3556 = vmatmul.mubr.bf16.gmra.mxu0 %v3437
        %v3557 = vpop.f32.mrf.mxu0
        %v3558 = vadd.f32 %v3465, %v3557
        %v3559 = vpop.f32.mrf.mxu0
        %v3560 = vpop.f32.mrf.mxu0
        %v3561 = vadd.f32 %v3465, %v3560
        %v3562 = vpop.f32.mrf.mxu0
        %3563 = vmatprep.mubr.bf16.mxu0 0
        %3564 = vmatmul.mubr.bf16.gmra.mxu0 %v3438
        %v3565 = vpop.f32.mrf.mxu0
        %v3566 = vadd.f32 %v3465, %v3565
        %v3567 = vpop.f32.mrf.mxu0
        %v3568 = vpop.f32.mrf.mxu0
        %v3569 = vadd.f32 %v3465, %v3568
        %v3570 = vpop.f32.mrf.mxu0
        %3571 = vmatprep.mubr.bf16.mxu0 0
        %3572 = vmatmul.mubr.bf16.gmra.mxu0 %v3439
        %v3573 = vpop.f32.mrf.mxu0
        %v3574 = vadd.f32 %v3465, %v3573
        %v3575 = vpop.f32.mrf.mxu0
        %v3576 = vpop.f32.mrf.mxu0
        %v3577 = vadd.f32 %v3465, %v3576
        %v3578 = vpop.f32.mrf.mxu0
        %3579 = vmatprep.mubr.bf16.mxu0 0
        %3580 = vmatmul.mubr.bf16.gmra.mxu0 %v3440
        %v3581 = vpop.f32.mrf.mxu0
        %v3582 = vadd.f32 %v3465, %v3581
        %v3583 = vpop.f32.mrf.mxu0
        %v3584 = vpop.f32.mrf.mxu0
        %v3585 = vadd.f32 %v3465, %v3584
        %v3586 = vpop.f32.mrf.mxu0
        %3587 = vmatprep.mubr.bf16.mxu0 0
        %3588 = vmatmul.mubr.bf16.gmra.mxu0 %v3441
        %v3589 = vpop.f32.mrf.mxu0
        %v3590 = vadd.f32 %v3465, %v3589
        %v3591 = vpop.f32.mrf.mxu0
        %v3592 = vpop.f32.mrf.mxu0
        %v3593 = vadd.f32 %v3465, %v3592
        %v3594 = vpop.f32.mrf.mxu0
        %3595 = vmatprep.mubr.bf16.mxu0 0
        %3596 = vmatmul.mubr.bf16.gmra.mxu0 %v3442
        %v3597 = vpop.f32.mrf.mxu0
        %v3598 = vadd.f32 %v3465, %v3597
        %v3599 = vpop.f32.mrf.mxu0
        %v3600 = vpop.f32.mrf.mxu0
        %v3601 = vadd.f32 %v3465, %v3600
        %v3602 = vpop.f32.mrf.mxu0
        %3603 = vmatprep.mubr.bf16.mxu0 0
        %3604 = vmatmul.mubr.bf16.gmra.mxu0 %v3443
        %v3605 = vpop.f32.mrf.mxu0
        %v3606 = vadd.f32 %v3465, %v3605
        %v3607 = vpop.f32.mrf.mxu0
        %v3608 = vpop.f32.mrf.mxu0
        %v3609 = vadd.f32 %v3465, %v3608
        %v3610 = vpop.f32.mrf.mxu0
        %3611 = vdwg.mxu0
        %3612 = vst [vmem:[%s506] sm:$0xff] %v3550
        %3613 = vst [vmem:[%s506 + $0x8] sm:$0xff] %v3553
        %3614 = vst [vmem:[%s506 + $0x10] sm:$0xff] %v3558
        %3615 = vst [vmem:[%s506 + $0x18] sm:$0xff] %v3561
        %3616 = vst [vmem:[%s506 + $0x20] sm:$0xff] %v3566
        %3617 = vst [vmem:[%s506 + $0x28] sm:$0xff] %v3569
        %3618 = vst [vmem:[%s506 + $0x30] sm:$0xff] %v3574
        %3619 = vst [vmem:[%s506 + $0x38] sm:$0xff] %v3577
        %3620 = vst [vmem:[%s506 + $0x40] sm:$0xff] %v3582
        %3621 = vst [vmem:[%s506 + $0x48] sm:$0xff] %v3585
        %3622 = vst [vmem:[%s506 + $0x50] sm:$0xff] %v3590
        %3623 = vst [vmem:[%s506 + $0x58] sm:$0xff] %v3593
        %3624 = vst [vmem:[%s506 + $0x60] sm:$0xff] %v3598
        %3625 = vst [vmem:[%s506 + $0x68] sm:$0xff] %v3601
        %3626 = vst [vmem:[%s506 + $0x70] sm:$0xff] %v3606
        %3627 = vst [vmem:[%s506 + $0x78] sm:$0xff] %v3609
        %s3628 = sand.u32 %s298, 1
        %s3629 = scalar_lea.sflag [#allocation5], %s3628
        %s3630 = sand.u32 %s298, 1
        %s3631 = smul.addr %s3630, 128
        %s3632 = scalar_lea.vmem [#allocation14], %s3631
        // Predicated region
        $region93: #{tpu_custom_call.1} parent=67 // pred_check
          %p3633 = pneg %p308
        $region94: #{tpu_custom_call.1} parent=67 // pred_check_branch
          %3635 = sbr.rel (%p3633) target = $region96
        $region95: #{tpu_custom_call.1} parent=67 // pred_region
          %s3636 = smul.u32 16, %s33
          %s3638 = ssub.s32 2048, 2048
          %3639 = vsyncadd %s3629, %s3638
          %s3640 = smul.addr %s3636, 128
          %s3641 = scalar_lea.hbm %s12, %s3640
          %s3642 = sshll.u32 %s3632, 4
          %s3643 = int_to_ptr.vmem [resolvable:$true] %s3642
          %3648 = dma.vmem_to_hbm [thread:$0]  %s3643, 2048, %s3641, %s3629, 128, 128, 8
        $region96: #{tpu_custom_call.1} parent=67 // pred_fallthru
          _
      $region68: #{tpu_custom_call.1} parent=5 // pred_fallthru
        _
      %p3649 = scmp.le.s32.totalorder 2, %s28
      // Predicated region
      $region97: #{tpu_custom_call.1} parent=5 // pred_check
        %p3650 = pneg %p3649
      $region98: #{tpu_custom_call.1} parent=5 // pred_check_branch
        %3652 = sbr.rel (%p3650) target = $region100
      $region99: #{tpu_custom_call.1} parent=5 // pred_region
        %s3653 = ssub.s32 %s28, 2
        // Predicated region
        $region101: #{tpu_custom_call.1} parent=99 // pred_check
          %p3654 = pneg %p314
        $region102: #{tpu_custom_call.1} parent=99 // pred_check_branch
          %3656 = sbr.rel (%p3654) target = $region104
        $region103: #{tpu_custom_call.1} parent=99 // pred_region
          %s3657 = sand.u32 %s299, 1
          %s3658 = scalar_lea.sflag [#allocation5], %s3657
          %s3659 = sand.u32 %s299, 1
          %s3660 = smul.addr %s3659, 128
          %s3661 = scalar_lea.vmem [#allocation14], %s3660
          %3662 = dma.done %s3658, 2048
        $region104: #{tpu_custom_call.1} parent=99 // pred_fallthru
          _
      $region100: #{tpu_custom_call.1} parent=5 // pred_fallthru
        _
    $region6: #{tpu_custom_call.1} parent=1 // loop_footer
      %s32 = sadd.s32 1, %s28
    $region7: #{tpu_custom_call.1} parent=1 // loop_footer_branch
      %27 = sbr.rel target = $region3
    $region8: #{tpu_custom_call.1} parent=1 // loop_exit
      _
    %3663 = vsyncpa [#allocation4], 1
    %s3664 = scalar_lea.sflag [#allocation4], 1
    %3665 = vsyncpa %s3664, 1
    %3666 = vsyncpa [#allocation7], 1
    %3667 = vsyncpa [#allocation10], 1
    %3668 = vsyncpa [#allocation13], 1
    %3669 = vsyncpa [#allocation5], 1
    %s3670 = scalar_lea.sflag [#allocation5], 1
    %3671 = vsyncpa %s3670, 1

</llo_original>
